<compile_context>
chip_gen: v5e
topology: v5e:2x2
jax: 0.10.0
libtpu: 0.0.40
codegen_flags: <defaults>
</compile_context>

<pallas_src>
import functools

import jax
import jax.numpy as jnp
from jax.experimental import pallas as pl
from jax.experimental.pallas import tpu as pltpu

_LANE = 128  # lane width of a vreg / MXU-friendly feature granularity


def _round_up(n, m):
    return ((n + m - 1) // m) * m


def _fcnet_kernel(x_ref, w1_ref, b1_ref, w2_ref, b2_ref, w3_ref, b3_ref, o_ref):
    """Fused 3-layer MLP on one (block_b, in_p) tile of the (padded) batch.

    Matmul inputs may be bf16; accumulation (preferred_element_type) and the
    sigmoid/relu epilogue are kept in f32.
    """
    x = x_ref[...]

    h1 = jnp.dot(x, w1_ref[...], preferred_element_type=jnp.float32) + b1_ref[...]
    h1 = jax.nn.sigmoid(h1)

    h2 = jnp.dot(h1.astype(w2_ref.dtype), w2_ref[...],
                 preferred_element_type=jnp.float32) + b2_ref[...]
    h2 = jax.nn.sigmoid(h2)

    h3 = jnp.dot(h2.astype(w3_ref.dtype), w3_ref[...],
                 preferred_element_type=jnp.float32) + b3_ref[...]
    o_ref[...] = jnp.maximum(h3, 0.0).astype(o_ref.dtype)


@functools.partial(jax.jit, static_argnames=("block_b", "matmul_dtype"))
def fcnetwork_forward(x, params, block_b=512, matmul_dtype=jnp.float32):
    """FCNetwork forward pass. Pads features to 128 lanes and batch to block_b.

    matmul_dtype=jnp.bfloat16 is recommended on v6e/v7x (f32 accumulation is
    kept either way).
    """
    w1, b1, w2, b2, w3, b3 = params
    B, num_inputs = x.shape
    hidden = w1.shape[1]
    num_outputs = w3.shape[1]

    in_p = _round_up(num_inputs, _LANE)
    h_p = _round_up(hidden, _LANE)
    out_p = _round_up(num_outputs, _LANE)
    b_p = _round_up(B, block_b)

    def pad2(a, rows, cols, dtype):
        a = a.astype(dtype)
        return jnp.pad(a, ((0, rows - a.shape[0]), (0, cols - a.shape[1])))

    mm = matmul_dtype
    x_p = pad2(x, b_p, in_p, mm)
    w1_p = pad2(w1, in_p, h_p, mm)
    w2_p = pad2(w2, h_p, h_p, mm)
    w3_p = pad2(w3, h_p, out_p, mm)
    # Biases stay f32: they are added to the f32 accumulator.
    b1_p = pad2(b1, 1, h_p, jnp.float32)
    b2_p = pad2(b2, 1, h_p, jnp.float32)
    b3_p = pad2(b3, 1, out_p, jnp.float32)

    grid = (b_p // block_b,)

    mm_bytes = x_p.dtype.itemsize
    flops = 2 * b_p * (in_p * h_p + h_p * h_p + h_p * out_p)
    transcendentals = 2 * b_p * h_p  # two sigmoids over (b_p, h_p)
    bytes_accessed = (
        x_p.size * mm_bytes
        + (w1_p.size + w2_p.size + w3_p.size) * mm_bytes
        + (b1_p.size + b2_p.size + b3_p.size) * 4
        + b_p * out_p * 4
    )

    # VMEM budget: double-buffered x/out tiles + resident (double-buffered)
    # weights/biases + intermediates, with a floor for scoped scratch.
    vmem_needed = (
        2 * block_b * (in_p + out_p) * 4
        + 2 * (w1_p.size + w2_p.size + w3_p.size) * mm_bytes
        + 2 * (b1_p.size + b2_p.size + b3_p.size) * 4
        + 4 * block_b * h_p * 4
    )
    vmem_limit = int(min(100 * 1024 * 1024, max(vmem_needed, 16 * 1024 * 1024)))

    out_padded = pl.pallas_call(
        _fcnet_kernel,
        out_shape=jax.ShapeDtypeStruct((b_p, out_p), jnp.float32),
        grid_spec=pltpu.PrefetchScalarGridSpec(
            num_scalar_prefetch=0,
            grid=grid,
            in_specs=[
                pl.BlockSpec((block_b, in_p), lambda i: (i, 0)),  # x tile
                # Weights/biases: full blocks with a constant index_map, so
                # they are DMA'd once and stay resident across grid steps.
                pl.BlockSpec(w1_p.shape, lambda i: (0, 0)),
                pl.BlockSpec(b1_p.shape, lambda i: (0, 0)),
                pl.BlockSpec(w2_p.shape, lambda i: (0, 0)),
                pl.BlockSpec(b2_p.shape, lambda i: (0, 0)),
                pl.BlockSpec(w3_p.shape, lambda i: (0, 0)),
                pl.BlockSpec(b3_p.shape, lambda i: (0, 0)),
            ],
            out_specs=pl.BlockSpec((block_b, out_p), lambda i: (i, 0)),
        ),
        compiler_params=pltpu.CompilerParams(
            dimension_semantics=("parallel",),
            vmem_limit_bytes=vmem_limit,
        ),
        cost_estimate=pl.CostEstimate(
            flops=flops,
            transcendentals=transcendentals,
            bytes_accessed=bytes_accessed,
        ),
    )(x_p, w1_p, b1_p, w2_p, b2_p, w3_p, b3_p)

    # Drop batch/lane padding.
    return out_padded[:B, :num_outputs]


def init_fcnetwork_params(key, num_inputs, num_outputs, hidden_size, dtype=jnp.float32):
    """nn.Linear-style init U(-1/sqrt(fan_in), 1/sqrt(fan_in)).

    Weights are (in_features, out_features) — transposed vs. PyTorch — so the
    kernel computes x @ W + b. Biases are (1, out_features).
    """
    keys = jax.random.split(key, 6)

    def linear(kw, kb, fan_in, fan_out):
        bound = 1.0 / jnp.sqrt(jnp.float32(fan_in))
        w = jax.random.uniform(kw, (fan_in, fan_out), dtype, -bound, bound)
        b = jax.random.uniform(kb, (1, fan_out), dtype, -bound, bound)
        return w, b

    w1, b1 = linear(keys[0], keys[1], num_inputs, hidden_size)
    w2, b2 = linear(keys[2], keys[3], hidden_size, hidden_size)
    w3, b3 = linear(keys[4], keys[5], hidden_size, num_outputs)
    return (w1, b1, w2, b2, w3, b3)


def fcnetwork_reference(x, params):
    """Plain-JAX reference of the PyTorch forward for correctness checking."""
    w1, b1, w2, b2, w3, b3 = params
    h = jax.nn.sigmoid(x @ w1 + b1)
    h = jax.nn.sigmoid(h @ w2 + b2)
    return jnp.maximum(h @ w3 + b3, 0.0)


if __name__ == "__main__":
    num_inputs = 16
    hidden_size = 32
    num_outputs = 8

    key = jax.random.PRNGKey(0)
    kx, kp, kx2 = jax.random.split(key, 3)
    params = init_fcnetwork_params(kp, num_inputs, num_outputs, hidden_size)

    # 1) f32 path, batch = 2 * block_b so the grid has >=2 steps (feeds both
    #    TensorCores on v7x).
    batch = 1024
    x = jax.random.normal(kx, (batch, num_inputs), dtype=jnp.float32)
    out = jax.block_until_ready(fcnetwork_forward(x, params))  # block_b=512 default
    ref = fcnetwork_reference(x, params)
    assert out.shape == (batch, num_outputs), out.shape
    assert jnp.allclose(out, ref, atol=1e-5, rtol=1e-5), "f32 mismatch vs reference"

    # 2) ragged batch (B % block_b != 0): pad rows are masked out by slicing.
    batch2 = 300
    x2 = jax.random.normal(kx2, (batch2, num_inputs), dtype=jnp.float32)
    out2 = jax.block_until_ready(fcnetwork_forward(x2, params, block_b=128))
    ref2 = fcnetwork_reference(x2, params)
    assert out2.shape == (batch2, num_outputs), out2.shape
    assert jnp.allclose(out2, ref2, atol=1e-5, rtol=1e-5), "ragged-batch mismatch"

    # 3) bf16 matmul inputs (recommended on v6e/v7x), f32 accumulation.
    out_bf16 = jax.block_until_ready(
        fcnetwork_forward(x, params, matmul_dtype=jnp.bfloat16)
    )
    assert out_bf16.shape == (batch, num_outputs), out_bf16.shape
    assert jnp.allclose(out_bf16, ref, atol=3e-2, rtol=3e-2), "bf16 mismatch"

    print("KERNEL_OK")
</pallas_src>

<mosaic_0001>
module attributes {stable_mosaic.version = 11 : i64} {
  func.func @_fcnet_kernel(%arg0: i32, %arg1: memref<512x128xf32, #tpu.memory_space<vmem>>, %arg2: memref<128x128xf32, #tpu.memory_space<vmem>>, %arg3: memref<1x128xf32, #tpu.memory_space<vmem>>, %arg4: memref<128x128xf32, #tpu.memory_space<vmem>>, %arg5: memref<1x128xf32, #tpu.memory_space<vmem>>, %arg6: memref<128x128xf32, #tpu.memory_space<vmem>>, %arg7: memref<1x128xf32, #tpu.memory_space<vmem>>, %arg8: memref<512x128xf32, #tpu.memory_space<vmem>>) attributes {dimension_semantics = [#tpu.dimension_semantics<parallel>], iteration_bounds = array<i64: 2>, scalar_prefetch = 0 : i64, scratch_operands = 0 : i64, tpu.core_type = #tpu.core_type<tc>, window_params = [{transform_indices = @transform_0, window_bounds = array<i64: 512, 128>}, {pipeline_mode = #tpu.pipeline_mode<synchronous>, transform_indices = @transform_1, window_bounds = array<i64: 128, 128>}, {pipeline_mode = #tpu.pipeline_mode<synchronous>, transform_indices = @transform_2, window_bounds = array<i64: 1, 128>}, {pipeline_mode = #tpu.pipeline_mode<synchronous>, transform_indices = @transform_3, window_bounds = array<i64: 128, 128>}, {pipeline_mode = #tpu.pipeline_mode<synchronous>, transform_indices = @transform_4, window_bounds = array<i64: 1, 128>}, {pipeline_mode = #tpu.pipeline_mode<synchronous>, transform_indices = @transform_5, window_bounds = array<i64: 128, 128>}, {pipeline_mode = #tpu.pipeline_mode<synchronous>, transform_indices = @transform_6, window_bounds = array<i64: 1, 128>}, {transform_indices = @transform_7, window_bounds = array<i64: 512, 128>}]} {
    %c0 = arith.constant 0 : index
    %c0_0 = arith.constant 0 : index
    %0 = vector.load %arg1[%c0, %c0_0] : memref<512x128xf32, #tpu.memory_space<vmem>>, vector<512x128xf32>
    %c0_1 = arith.constant 0 : index
    %c0_2 = arith.constant 0 : index
    %1 = vector.load %arg2[%c0_1, %c0_2] : memref<128x128xf32, #tpu.memory_space<vmem>>, vector<128x128xf32>
    %cst = arith.constant dense<0.000000e+00> : vector<512x128xf32>
    %2 = tpu.matmul %0, %1, %cst {dimension_numbers = #tpu.dot_dimension_numbers<[1], [0], [0], [1], [0, 0, 1, 1], [], []>} : vector<512x128xf32>, vector<128x128xf32>, vector<512x128xf32> -> vector<512x128xf32>
    %c0_3 = arith.constant 0 : index
    %c0_4 = arith.constant 0 : index
    %3 = vector.load %arg3[%c0_3, %c0_4] : memref<1x128xf32, #tpu.memory_space<vmem>>, vector<1x128xf32>
    %4 = vector.broadcast %3 : vector<1x128xf32> to vector<512x128xf32>
    %5 = arith.addf %2, %4 : vector<512x128xf32>
    %6 = arith.negf %5 : vector<512x128xf32>
    %7 = math.exp %6 : vector<512x128xf32>
    %cst_5 = arith.constant 1.000000e+00 : f32
    %8 = vector.broadcast %cst_5 : f32 to vector<512x128xf32>
    %9 = arith.addf %8, %7 : vector<512x128xf32>
    %10 = arith.divf %8, %9 : vector<512x128xf32>
    %c0_6 = arith.constant 0 : index
    %c0_7 = arith.constant 0 : index
    %11 = vector.load %arg4[%c0_6, %c0_7] : memref<128x128xf32, #tpu.memory_space<vmem>>, vector<128x128xf32>
    %cst_8 = arith.constant dense<0.000000e+00> : vector<512x128xf32>
    %12 = tpu.matmul %10, %11, %cst_8 {dimension_numbers = #tpu.dot_dimension_numbers<[1], [0], [0], [1], [0, 0, 1, 1], [], []>} : vector<512x128xf32>, vector<128x128xf32>, vector<512x128xf32> -> vector<512x128xf32>
    %c0_9 = arith.constant 0 : index
    %c0_10 = arith.constant 0 : index
    %13 = vector.load %arg5[%c0_9, %c0_10] : memref<1x128xf32, #tpu.memory_space<vmem>>, vector<1x128xf32>
    %14 = vector.broadcast %13 : vector<1x128xf32> to vector<512x128xf32>
    %15 = arith.addf %12, %14 : vector<512x128xf32>
    %16 = arith.negf %15 : vector<512x128xf32>
    %17 = math.exp %16 : vector<512x128xf32>
    %cst_11 = arith.constant 1.000000e+00 : f32
    %18 = vector.broadcast %cst_11 : f32 to vector<512x128xf32>
    %19 = arith.addf %18, %17 : vector<512x128xf32>
    %20 = arith.divf %18, %19 : vector<512x128xf32>
    %c0_12 = arith.constant 0 : index
    %c0_13 = arith.constant 0 : index
    %21 = vector.load %arg6[%c0_12, %c0_13] : memref<128x128xf32, #tpu.memory_space<vmem>>, vector<128x128xf32>
    %cst_14 = arith.constant dense<0.000000e+00> : vector<512x128xf32>
    %22 = tpu.matmul %20, %21, %cst_14 {dimension_numbers = #tpu.dot_dimension_numbers<[1], [0], [0], [1], [0, 0, 1, 1], [], []>} : vector<512x128xf32>, vector<128x128xf32>, vector<512x128xf32> -> vector<512x128xf32>
    %c0_15 = arith.constant 0 : index
    %c0_16 = arith.constant 0 : index
    %23 = vector.load %arg7[%c0_15, %c0_16] : memref<1x128xf32, #tpu.memory_space<vmem>>, vector<1x128xf32>
    %24 = vector.broadcast %23 : vector<1x128xf32> to vector<512x128xf32>
    %25 = arith.addf %22, %24 : vector<512x128xf32>
    %cst_17 = arith.constant 0.000000e+00 : f32
    %26 = vector.broadcast %cst_17 : f32 to vector<512x128xf32>
    %27 = arith.maximumf %25, %26 : vector<512x128xf32>
    %c0_18 = arith.constant 0 : index
    %c0_19 = arith.constant 0 : index
    %28 = vector.load %arg8[%c0_18, %c0_19] : memref<512x128xf32, #tpu.memory_space<vmem>>, vector<512x128xf32>
    tpu.vector_store %arg8[%c0_18, %c0_19], %27 {strides = array<i32>} : memref<512x128xf32, #tpu.memory_space<vmem>>, vector<512x128xf32>,
    return
  }
  func.func @transform_0(%arg0: i32) -> (i32, i32) {
    %c0_i32 = arith.constant 0 : i32
    %c0_i32_0 = arith.constant 0 : i32
    return %arg0, %c0_i32 : i32, i32
  }
  func.func @transform_1(%arg0: i32) -> (i32, i32) {
    %c0_i32 = arith.constant 0 : i32
    %c0_i32_0 = arith.constant 0 : i32
    %c0_i32_1 = arith.constant 0 : i32
    return %c0_i32, %c0_i32_0 : i32, i32
  }
  func.func @transform_2(%arg0: i32) -> (i32, i32) {
    %c0_i32 = arith.constant 0 : i32
    %c0_i32_0 = arith.constant 0 : i32
    %c0_i32_1 = arith.constant 0 : i32
    return %c0_i32, %c0_i32_0 : i32, i32
  }
  func.func @transform_3(%arg0: i32) -> (i32, i32) {
    %c0_i32 = arith.constant 0 : i32
    %c0_i32_0 = arith.constant 0 : i32
    %c0_i32_1 = arith.constant 0 : i32
    return %c0_i32, %c0_i32_0 : i32, i32
  }
  func.func @transform_4(%arg0: i32) -> (i32, i32) {
    %c0_i32 = arith.constant 0 : i32
    %c0_i32_0 = arith.constant 0 : i32
    %c0_i32_1 = arith.constant 0 : i32
    return %c0_i32, %c0_i32_0 : i32, i32
  }
  func.func @transform_5(%arg0: i32) -> (i32, i32) {
    %c0_i32 = arith.constant 0 : i32
    %c0_i32_0 = arith.constant 0 : i32
    %c0_i32_1 = arith.constant 0 : i32
    return %c0_i32, %c0_i32_0 : i32, i32
  }
  func.func @transform_6(%arg0: i32) -> (i32, i32) {
    %c0_i32 = arith.constant 0 : i32
    %c0_i32_0 = arith.constant 0 : i32
    %c0_i32_1 = arith.constant 0 : i32
    return %c0_i32, %c0_i32_0 : i32, i32
  }
  func.func @transform_7(%arg0: i32) -> (i32, i32) {
    %c0_i32 = arith.constant 0 : i32
    %c0_i32_0 = arith.constant 0 : i32
    return %arg0, %c0_i32 : i32, i32
  }
}

</mosaic_0001>

<llo_original>
// kernel: fcnetwork_forward.1
$region0: #{fcnetwork_forward.1}
  #allocation0 [shape = 'u32[]', space=smem, size = 0x4, offset = 0x4, fixed_abs, tag = 'smem constant byte address 0x4 - core index']
  #allocation1 [shape = 'u32[72,128]{1,0:T(1,128)}', space=vmem, size = 0x9000, scoped, tag = 'internal scratch']
  %s0 = inlined_call_operand.vmem [shape: f32[1024,128], index: 0, kind: input, shape index: {}]
  %s1 = inlined_call_operand.vmem [shape: f32[128,128], index: 1, kind: input, shape index: {}]
  %s2 = inlined_call_operand.vmem [shape: f32[1,128], index: 2, kind: input, shape index: {}]
  %s3 = inlined_call_operand.vmem [shape: f32[128,128], index: 3, kind: input, shape index: {}]
  %s4 = inlined_call_operand.vmem [shape: f32[1,128], index: 4, kind: input, shape index: {}]
  %s5 = inlined_call_operand.vmem [shape: f32[128,128], index: 5, kind: input, shape index: {}]
  %s6 = inlined_call_operand.vmem [shape: f32[1,128], index: 6, kind: input, shape index: {}]
  %s7 = inlined_call_operand.vmem [shape: f32[1024,128], index: 7, kind: output, shape index: {}]
  %s8 = sld [smem:[#allocation0]]
  $region61: #{fcnetwork_forward.1} parent=0
    _
  %s10 = ssub.s32 1, %s8
  %s11 = scalar_select 0, %s10, %s8
  loop: start=0, step=1, limit=4
  $region2: #{fcnetwork_forward.1} parent=0 // loop_pre_header
    _
  $region3: #{fcnetwork_forward.1} parent=0 // loop_header
    %s13 = sphi 0, %s17
    %p14 = scmp.ge.s32.totalorder %s13, 4
    %s23 = sphi 0, %s25
    %s26 = sphi 0, %s23
    %s27 = sphi 0, %s26
    %s43 = sphi 0, %s27
    %s47 = sphi 0, %s47
    %s49 = sphi 0, %s47
    %s50 = sphi 0, %s49
    %s64 = sphi 0, %s50
    %s68 = sphi 0, %s68
    %s70 = sphi 0, %s68
    %s71 = sphi 0, %s70
    %s85 = sphi 0, %s71
    %s89 = sphi 0, %s89
    %s91 = sphi 0, %s89
    %s92 = sphi 0, %s91
    %s106 = sphi 0, %s92
    %s110 = sphi 0, %s110
    %s112 = sphi 0, %s110
    %s113 = sphi 0, %s112
    %s127 = sphi 0, %s113
    %s131 = sphi 0, %s131
    %s133 = sphi 0, %s131
    %s134 = sphi 0, %s133
    %s148 = sphi 0, %s134
    %s152 = sphi 0, %s152
    %s154 = sphi 0, %s152
    %s155 = sphi 0, %s154
    %s169 = sphi 0, %s155
    %s175 = sphi 0, %s177
    %s178 = sphi 0, %s175
    %s179 = sphi 0, %s178
    %s195 = sphi 0, %s179
  $region4: #{fcnetwork_forward.1} parent=0 // loop_header_branch
    %16 = sbr.rel (%p14) target = $region8
  $region5: #{fcnetwork_forward.1} parent=0 // loop_body
    %s18 = ssub.s32 %s13, 1
    %s19 = ssub.s32 %s13, 2
    %s20 = sadd.s32 %s13, 1
    %s21 = ssub.s32 %s13, %s20
    %p22 = scmp.eq.s32.totalorder %s21, 0
    %s24 = sadd.s32 %s23, 1
    %s25 = scalar_select %p22, %s23, %s24
    %p28 = pneg %p22
    %p29 = scmp.eq.s32.totalorder %s13, 1
    %p30 = por %p28, %p29
    %p31 = scmp.ne.s32.totalorder %s23, %s26
    %p32 = scmp.eq.s32.totalorder %s13, 0
    %p33 = por %p31, %p32
    %p34 = scmp.ne.s32.totalorder %s23, %s26
    %p35 = scmp.eq.s32.totalorder %s18, 1
    %p36 = por %p34, %p35
    %p37 = scmp.ne.s32.totalorder %s26, %s27
    %p38 = scmp.eq.s32.totalorder %s18, 0
    %p39 = por %p37, %p38
    %p40 = scmp.ne.s32.totalorder %s26, %s27
    %p41 = scmp.eq.s32.totalorder %s19, 1
    %p42 = por %p40, %p41
    %p44 = scmp.ne.s32.totalorder %s27, %s43
    %p45 = scmp.eq.s32.totalorder %s19, 0
    %p46 = por %p44, %p45
    %s48 = sadd.s32 %s47, 1
    %p51 = scmp.eq.s32.totalorder %s13, 1
    %p52 = scmp.ne.s32.totalorder %s47, %s49
    %p53 = scmp.eq.s32.totalorder %s13, 0
    %p54 = por %p52, %p53
    %p55 = scmp.ne.s32.totalorder %s47, %s49
    %p56 = scmp.eq.s32.totalorder %s18, 1
    %p57 = por %p55, %p56
    %p58 = scmp.ne.s32.totalorder %s49, %s50
    %p59 = scmp.eq.s32.totalorder %s18, 0
    %p60 = por %p58, %p59
    %p61 = scmp.ne.s32.totalorder %s49, %s50
    %p62 = scmp.eq.s32.totalorder %s19, 1
    %p63 = por %p61, %p62
    %p65 = scmp.ne.s32.totalorder %s50, %s64
    %p66 = scmp.eq.s32.totalorder %s19, 0
    %p67 = por %p65, %p66
    %s69 = sadd.s32 %s68, 1
    %p72 = scmp.eq.s32.totalorder %s13, 1
    %p73 = scmp.ne.s32.totalorder %s68, %s70
    %p74 = scmp.eq.s32.totalorder %s13, 0
    %p75 = por %p73, %p74
    %p76 = scmp.ne.s32.totalorder %s68, %s70
    %p77 = scmp.eq.s32.totalorder %s18, 1
    %p78 = por %p76, %p77
    %p79 = scmp.ne.s32.totalorder %s70, %s71
    %p80 = scmp.eq.s32.totalorder %s18, 0
    %p81 = por %p79, %p80
    %p82 = scmp.ne.s32.totalorder %s70, %s71
    %p83 = scmp.eq.s32.totalorder %s19, 1
    %p84 = por %p82, %p83
    %p86 = scmp.ne.s32.totalorder %s71, %s85
    %p87 = scmp.eq.s32.totalorder %s19, 0
    %p88 = por %p86, %p87
    %s90 = sadd.s32 %s89, 1
    %p93 = scmp.eq.s32.totalorder %s13, 1
    %p94 = scmp.ne.s32.totalorder %s89, %s91
    %p95 = scmp.eq.s32.totalorder %s13, 0
    %p96 = por %p94, %p95
    %p97 = scmp.ne.s32.totalorder %s89, %s91
    %p98 = scmp.eq.s32.totalorder %s18, 1
    %p99 = por %p97, %p98
    %p100 = scmp.ne.s32.totalorder %s91, %s92
    %p101 = scmp.eq.s32.totalorder %s18, 0
    %p102 = por %p100, %p101
    %p103 = scmp.ne.s32.totalorder %s91, %s92
    %p104 = scmp.eq.s32.totalorder %s19, 1
    %p105 = por %p103, %p104
    %p107 = scmp.ne.s32.totalorder %s92, %s106
    %p108 = scmp.eq.s32.totalorder %s19, 0
    %p109 = por %p107, %p108
    %s111 = sadd.s32 %s110, 1
    %p114 = scmp.eq.s32.totalorder %s13, 1
    %p115 = scmp.ne.s32.totalorder %s110, %s112
    %p116 = scmp.eq.s32.totalorder %s13, 0
    %p117 = por %p115, %p116
    %p118 = scmp.ne.s32.totalorder %s110, %s112
    %p119 = scmp.eq.s32.totalorder %s18, 1
    %p120 = por %p118, %p119
    %p121 = scmp.ne.s32.totalorder %s112, %s113
    %p122 = scmp.eq.s32.totalorder %s18, 0
    %p123 = por %p121, %p122
    %p124 = scmp.ne.s32.totalorder %s112, %s113
    %p125 = scmp.eq.s32.totalorder %s19, 1
    %p126 = por %p124, %p125
    %p128 = scmp.ne.s32.totalorder %s113, %s127
    %p129 = scmp.eq.s32.totalorder %s19, 0
    %p130 = por %p128, %p129
    %s132 = sadd.s32 %s131, 1
    %p135 = scmp.eq.s32.totalorder %s13, 1
    %p136 = scmp.ne.s32.totalorder %s131, %s133
    %p137 = scmp.eq.s32.totalorder %s13, 0
    %p138 = por %p136, %p137
    %p139 = scmp.ne.s32.totalorder %s131, %s133
    %p140 = scmp.eq.s32.totalorder %s18, 1
    %p141 = por %p139, %p140
    %p142 = scmp.ne.s32.totalorder %s133, %s134
    %p143 = scmp.eq.s32.totalorder %s18, 0
    %p144 = por %p142, %p143
    %p145 = scmp.ne.s32.totalorder %s133, %s134
    %p146 = scmp.eq.s32.totalorder %s19, 1
    %p147 = por %p145, %p146
    %p149 = scmp.ne.s32.totalorder %s134, %s148
    %p150 = scmp.eq.s32.totalorder %s19, 0
    %p151 = por %p149, %p150
    %s153 = sadd.s32 %s152, 1
    %p156 = scmp.eq.s32.totalorder %s13, 1
    %p157 = scmp.ne.s32.totalorder %s152, %s154
    %p158 = scmp.eq.s32.totalorder %s13, 0
    %p159 = por %p157, %p158
    %p160 = scmp.ne.s32.totalorder %s152, %s154
    %p161 = scmp.eq.s32.totalorder %s18, 1
    %p162 = por %p160, %p161
    %p163 = scmp.ne.s32.totalorder %s154, %s155
    %p164 = scmp.eq.s32.totalorder %s18, 0
    %p165 = por %p163, %p164
    %p166 = scmp.ne.s32.totalorder %s154, %s155
    %p167 = scmp.eq.s32.totalorder %s19, 1
    %p168 = por %p166, %p167
    %p170 = scmp.ne.s32.totalorder %s155, %s169
    %p171 = scmp.eq.s32.totalorder %s19, 0
    %p172 = por %p170, %p171
    %s173 = ssub.s32 %s13, %s20
    %p174 = scmp.eq.s32.totalorder %s173, 0
    %s176 = sadd.s32 %s175, 1
    %s177 = scalar_select %p174, %s175, %s176
    %p180 = pneg %p174
    %p181 = scmp.eq.s32.totalorder %s13, 1
    %p182 = por %p180, %p181
    %p183 = scmp.ne.s32.totalorder %s175, %s178
    %p184 = scmp.eq.s32.totalorder %s13, 0
    %p185 = por %p183, %p184
    %p186 = scmp.ne.s32.totalorder %s175, %s178
    %p187 = scmp.eq.s32.totalorder %s18, 1
    %p188 = por %p186, %p187
    %p189 = scmp.ne.s32.totalorder %s178, %s179
    %p190 = scmp.eq.s32.totalorder %s18, 0
    %p191 = por %p189, %p190
    %p192 = scmp.ne.s32.totalorder %s178, %s179
    %p193 = scmp.eq.s32.totalorder %s19, 1
    %p194 = por %p192, %p193
    %p196 = scmp.ne.s32.totalorder %s179, %s195
    %p197 = scmp.eq.s32.totalorder %s19, 0
    %p198 = por %p196, %p197
    %p199 = scmp.le.s32.totalorder 1, %s13
    %p200 = scmp.lt.s32.totalorder %s13, 3
    %p201 = pnand %p199, %p200
    %p202 = pneg %p201
    // Predicated region
    $region9: #{fcnetwork_forward.1} parent=5 // pred_check
      _
    $region10: #{fcnetwork_forward.1} parent=5 // pred_check_branch
      %204 = sbr.rel (%p201) target = $region12
    $region11: #{fcnetwork_forward.1} parent=5 // pred_region
      %s205 = ssub.s32 %s13, 1
      // Predicated region
      $region13: #{fcnetwork_forward.1} parent=11 // pred_check
        %p206 = pneg %p60
      $region14: #{fcnetwork_forward.1} parent=11 // pred_check_branch
        %208 = sbr.rel (%p206) target = $region16
      $region15: #{fcnetwork_forward.1} parent=11 // pred_region
        _
      $region16: #{fcnetwork_forward.1} parent=11 // pred_fallthru
        _
      // Predicated region
      $region17: #{fcnetwork_forward.1} parent=11 // pred_check
        %p209 = pneg %p81
      $region18: #{fcnetwork_forward.1} parent=11 // pred_check_branch
        %211 = sbr.rel (%p209) target = $region20
      $region19: #{fcnetwork_forward.1} parent=11 // pred_region
        _
      $region20: #{fcnetwork_forward.1} parent=11 // pred_fallthru
        _
      // Predicated region
      $region21: #{fcnetwork_forward.1} parent=11 // pred_check
        %p212 = pneg %p102
      $region22: #{fcnetwork_forward.1} parent=11 // pred_check_branch
        %214 = sbr.rel (%p212) target = $region24
      $region23: #{fcnetwork_forward.1} parent=11 // pred_region
        _
      $region24: #{fcnetwork_forward.1} parent=11 // pred_fallthru
        _
      // Predicated region
      $region25: #{fcnetwork_forward.1} parent=11 // pred_check
        %p215 = pneg %p123
      $region26: #{fcnetwork_forward.1} parent=11 // pred_check_branch
        %217 = sbr.rel (%p215) target = $region28
      $region27: #{fcnetwork_forward.1} parent=11 // pred_region
        _
      $region28: #{fcnetwork_forward.1} parent=11 // pred_fallthru
        _
      // Predicated region
      $region29: #{fcnetwork_forward.1} parent=11 // pred_check
        %p218 = pneg %p144
      $region30: #{fcnetwork_forward.1} parent=11 // pred_check_branch
        %220 = sbr.rel (%p218) target = $region32
      $region31: #{fcnetwork_forward.1} parent=11 // pred_region
        _
      $region32: #{fcnetwork_forward.1} parent=11 // pred_fallthru
        _
      // Predicated region
      $region33: #{fcnetwork_forward.1} parent=11 // pred_check
        %p221 = pneg %p165
      $region34: #{fcnetwork_forward.1} parent=11 // pred_check_branch
        %223 = sbr.rel (%p221) target = $region36
      $region35: #{fcnetwork_forward.1} parent=11 // pred_region
        _
      $region36: #{fcnetwork_forward.1} parent=11 // pred_fallthru
        _
    $region12: #{fcnetwork_forward.1} parent=5 // pred_fallthru
      _
    %p224 = scmp.lt.s32.totalorder %s13, 2
    // Predicated region
    $region37: #{fcnetwork_forward.1} parent=5 // pred_check
      %p225 = pneg %p224
    $region38: #{fcnetwork_forward.1} parent=5 // pred_check_branch
      %227 = sbr.rel (%p225) target = $region40
    $region39: #{fcnetwork_forward.1} parent=5 // pred_region
      // Predicated region
      $region41: #{fcnetwork_forward.1} parent=39 // pred_check
        %p228 = pneg %p33
      $region42: #{fcnetwork_forward.1} parent=39 // pred_check_branch
        %230 = sbr.rel (%p228) target = $region44
      $region43: #{fcnetwork_forward.1} parent=39 // pred_region
        %s231 = smul.u32 64, %s13
        %p232 = scmp.lt.s32.totalorder %s231, 127
        %s233 = scalar_select %p232, %s231, 127
        %s234 = smul.addr %s233, 8
        %s235 = scalar_lea.vmem %s0, %s234
        %s236 = smul.u32 64, %s13
      $region44: #{fcnetwork_forward.1} parent=39 // pred_fallthru
        _
    $region40: #{fcnetwork_forward.1} parent=5 // pred_fallthru
      _
    %p237 = scmp.le.s32.totalorder 1, %s13
    %p238 = scmp.lt.s32.totalorder %s13, 3
    %p239 = pnand %p237, %p238
    %p240 = pneg %p239
    // Predicated region
    $region45: #{fcnetwork_forward.1} parent=5 // pred_check
      _
    $region46: #{fcnetwork_forward.1} parent=5 // pred_check_branch
      %242 = sbr.rel (%p239) target = $region48
    $region47: #{fcnetwork_forward.1} parent=5 // pred_region
      %s243 = ssub.s32 %s13, 1
      %s244 = smul.u32 64, %s18
      %p245 = scmp.lt.s32.totalorder %s244, 127
      %s246 = scalar_select %p245, %s244, 127
      %s247 = smul.addr %s246, 8
      %s248 = scalar_lea.vmem %s0, %s247
      %p249 = pneg %p39
      %p250 = pneg %p36
      %p251 = pneg %p60
      %p252 = pneg %p57
      %p253 = pneg %p81
      %p254 = pneg %p78
      %p255 = pneg %p102
      %p256 = pneg %p99
      %p257 = pneg %p123
      %p258 = pneg %p120
      %p259 = pneg %p144
      %p260 = pneg %p141
      %p261 = pneg %p165
      %p262 = pneg %p162
      %p263 = pneg %p191
      %p264 = pneg %p188
      %s265 = smul.u32 64, %s18
      %p266 = scmp.lt.s32.totalorder %s265, 127
      %s267 = scalar_select %p266, %s265, 127
      %s268 = smul.addr %s267, 8
      %s269 = scalar_lea.vmem %s7, %s268
      %s270 = smul.u32 64, %s18
      %p271 = scmp.lt.s32.totalorder %s270, 127
      %s272 = scalar_select %p271, %s270, 127
      %s273 = smul.addr %s272, 8
      %s274 = scalar_lea.vmem %s0, %s273
      %s275 = smul.u32 64, %s18
      %s276 = smul.u32 64, %s18
      %p277 = scmp.lt.s32.totalorder %s276, 127
      %s278 = scalar_select %p277, %s276, 127
      %s279 = smul.addr %s278, 8
      %s280 = scalar_lea.vmem %s7, %s279
      %s281 = smul.u32 64, %s18
      %v282 = vld [vmem:[%s274] sm:$0xff]
      %v283 = vld [vmem:[%s274 + $0x8] sm:$0xff]
      %v284 = vld [vmem:[%s274 + $0x10] sm:$0xff]
      %v285 = vld [vmem:[%s274 + $0x18] sm:$0xff]
      %v286 = vld [vmem:[%s274 + $0x20] sm:$0xff]
      %v287 = vld [vmem:[%s274 + $0x28] sm:$0xff]
      %v288 = vld [vmem:[%s274 + $0x30] sm:$0xff]
      %v289 = vld [vmem:[%s274 + $0x38] sm:$0xff]
      %v290 = vld [vmem:[%s274 + $0x40] sm:$0xff]
      %v291 = vld [vmem:[%s274 + $0x48] sm:$0xff]
      %v292 = vld [vmem:[%s274 + $0x50] sm:$0xff]
      %v293 = vld [vmem:[%s274 + $0x58] sm:$0xff]
      %v294 = vld [vmem:[%s274 + $0x60] sm:$0xff]
      %v295 = vld [vmem:[%s274 + $0x68] sm:$0xff]
      %v296 = vld [vmem:[%s274 + $0x70] sm:$0xff]
      %v297 = vld [vmem:[%s274 + $0x78] sm:$0xff]
      %v298 = vld [vmem:[%s274 + $0x80] sm:$0xff]
      %v299 = vld [vmem:[%s274 + $0x88] sm:$0xff]
      %v300 = vld [vmem:[%s274 + $0x90] sm:$0xff]
      %v301 = vld [vmem:[%s274 + $0x98] sm:$0xff]
      %v302 = vld [vmem:[%s274 + $0xa0] sm:$0xff]
      %v303 = vld [vmem:[%s274 + $0xa8] sm:$0xff]
      %v304 = vld [vmem:[%s274 + $0xb0] sm:$0xff]
      %v305 = vld [vmem:[%s274 + $0xb8] sm:$0xff]
      %v306 = vld [vmem:[%s274 + $0xc0] sm:$0xff]
      %v307 = vld [vmem:[%s274 + $0xc8] sm:$0xff]
      %v308 = vld [vmem:[%s274 + $0xd0] sm:$0xff]
      %v309 = vld [vmem:[%s274 + $0xd8] sm:$0xff]
      %v310 = vld [vmem:[%s274 + $0xe0] sm:$0xff]
      %v311 = vld [vmem:[%s274 + $0xe8] sm:$0xff]
      %v312 = vld [vmem:[%s274 + $0xf0] sm:$0xff]
      %v313 = vld [vmem:[%s274 + $0xf8] sm:$0xff]
      %v314 = vld [vmem:[%s274 + $0x100] sm:$0xff]
      %v315 = vld [vmem:[%s274 + $0x108] sm:$0xff]
      %v316 = vld [vmem:[%s274 + $0x110] sm:$0xff]
      %v317 = vld [vmem:[%s274 + $0x118] sm:$0xff]
      %v318 = vld [vmem:[%s274 + $0x120] sm:$0xff]
      %v319 = vld [vmem:[%s274 + $0x128] sm:$0xff]
      %v320 = vld [vmem:[%s274 + $0x130] sm:$0xff]
      %v321 = vld [vmem:[%s274 + $0x138] sm:$0xff]
      %v322 = vld [vmem:[%s274 + $0x140] sm:$0xff]
      %v323 = vld [vmem:[%s274 + $0x148] sm:$0xff]
      %v324 = vld [vmem:[%s274 + $0x150] sm:$0xff]
      %v325 = vld [vmem:[%s274 + $0x158] sm:$0xff]
      %v326 = vld [vmem:[%s274 + $0x160] sm:$0xff]
      %v327 = vld [vmem:[%s274 + $0x168] sm:$0xff]
      %v328 = vld [vmem:[%s274 + $0x170] sm:$0xff]
      %v329 = vld [vmem:[%s274 + $0x178] sm:$0xff]
      %v330 = vld [vmem:[%s274 + $0x180] sm:$0xff]
      %v331 = vld [vmem:[%s274 + $0x188] sm:$0xff]
      %v332 = vld [vmem:[%s274 + $0x190] sm:$0xff]
      %v333 = vld [vmem:[%s274 + $0x198] sm:$0xff]
      %v334 = vld [vmem:[%s274 + $0x1a0] sm:$0xff]
      %v335 = vld [vmem:[%s274 + $0x1a8] sm:$0xff]
      %v336 = vld [vmem:[%s274 + $0x1b0] sm:$0xff]
      %v337 = vld [vmem:[%s274 + $0x1b8] sm:$0xff]
      %v338 = vld [vmem:[%s274 + $0x1c0] sm:$0xff]
      %v339 = vld [vmem:[%s274 + $0x1c8] sm:$0xff]
      %v340 = vld [vmem:[%s274 + $0x1d0] sm:$0xff]
      %v341 = vld [vmem:[%s274 + $0x1d8] sm:$0xff]
      %v342 = vld [vmem:[%s274 + $0x1e0] sm:$0xff]
      %v343 = vld [vmem:[%s274 + $0x1e8] sm:$0xff]
      %v344 = vld [vmem:[%s274 + $0x1f0] sm:$0xff]
      %v345 = vld [vmem:[%s274 + $0x1f8] sm:$0xff]
      %v346 = vld [vmem:[%s1] sm:$0xff]
      %v347 = vld [vmem:[%s1 + $0x8] sm:$0xff]
      %v348 = vld [vmem:[%s1 + $0x10] sm:$0xff]
      %v349 = vld [vmem:[%s1 + $0x18] sm:$0xff]
      %v350 = vld [vmem:[%s1 + $0x20] sm:$0xff]
      %v351 = vld [vmem:[%s1 + $0x28] sm:$0xff]
      %v352 = vld [vmem:[%s1 + $0x30] sm:$0xff]
      %v353 = vld [vmem:[%s1 + $0x38] sm:$0xff]
      %v354 = vld [vmem:[%s1 + $0x40] sm:$0xff]
      %v355 = vld [vmem:[%s1 + $0x48] sm:$0xff]
      %v356 = vld [vmem:[%s1 + $0x50] sm:$0xff]
      %v357 = vld [vmem:[%s1 + $0x58] sm:$0xff]
      %v358 = vld [vmem:[%s1 + $0x60] sm:$0xff]
      %v359 = vld [vmem:[%s1 + $0x68] sm:$0xff]
      %v360 = vld [vmem:[%s1 + $0x70] sm:$0xff]
      %v361 = vld [vmem:[%s1 + $0x78] sm:$0xff]
      %v362 = vld [vmem:[%s2] sm:$0x1]
      %v364 = vperm.slane %v362, 0
      %366 = vmatpush.msra.mxu0 %v361
      %367 = vmatpush.msra.mxu0 %v360
      %368 = vmatpush.msra.mxu0 %v359
      %369 = vmatpush.msra.mxu0 %v358
      %370 = vmatpush.msra.mxu0 %v357
      %371 = vmatpush.msra.mxu0 %v356
      %372 = vmatpush.msra.mxu0 %v355
      %373 = vmatpush.msra.mxu0 %v354
      %374 = vmatpush.msra.mxu0 %v353
      %375 = vmatpush.msra.mxu0 %v352
      %376 = vmatpush.msra.mxu0 %v351
      %377 = vmatpush.msra.mxu0 %v350
      %378 = vmatpush.msra.mxu0 %v349
      %379 = vmatpush.msra.mxu0 %v348
      %380 = vmatpush.msra.mxu0 %v347
      %381 = vmatpush.msra.mxu0 %v346
      %382 = vmatmul.f32.gmra.mxu0 %v282
      %v383 = vpop.f32.mrf.mxu0
      %v384 = vadd.f32 %v364, %v383
      %385 = vmatmul.f32.gmra.mxu0 %v283
      %v386 = vpop.f32.mrf.mxu0
      %v387 = vadd.f32 %v364, %v386
      %388 = vmatmul.f32.gmra.mxu0 %v284
      %v389 = vpop.f32.mrf.mxu0
      %v390 = vadd.f32 %v364, %v389
      %391 = vmatmul.f32.gmra.mxu0 %v285
      %v392 = vpop.f32.mrf.mxu0
      %v393 = vadd.f32 %v364, %v392
      %394 = vmatmul.f32.gmra.mxu0 %v286
      %v395 = vpop.f32.mrf.mxu0
      %v396 = vadd.f32 %v364, %v395
      %397 = vmatmul.f32.gmra.mxu0 %v287
      %v398 = vpop.f32.mrf.mxu0
      %v399 = vadd.f32 %v364, %v398
      %400 = vmatmul.f32.gmra.mxu0 %v288
      %v401 = vpop.f32.mrf.mxu0
      %v402 = vadd.f32 %v364, %v401
      %403 = vmatmul.f32.gmra.mxu0 %v289
      %v404 = vpop.f32.mrf.mxu0
      %v405 = vadd.f32 %v364, %v404
      %406 = vmatmul.f32.gmra.mxu0 %v290
      %v407 = vpop.f32.mrf.mxu0
      %v408 = vadd.f32 %v364, %v407
      %409 = vmatmul.f32.gmra.mxu0 %v291
      %v410 = vpop.f32.mrf.mxu0
      %v411 = vadd.f32 %v364, %v410
      %412 = vmatmul.f32.gmra.mxu0 %v292
      %v413 = vpop.f32.mrf.mxu0
      %v414 = vadd.f32 %v364, %v413
      %415 = vmatmul.f32.gmra.mxu0 %v293
      %v416 = vpop.f32.mrf.mxu0
      %v417 = vadd.f32 %v364, %v416
      %418 = vmatmul.f32.gmra.mxu0 %v294
      %v419 = vpop.f32.mrf.mxu0
      %v420 = vadd.f32 %v364, %v419
      %421 = vmatmul.f32.gmra.mxu0 %v295
      %v422 = vpop.f32.mrf.mxu0
      %v423 = vadd.f32 %v364, %v422
      %424 = vmatmul.f32.gmra.mxu0 %v296
      %v425 = vpop.f32.mrf.mxu0
      %v426 = vadd.f32 %v364, %v425
      %427 = vmatmul.f32.gmra.mxu0 %v297
      %v428 = vpop.f32.mrf.mxu0
      %v429 = vadd.f32 %v364, %v428
      %430 = vmatmul.f32.gmra.mxu0 %v298
      %v431 = vpop.f32.mrf.mxu0
      %v432 = vadd.f32 %v364, %v431
      %433 = vmatmul.f32.gmra.mxu0 %v299
      %v434 = vpop.f32.mrf.mxu0
      %v435 = vadd.f32 %v364, %v434
      %436 = vmatmul.f32.gmra.mxu0 %v300
      %v437 = vpop.f32.mrf.mxu0
      %v438 = vadd.f32 %v364, %v437
      %439 = vmatmul.f32.gmra.mxu0 %v301
      %v440 = vpop.f32.mrf.mxu0
      %v441 = vadd.f32 %v364, %v440
      %442 = vmatmul.f32.gmra.mxu0 %v302
      %v443 = vpop.f32.mrf.mxu0
      %v444 = vadd.f32 %v364, %v443
      %445 = vmatmul.f32.gmra.mxu0 %v303
      %v446 = vpop.f32.mrf.mxu0
      %v447 = vadd.f32 %v364, %v446
      %448 = vmatmul.f32.gmra.mxu0 %v304
      %v449 = vpop.f32.mrf.mxu0
      %v450 = vadd.f32 %v364, %v449
      %451 = vmatmul.f32.gmra.mxu0 %v305
      %v452 = vpop.f32.mrf.mxu0
      %v453 = vadd.f32 %v364, %v452
      %454 = vmatmul.f32.gmra.mxu0 %v306
      %v455 = vpop.f32.mrf.mxu0
      %v456 = vadd.f32 %v364, %v455
      %457 = vmatmul.f32.gmra.mxu0 %v307
      %v458 = vpop.f32.mrf.mxu0
      %v459 = vadd.f32 %v364, %v458
      %460 = vmatmul.f32.gmra.mxu0 %v308
      %v461 = vpop.f32.mrf.mxu0
      %v462 = vadd.f32 %v364, %v461
      %463 = vmatmul.f32.gmra.mxu0 %v309
      %v464 = vpop.f32.mrf.mxu0
      %v465 = vadd.f32 %v364, %v464
      %466 = vmatmul.f32.gmra.mxu0 %v310
      %v467 = vpop.f32.mrf.mxu0
      %v468 = vadd.f32 %v364, %v467
      %469 = vmatmul.f32.gmra.mxu0 %v311
      %v470 = vpop.f32.mrf.mxu0
      %v471 = vadd.f32 %v364, %v470
      %472 = vmatmul.f32.gmra.mxu0 %v312
      %v473 = vpop.f32.mrf.mxu0
      %v474 = vadd.f32 %v364, %v473
      %475 = vmatmul.f32.gmra.mxu0 %v313
      %v476 = vpop.f32.mrf.mxu0
      %v477 = vadd.f32 %v364, %v476
      %478 = vmatmul.f32.gmra.mxu0 %v314
      %v479 = vpop.f32.mrf.mxu0
      %v480 = vadd.f32 %v364, %v479
      %481 = vmatmul.f32.gmra.mxu0 %v315
      %v482 = vpop.f32.mrf.mxu0
      %v483 = vadd.f32 %v364, %v482
      %484 = vmatmul.f32.gmra.mxu0 %v316
      %v485 = vpop.f32.mrf.mxu0
      %v486 = vadd.f32 %v364, %v485
      %487 = vmatmul.f32.gmra.mxu0 %v317
      %v488 = vpop.f32.mrf.mxu0
      %v489 = vadd.f32 %v364, %v488
      %490 = vmatmul.f32.gmra.mxu0 %v318
      %v491 = vpop.f32.mrf.mxu0
      %v492 = vadd.f32 %v364, %v491
      %493 = vmatmul.f32.gmra.mxu0 %v319
      %v494 = vpop.f32.mrf.mxu0
      %v495 = vadd.f32 %v364, %v494
      %496 = vmatmul.f32.gmra.mxu0 %v320
      %v497 = vpop.f32.mrf.mxu0
      %v498 = vadd.f32 %v364, %v497
      %499 = vmatmul.f32.gmra.mxu0 %v321
      %v500 = vpop.f32.mrf.mxu0
      %v501 = vadd.f32 %v364, %v500
      %502 = vmatmul.f32.gmra.mxu0 %v322
      %v503 = vpop.f32.mrf.mxu0
      %v504 = vadd.f32 %v364, %v503
      %505 = vmatmul.f32.gmra.mxu0 %v323
      %v506 = vpop.f32.mrf.mxu0
      %v507 = vadd.f32 %v364, %v506
      %508 = vmatmul.f32.gmra.mxu0 %v324
      %v509 = vpop.f32.mrf.mxu0
      %v510 = vadd.f32 %v364, %v509
      %511 = vmatmul.f32.gmra.mxu0 %v325
      %v512 = vpop.f32.mrf.mxu0
      %v513 = vadd.f32 %v364, %v512
      %514 = vmatmul.f32.gmra.mxu0 %v326
      %v515 = vpop.f32.mrf.mxu0
      %v516 = vadd.f32 %v364, %v515
      %517 = vmatmul.f32.gmra.mxu0 %v327
      %v518 = vpop.f32.mrf.mxu0
      %v519 = vadd.f32 %v364, %v518
      %520 = vmatmul.f32.gmra.mxu0 %v328
      %v521 = vpop.f32.mrf.mxu0
      %v522 = vadd.f32 %v364, %v521
      %523 = vmatmul.f32.gmra.mxu0 %v329
      %v524 = vpop.f32.mrf.mxu0
      %v525 = vadd.f32 %v364, %v524
      %526 = vmatmul.f32.gmra.mxu0 %v330
      %v527 = vpop.f32.mrf.mxu0
      %v528 = vadd.f32 %v364, %v527
      %529 = vmatmul.f32.gmra.mxu0 %v331
      %v530 = vpop.f32.mrf.mxu0
      %v531 = vadd.f32 %v364, %v530
      %532 = vmatmul.f32.gmra.mxu0 %v332
      %v533 = vpop.f32.mrf.mxu0
      %v534 = vadd.f32 %v364, %v533
      %535 = vmatmul.f32.gmra.mxu0 %v333
      %v536 = vpop.f32.mrf.mxu0
      %v537 = vadd.f32 %v364, %v536
      %538 = vmatmul.f32.gmra.mxu0 %v334
      %v539 = vpop.f32.mrf.mxu0
      %v540 = vadd.f32 %v364, %v539
      %541 = vmatmul.f32.gmra.mxu0 %v335
      %v542 = vpop.f32.mrf.mxu0
      %v543 = vadd.f32 %v364, %v542
      %544 = vmatmul.f32.gmra.mxu0 %v336
      %v545 = vpop.f32.mrf.mxu0
      %v546 = vadd.f32 %v364, %v545
      %547 = vmatmul.f32.gmra.mxu0 %v337
      %v548 = vpop.f32.mrf.mxu0
      %v549 = vadd.f32 %v364, %v548
      %550 = vmatmul.f32.gmra.mxu0 %v338
      %v551 = vpop.f32.mrf.mxu0
      %v552 = vadd.f32 %v364, %v551
      %553 = vmatmul.f32.gmra.mxu0 %v339
      %v554 = vpop.f32.mrf.mxu0
      %v555 = vadd.f32 %v364, %v554
      %556 = vmatmul.f32.gmra.mxu0 %v340
      %v557 = vpop.f32.mrf.mxu0
      %v558 = vadd.f32 %v364, %v557
      %559 = vmatmul.f32.gmra.mxu0 %v341
      %v560 = vpop.f32.mrf.mxu0
      %v561 = vadd.f32 %v364, %v560
      %562 = vmatmul.f32.gmra.mxu0 %v342
      %v563 = vpop.f32.mrf.mxu0
      %v564 = vadd.f32 %v364, %v563
      %565 = vmatmul.f32.gmra.mxu0 %v343
      %v566 = vpop.f32.mrf.mxu0
      %v567 = vadd.f32 %v364, %v566
      %568 = vmatmul.f32.gmra.mxu0 %v344
      %v569 = vpop.f32.mrf.mxu0
      %v570 = vadd.f32 %v364, %v569
      %571 = vmatmul.f32.gmra.mxu0 %v345
      %v572 = vpop.f32.mrf.mxu0
      %v573 = vadd.f32 %v364, %v572
      %574 = vdwg.mxu0
      %v575 = vxor.u32 %v384, 2147483648
      %v576 = vxor.u32 %v387, 2147483648
      %v577 = vxor.u32 %v390, 2147483648
      %v578 = vxor.u32 %v393, 2147483648
      %v579 = vxor.u32 %v396, 2147483648
      %v580 = vxor.u32 %v399, 2147483648
      %v581 = vxor.u32 %v402, 2147483648
      %v582 = vxor.u32 %v405, 2147483648
      %v583 = vxor.u32 %v408, 2147483648
      %v584 = vxor.u32 %v411, 2147483648
      %v585 = vxor.u32 %v414, 2147483648
      %v586 = vxor.u32 %v417, 2147483648
      %v587 = vxor.u32 %v420, 2147483648
      %v588 = vxor.u32 %v423, 2147483648
      %v589 = vxor.u32 %v426, 2147483648
      %v590 = vxor.u32 %v429, 2147483648
      %v591 = vxor.u32 %v432, 2147483648
      %v592 = vxor.u32 %v435, 2147483648
      %v593 = vxor.u32 %v438, 2147483648
      %v594 = vxor.u32 %v441, 2147483648
      %v595 = vxor.u32 %v444, 2147483648
      %v596 = vxor.u32 %v447, 2147483648
      %v597 = vxor.u32 %v450, 2147483648
      %v598 = vxor.u32 %v453, 2147483648
      %v599 = vxor.u32 %v456, 2147483648
      %v600 = vxor.u32 %v459, 2147483648
      %v601 = vxor.u32 %v462, 2147483648
      %v602 = vxor.u32 %v465, 2147483648
      %v603 = vxor.u32 %v468, 2147483648
      %v604 = vxor.u32 %v471, 2147483648
      %v605 = vxor.u32 %v474, 2147483648
      %v606 = vxor.u32 %v477, 2147483648
      %v607 = vxor.u32 %v480, 2147483648
      %v608 = vxor.u32 %v483, 2147483648
      %v609 = vxor.u32 %v486, 2147483648
      %v610 = vxor.u32 %v489, 2147483648
      %v611 = vxor.u32 %v492, 2147483648
      %v612 = vxor.u32 %v495, 2147483648
      %v613 = vxor.u32 %v498, 2147483648
      %v614 = vxor.u32 %v501, 2147483648
      %v615 = vxor.u32 %v504, 2147483648
      %v616 = vxor.u32 %v507, 2147483648
      %v617 = vxor.u32 %v510, 2147483648
      %v618 = vxor.u32 %v513, 2147483648
      %v619 = vxor.u32 %v516, 2147483648
      %v620 = vxor.u32 %v519, 2147483648
      %v621 = vxor.u32 %v522, 2147483648
      %v622 = vxor.u32 %v525, 2147483648
      %v623 = vxor.u32 %v528, 2147483648
      %v624 = vxor.u32 %v531, 2147483648
      %v625 = vxor.u32 %v534, 2147483648
      %v626 = vxor.u32 %v537, 2147483648
      %v627 = vxor.u32 %v540, 2147483648
      %v628 = vxor.u32 %v543, 2147483648
      %v629 = vxor.u32 %v546, 2147483648
      %v630 = vxor.u32 %v549, 2147483648
      %v631 = vxor.u32 %v552, 2147483648
      %v632 = vxor.u32 %v555, 2147483648
      %v633 = vxor.u32 %v558, 2147483648
      %v634 = vxor.u32 %v561, 2147483648
      %v635 = vxor.u32 %v564, 2147483648
      %v636 = vxor.u32 %v567, 2147483648
      %v637 = vxor.u32 %v570, 2147483648
      %v638 = vxor.u32 %v573, 2147483648
      %v639 = vmul.f32 %v575, 1.442695
      %v640 = vpow.pop %v639
      %v641 = vmul.f32 %v576, 1.442695
      %v642 = vpow.pop %v641
      %v643 = vmul.f32 %v577, 1.442695
      %v644 = vpow.pop %v643
      %v645 = vmul.f32 %v578, 1.442695
      %v646 = vpow.pop %v645
      %v647 = vmul.f32 %v579, 1.442695
      %v648 = vpow.pop %v647
      %v649 = vmul.f32 %v580, 1.442695
      %v650 = vpow.pop %v649
      %v651 = vmul.f32 %v581, 1.442695
      %v652 = vpow.pop %v651
      %v653 = vmul.f32 %v582, 1.442695
      %v654 = vpow.pop %v653
      %v655 = vmul.f32 %v583, 1.442695
      %v656 = vpow.pop %v655
      %v657 = vmul.f32 %v584, 1.442695
      %v658 = vpow.pop %v657
      %v659 = vmul.f32 %v585, 1.442695
      %v660 = vpow.pop %v659
      %v661 = vmul.f32 %v586, 1.442695
      %v662 = vpow.pop %v661
      %v663 = vmul.f32 %v587, 1.442695
      %v664 = vpow.pop %v663
      %v665 = vmul.f32 %v588, 1.442695
      %v666 = vpow.pop %v665
      %v667 = vmul.f32 %v589, 1.442695
      %v668 = vpow.pop %v667
      %v669 = vmul.f32 %v590, 1.442695
      %v670 = vpow.pop %v669
      %v671 = vmul.f32 %v591, 1.442695
      %v672 = vpow.pop %v671
      %v673 = vmul.f32 %v592, 1.442695
      %v674 = vpow.pop %v673
      %v675 = vmul.f32 %v593, 1.442695
      %v676 = vpow.pop %v675
      %v677 = vmul.f32 %v594, 1.442695
      %v678 = vpow.pop %v677
      %v679 = vmul.f32 %v595, 1.442695
      %v680 = vpow.pop %v679
      %v681 = vmul.f32 %v596, 1.442695
      %v682 = vpow.pop %v681
      %v683 = vmul.f32 %v597, 1.442695
      %v684 = vpow.pop %v683
      %v685 = vmul.f32 %v598, 1.442695
      %v686 = vpow.pop %v685
      %v687 = vmul.f32 %v599, 1.442695
      %v688 = vpow.pop %v687
      %v689 = vmul.f32 %v600, 1.442695
      %v690 = vpow.pop %v689
      %v691 = vmul.f32 %v601, 1.442695
      %v692 = vpow.pop %v691
      %v693 = vmul.f32 %v602, 1.442695
      %v694 = vpow.pop %v693
      %v695 = vmul.f32 %v603, 1.442695
      %v696 = vpow.pop %v695
      %v697 = vmul.f32 %v604, 1.442695
      %v698 = vpow.pop %v697
      %v699 = vmul.f32 %v605, 1.442695
      %v700 = vpow.pop %v699
      %v701 = vmul.f32 %v606, 1.442695
      %v702 = vpow.pop %v701
      %v703 = vmul.f32 %v607, 1.442695
      %v704 = vpow.pop %v703
      %v705 = vmul.f32 %v608, 1.442695
      %v706 = vpow.pop %v705
      %v707 = vmul.f32 %v609, 1.442695
      %v708 = vpow.pop %v707
      %v709 = vmul.f32 %v610, 1.442695
      %v710 = vpow.pop %v709
      %v711 = vmul.f32 %v611, 1.442695
      %v712 = vpow.pop %v711
      %v713 = vmul.f32 %v612, 1.442695
      %v714 = vpow.pop %v713
      %v715 = vmul.f32 %v613, 1.442695
      %v716 = vpow.pop %v715
      %v717 = vmul.f32 %v614, 1.442695
      %v718 = vpow.pop %v717
      %v719 = vmul.f32 %v615, 1.442695
      %v720 = vpow.pop %v719
      %v721 = vmul.f32 %v616, 1.442695
      %v722 = vpow.pop %v721
      %v723 = vmul.f32 %v617, 1.442695
      %v724 = vpow.pop %v723
      %v725 = vmul.f32 %v618, 1.442695
      %v726 = vpow.pop %v725
      %v727 = vmul.f32 %v619, 1.442695
      %v728 = vpow.pop %v727
      %v729 = vmul.f32 %v620, 1.442695
      %v730 = vpow.pop %v729
      %v731 = vmul.f32 %v621, 1.442695
      %v732 = vpow.pop %v731
      %v733 = vmul.f32 %v622, 1.442695
      %v734 = vpow.pop %v733
      %v735 = vmul.f32 %v623, 1.442695
      %v736 = vpow.pop %v735
      %v737 = vmul.f32 %v624, 1.442695
      %v738 = vpow.pop %v737
      %v739 = vmul.f32 %v625, 1.442695
      %v740 = vpow.pop %v739
      %v741 = vmul.f32 %v626, 1.442695
      %v742 = vpow.pop %v741
      %v743 = vmul.f32 %v627, 1.442695
      %v744 = vpow.pop %v743
      %v745 = vmul.f32 %v628, 1.442695
      %v746 = vpow.pop %v745
      %v747 = vmul.f32 %v629, 1.442695
      %v748 = vpow.pop %v747
      %v749 = vmul.f32 %v630, 1.442695
      %v750 = vpow.pop %v749
      %v751 = vmul.f32 %v631, 1.442695
      %v752 = vpow.pop %v751
      %v753 = vmul.f32 %v632, 1.442695
      %v754 = vpow.pop %v753
      %v755 = vmul.f32 %v633, 1.442695
      %v756 = vpow.pop %v755
      %v757 = vmul.f32 %v634, 1.442695
      %v758 = vpow.pop %v757
      %v759 = vmul.f32 %v635, 1.442695
      %v760 = vpow.pop %v759
      %v761 = vmul.f32 %v636, 1.442695
      %v762 = vpow.pop %v761
      %v763 = vmul.f32 %v637, 1.442695
      %v764 = vpow.pop %v763
      %v765 = vmul.f32 %v638, 1.442695
      %v766 = vpow.pop %v765
      %v767 = vadd.f32 %v640, 1.0
      %v768 = vadd.f32 %v642, 1.0
      %v769 = vadd.f32 %v644, 1.0
      %v770 = vadd.f32 %v646, 1.0
      %v771 = vadd.f32 %v648, 1.0
      %v772 = vadd.f32 %v650, 1.0
      %v773 = vadd.f32 %v652, 1.0
      %v774 = vadd.f32 %v654, 1.0
      %v775 = vadd.f32 %v656, 1.0
      %v776 = vadd.f32 %v658, 1.0
      %v777 = vadd.f32 %v660, 1.0
      %v778 = vadd.f32 %v662, 1.0
      %v779 = vadd.f32 %v664, 1.0
      %v780 = vadd.f32 %v666, 1.0
      %v781 = vadd.f32 %v668, 1.0
      %v782 = vadd.f32 %v670, 1.0
      %v783 = vadd.f32 %v672, 1.0
      %v784 = vadd.f32 %v674, 1.0
      %v785 = vadd.f32 %v676, 1.0
      %v786 = vadd.f32 %v678, 1.0
      %v787 = vadd.f32 %v680, 1.0
      %v788 = vadd.f32 %v682, 1.0
      %v789 = vadd.f32 %v684, 1.0
      %v790 = vadd.f32 %v686, 1.0
      %v791 = vadd.f32 %v688, 1.0
      %v792 = vadd.f32 %v690, 1.0
      %v793 = vadd.f32 %v692, 1.0
      %v794 = vadd.f32 %v694, 1.0
      %v795 = vadd.f32 %v696, 1.0
      %v796 = vadd.f32 %v698, 1.0
      %v797 = vadd.f32 %v700, 1.0
      %v798 = vadd.f32 %v702, 1.0
      %v799 = vadd.f32 %v704, 1.0
      %v800 = vadd.f32 %v706, 1.0
      %v801 = vadd.f32 %v708, 1.0
      %v802 = vadd.f32 %v710, 1.0
      %v803 = vadd.f32 %v712, 1.0
      %v804 = vadd.f32 %v714, 1.0
      %v805 = vadd.f32 %v716, 1.0
      %v806 = vadd.f32 %v718, 1.0
      %v807 = vadd.f32 %v720, 1.0
      %v808 = vadd.f32 %v722, 1.0
      %v809 = vadd.f32 %v724, 1.0
      %v810 = vadd.f32 %v726, 1.0
      %v811 = vadd.f32 %v728, 1.0
      %v812 = vadd.f32 %v730, 1.0
      %v813 = vadd.f32 %v732, 1.0
      %v814 = vadd.f32 %v734, 1.0
      %v815 = vadd.f32 %v736, 1.0
      %v816 = vadd.f32 %v738, 1.0
      %v817 = vadd.f32 %v740, 1.0
      %v818 = vadd.f32 %v742, 1.0
      %v819 = vadd.f32 %v744, 1.0
      %v820 = vadd.f32 %v746, 1.0
      %v821 = vadd.f32 %v748, 1.0
      %v822 = vadd.f32 %v750, 1.0
      %v823 = vadd.f32 %v752, 1.0
      %v824 = vadd.f32 %v754, 1.0
      %v825 = vadd.f32 %v756, 1.0
      %v826 = vadd.f32 %v758, 1.0
      %v827 = vadd.f32 %v760, 1.0
      %v828 = vadd.f32 %v762, 1.0
      %v829 = vadd.f32 %v764, 1.0
      %v830 = vadd.f32 %v766, 1.0
      %v831 = vrcp.pop %v767
      %v832 = vmul.f32 %v767, %v831
      %v833 = vsub.f32 1.0, %v832
      %v834 = vmul.f32 %v831, %v833
      %v835 = vadd.f32 %v831, %v834
      %vm836 = vweird.f32 %v767
      %vm837 = vweird.f32 %v831
      %vm838 = vmor %vm836, %vm837
      %v839 = vsel %vm838, %v831, %v835
      %v840 = vand.u32 2147483647, %v767
      %vm841 = vcmp.eq.f32.partialorder %v840, 8.507059e+37
      %v842 = vand.u32 %v767, 2147483648
      %v843 = vor.u32 1.1754944e-38, %v842
      %v844 = vsel %vm841, %v843, %v839
      %v845 = vmul.f32 1.0, %v844
      %v846 = vrcp.pop %v768
      %v847 = vmul.f32 %v768, %v846
      %v848 = vsub.f32 1.0, %v847
      %v849 = vmul.f32 %v846, %v848
      %v850 = vadd.f32 %v846, %v849
      %vm851 = vweird.f32 %v768
      %vm852 = vweird.f32 %v846
      %vm853 = vmor %vm851, %vm852
      %v854 = vsel %vm853, %v846, %v850
      %v855 = vand.u32 2147483647, %v768
      %vm856 = vcmp.eq.f32.partialorder %v855, 8.507059e+37
      %v857 = vand.u32 %v768, 2147483648
      %v858 = vor.u32 1.1754944e-38, %v857
      %v859 = vsel %vm856, %v858, %v854
      %v860 = vmul.f32 1.0, %v859
      %v861 = vrcp.pop %v769
      %v862 = vmul.f32 %v769, %v861
      %v863 = vsub.f32 1.0, %v862
      %v864 = vmul.f32 %v861, %v863
      %v865 = vadd.f32 %v861, %v864
      %vm866 = vweird.f32 %v769
      %vm867 = vweird.f32 %v861
      %vm868 = vmor %vm866, %vm867
      %v869 = vsel %vm868, %v861, %v865
      %v870 = vand.u32 2147483647, %v769
      %vm871 = vcmp.eq.f32.partialorder %v870, 8.507059e+37
      %v872 = vand.u32 %v769, 2147483648
      %v873 = vor.u32 1.1754944e-38, %v872
      %v874 = vsel %vm871, %v873, %v869
      %v875 = vmul.f32 1.0, %v874
      %v876 = vrcp.pop %v770
      %v877 = vmul.f32 %v770, %v876
      %v878 = vsub.f32 1.0, %v877
      %v879 = vmul.f32 %v876, %v878
      %v880 = vadd.f32 %v876, %v879
      %vm881 = vweird.f32 %v770
      %vm882 = vweird.f32 %v876
      %vm883 = vmor %vm881, %vm882
      %v884 = vsel %vm883, %v876, %v880
      %v885 = vand.u32 2147483647, %v770
      %vm886 = vcmp.eq.f32.partialorder %v885, 8.507059e+37
      %v887 = vand.u32 %v770, 2147483648
      %v888 = vor.u32 1.1754944e-38, %v887
      %v889 = vsel %vm886, %v888, %v884
      %v890 = vmul.f32 1.0, %v889
      %v891 = vrcp.pop %v771
      %v892 = vmul.f32 %v771, %v891
      %v893 = vsub.f32 1.0, %v892
      %v894 = vmul.f32 %v891, %v893
      %v895 = vadd.f32 %v891, %v894
      %vm896 = vweird.f32 %v771
      %vm897 = vweird.f32 %v891
      %vm898 = vmor %vm896, %vm897
      %v899 = vsel %vm898, %v891, %v895
      %v900 = vand.u32 2147483647, %v771
      %vm901 = vcmp.eq.f32.partialorder %v900, 8.507059e+37
      %v902 = vand.u32 %v771, 2147483648
      %v903 = vor.u32 1.1754944e-38, %v902
      %v904 = vsel %vm901, %v903, %v899
      %v905 = vmul.f32 1.0, %v904
      %v906 = vrcp.pop %v772
      %v907 = vmul.f32 %v772, %v906
      %v908 = vsub.f32 1.0, %v907
      %v909 = vmul.f32 %v906, %v908
      %v910 = vadd.f32 %v906, %v909
      %vm911 = vweird.f32 %v772
      %vm912 = vweird.f32 %v906
      %vm913 = vmor %vm911, %vm912
      %v914 = vsel %vm913, %v906, %v910
      %v915 = vand.u32 2147483647, %v772
      %vm916 = vcmp.eq.f32.partialorder %v915, 8.507059e+37
      %v917 = vand.u32 %v772, 2147483648
      %v918 = vor.u32 1.1754944e-38, %v917
      %v919 = vsel %vm916, %v918, %v914
      %v920 = vmul.f32 1.0, %v919
      %v921 = vrcp.pop %v773
      %v922 = vmul.f32 %v773, %v921
      %v923 = vsub.f32 1.0, %v922
      %v924 = vmul.f32 %v921, %v923
      %v925 = vadd.f32 %v921, %v924
      %vm926 = vweird.f32 %v773
      %vm927 = vweird.f32 %v921
      %vm928 = vmor %vm926, %vm927
      %v929 = vsel %vm928, %v921, %v925
      %v930 = vand.u32 2147483647, %v773
      %vm931 = vcmp.eq.f32.partialorder %v930, 8.507059e+37
      %v932 = vand.u32 %v773, 2147483648
      %v933 = vor.u32 1.1754944e-38, %v932
      %v934 = vsel %vm931, %v933, %v929
      %v935 = vmul.f32 1.0, %v934
      %v936 = vrcp.pop %v774
      %v937 = vmul.f32 %v774, %v936
      %v938 = vsub.f32 1.0, %v937
      %v939 = vmul.f32 %v936, %v938
      %v940 = vadd.f32 %v936, %v939
      %vm941 = vweird.f32 %v774
      %vm942 = vweird.f32 %v936
      %vm943 = vmor %vm941, %vm942
      %v944 = vsel %vm943, %v936, %v940
      %v945 = vand.u32 2147483647, %v774
      %vm946 = vcmp.eq.f32.partialorder %v945, 8.507059e+37
      %v947 = vand.u32 %v774, 2147483648
      %v948 = vor.u32 1.1754944e-38, %v947
      %v949 = vsel %vm946, %v948, %v944
      %v950 = vmul.f32 1.0, %v949
      %v951 = vrcp.pop %v775
      %v952 = vmul.f32 %v775, %v951
      %v953 = vsub.f32 1.0, %v952
      %v954 = vmul.f32 %v951, %v953
      %v955 = vadd.f32 %v951, %v954
      %vm956 = vweird.f32 %v775
      %vm957 = vweird.f32 %v951
      %vm958 = vmor %vm956, %vm957
      %v959 = vsel %vm958, %v951, %v955
      %v960 = vand.u32 2147483647, %v775
      %vm961 = vcmp.eq.f32.partialorder %v960, 8.507059e+37
      %v962 = vand.u32 %v775, 2147483648
      %v963 = vor.u32 1.1754944e-38, %v962
      %v964 = vsel %vm961, %v963, %v959
      %v965 = vmul.f32 1.0, %v964
      %v966 = vrcp.pop %v776
      %v967 = vmul.f32 %v776, %v966
      %v968 = vsub.f32 1.0, %v967
      %v969 = vmul.f32 %v966, %v968
      %v970 = vadd.f32 %v966, %v969
      %vm971 = vweird.f32 %v776
      %vm972 = vweird.f32 %v966
      %vm973 = vmor %vm971, %vm972
      %v974 = vsel %vm973, %v966, %v970
      %v975 = vand.u32 2147483647, %v776
      %vm976 = vcmp.eq.f32.partialorder %v975, 8.507059e+37
      %v977 = vand.u32 %v776, 2147483648
      %v978 = vor.u32 1.1754944e-38, %v977
      %v979 = vsel %vm976, %v978, %v974
      %v980 = vmul.f32 1.0, %v979
      %v981 = vrcp.pop %v777
      %v982 = vmul.f32 %v777, %v981
      %v983 = vsub.f32 1.0, %v982
      %v984 = vmul.f32 %v981, %v983
      %v985 = vadd.f32 %v981, %v984
      %vm986 = vweird.f32 %v777
      %vm987 = vweird.f32 %v981
      %vm988 = vmor %vm986, %vm987
      %v989 = vsel %vm988, %v981, %v985
      %v990 = vand.u32 2147483647, %v777
      %vm991 = vcmp.eq.f32.partialorder %v990, 8.507059e+37
      %v992 = vand.u32 %v777, 2147483648
      %v993 = vor.u32 1.1754944e-38, %v992
      %v994 = vsel %vm991, %v993, %v989
      %v995 = vmul.f32 1.0, %v994
      %v996 = vrcp.pop %v778
      %v997 = vmul.f32 %v778, %v996
      %v998 = vsub.f32 1.0, %v997
      %v999 = vmul.f32 %v996, %v998
      %v1000 = vadd.f32 %v996, %v999
      %vm1001 = vweird.f32 %v778
      %vm1002 = vweird.f32 %v996
      %vm1003 = vmor %vm1001, %vm1002
      %v1004 = vsel %vm1003, %v996, %v1000
      %v1005 = vand.u32 2147483647, %v778
      %vm1006 = vcmp.eq.f32.partialorder %v1005, 8.507059e+37
      %v1007 = vand.u32 %v778, 2147483648
      %v1008 = vor.u32 1.1754944e-38, %v1007
      %v1009 = vsel %vm1006, %v1008, %v1004
      %v1010 = vmul.f32 1.0, %v1009
      %v1011 = vrcp.pop %v779
      %v1012 = vmul.f32 %v779, %v1011
      %v1013 = vsub.f32 1.0, %v1012
      %v1014 = vmul.f32 %v1011, %v1013
      %v1015 = vadd.f32 %v1011, %v1014
      %vm1016 = vweird.f32 %v779
      %vm1017 = vweird.f32 %v1011
      %vm1018 = vmor %vm1016, %vm1017
      %v1019 = vsel %vm1018, %v1011, %v1015
      %v1020 = vand.u32 2147483647, %v779
      %vm1021 = vcmp.eq.f32.partialorder %v1020, 8.507059e+37
      %v1022 = vand.u32 %v779, 2147483648
      %v1023 = vor.u32 1.1754944e-38, %v1022
      %v1024 = vsel %vm1021, %v1023, %v1019
      %v1025 = vmul.f32 1.0, %v1024
      %v1026 = vrcp.pop %v780
      %v1027 = vmul.f32 %v780, %v1026
      %v1028 = vsub.f32 1.0, %v1027
      %v1029 = vmul.f32 %v1026, %v1028
      %v1030 = vadd.f32 %v1026, %v1029
      %vm1031 = vweird.f32 %v780
      %vm1032 = vweird.f32 %v1026
      %vm1033 = vmor %vm1031, %vm1032
      %v1034 = vsel %vm1033, %v1026, %v1030
      %v1035 = vand.u32 2147483647, %v780
      %vm1036 = vcmp.eq.f32.partialorder %v1035, 8.507059e+37
      %v1037 = vand.u32 %v780, 2147483648
      %v1038 = vor.u32 1.1754944e-38, %v1037
      %v1039 = vsel %vm1036, %v1038, %v1034
      %v1040 = vmul.f32 1.0, %v1039
      %v1041 = vrcp.pop %v781
      %v1042 = vmul.f32 %v781, %v1041
      %v1043 = vsub.f32 1.0, %v1042
      %v1044 = vmul.f32 %v1041, %v1043
      %v1045 = vadd.f32 %v1041, %v1044
      %vm1046 = vweird.f32 %v781
      %vm1047 = vweird.f32 %v1041
      %vm1048 = vmor %vm1046, %vm1047
      %v1049 = vsel %vm1048, %v1041, %v1045
      %v1050 = vand.u32 2147483647, %v781
      %vm1051 = vcmp.eq.f32.partialorder %v1050, 8.507059e+37
      %v1052 = vand.u32 %v781, 2147483648
      %v1053 = vor.u32 1.1754944e-38, %v1052
      %v1054 = vsel %vm1051, %v1053, %v1049
      %v1055 = vmul.f32 1.0, %v1054
      %v1056 = vrcp.pop %v782
      %v1057 = vmul.f32 %v782, %v1056
      %v1058 = vsub.f32 1.0, %v1057
      %v1059 = vmul.f32 %v1056, %v1058
      %v1060 = vadd.f32 %v1056, %v1059
      %vm1061 = vweird.f32 %v782
      %vm1062 = vweird.f32 %v1056
      %vm1063 = vmor %vm1061, %vm1062
      %v1064 = vsel %vm1063, %v1056, %v1060
      %v1065 = vand.u32 2147483647, %v782
      %vm1066 = vcmp.eq.f32.partialorder %v1065, 8.507059e+37
      %v1067 = vand.u32 %v782, 2147483648
      %v1068 = vor.u32 1.1754944e-38, %v1067
      %v1069 = vsel %vm1066, %v1068, %v1064
      %v1070 = vmul.f32 1.0, %v1069
      %v1071 = vrcp.pop %v783
      %v1072 = vmul.f32 %v783, %v1071
      %v1073 = vsub.f32 1.0, %v1072
      %v1074 = vmul.f32 %v1071, %v1073
      %v1075 = vadd.f32 %v1071, %v1074
      %vm1076 = vweird.f32 %v783
      %vm1077 = vweird.f32 %v1071
      %vm1078 = vmor %vm1076, %vm1077
      %v1079 = vsel %vm1078, %v1071, %v1075
      %v1080 = vand.u32 2147483647, %v783
      %vm1081 = vcmp.eq.f32.partialorder %v1080, 8.507059e+37
      %v1082 = vand.u32 %v783, 2147483648
      %v1083 = vor.u32 1.1754944e-38, %v1082
      %v1084 = vsel %vm1081, %v1083, %v1079
      %v1085 = vmul.f32 1.0, %v1084
      %v1086 = vrcp.pop %v784
      %v1087 = vmul.f32 %v784, %v1086
      %v1088 = vsub.f32 1.0, %v1087
      %v1089 = vmul.f32 %v1086, %v1088
      %v1090 = vadd.f32 %v1086, %v1089
      %vm1091 = vweird.f32 %v784
      %vm1092 = vweird.f32 %v1086
      %vm1093 = vmor %vm1091, %vm1092
      %v1094 = vsel %vm1093, %v1086, %v1090
      %v1095 = vand.u32 2147483647, %v784
      %vm1096 = vcmp.eq.f32.partialorder %v1095, 8.507059e+37
      %v1097 = vand.u32 %v784, 2147483648
      %v1098 = vor.u32 1.1754944e-38, %v1097
      %v1099 = vsel %vm1096, %v1098, %v1094
      %v1100 = vmul.f32 1.0, %v1099
      %v1101 = vrcp.pop %v785
      %v1102 = vmul.f32 %v785, %v1101
      %v1103 = vsub.f32 1.0, %v1102
      %v1104 = vmul.f32 %v1101, %v1103
      %v1105 = vadd.f32 %v1101, %v1104
      %vm1106 = vweird.f32 %v785
      %vm1107 = vweird.f32 %v1101
      %vm1108 = vmor %vm1106, %vm1107
      %v1109 = vsel %vm1108, %v1101, %v1105
      %v1110 = vand.u32 2147483647, %v785
      %vm1111 = vcmp.eq.f32.partialorder %v1110, 8.507059e+37
      %v1112 = vand.u32 %v785, 2147483648
      %v1113 = vor.u32 1.1754944e-38, %v1112
      %v1114 = vsel %vm1111, %v1113, %v1109
      %v1115 = vmul.f32 1.0, %v1114
      %v1116 = vrcp.pop %v786
      %v1117 = vmul.f32 %v786, %v1116
      %v1118 = vsub.f32 1.0, %v1117
      %v1119 = vmul.f32 %v1116, %v1118
      %v1120 = vadd.f32 %v1116, %v1119
      %vm1121 = vweird.f32 %v786
      %vm1122 = vweird.f32 %v1116
      %vm1123 = vmor %vm1121, %vm1122
      %v1124 = vsel %vm1123, %v1116, %v1120
      %v1125 = vand.u32 2147483647, %v786
      %vm1126 = vcmp.eq.f32.partialorder %v1125, 8.507059e+37
      %v1127 = vand.u32 %v786, 2147483648
      %v1128 = vor.u32 1.1754944e-38, %v1127
      %v1129 = vsel %vm1126, %v1128, %v1124
      %v1130 = vmul.f32 1.0, %v1129
      %v1131 = vrcp.pop %v787
      %v1132 = vmul.f32 %v787, %v1131
      %v1133 = vsub.f32 1.0, %v1132
      %v1134 = vmul.f32 %v1131, %v1133
      %v1135 = vadd.f32 %v1131, %v1134
      %vm1136 = vweird.f32 %v787
      %vm1137 = vweird.f32 %v1131
      %vm1138 = vmor %vm1136, %vm1137
      %v1139 = vsel %vm1138, %v1131, %v1135
      %v1140 = vand.u32 2147483647, %v787
      %vm1141 = vcmp.eq.f32.partialorder %v1140, 8.507059e+37
      %v1142 = vand.u32 %v787, 2147483648
      %v1143 = vor.u32 1.1754944e-38, %v1142
      %v1144 = vsel %vm1141, %v1143, %v1139
      %v1145 = vmul.f32 1.0, %v1144
      %v1146 = vrcp.pop %v788
      %v1147 = vmul.f32 %v788, %v1146
      %v1148 = vsub.f32 1.0, %v1147
      %v1149 = vmul.f32 %v1146, %v1148
      %v1150 = vadd.f32 %v1146, %v1149
      %vm1151 = vweird.f32 %v788
      %vm1152 = vweird.f32 %v1146
      %vm1153 = vmor %vm1151, %vm1152
      %v1154 = vsel %vm1153, %v1146, %v1150
      %v1155 = vand.u32 2147483647, %v788
      %vm1156 = vcmp.eq.f32.partialorder %v1155, 8.507059e+37
      %v1157 = vand.u32 %v788, 2147483648
      %v1158 = vor.u32 1.1754944e-38, %v1157
      %v1159 = vsel %vm1156, %v1158, %v1154
      %v1160 = vmul.f32 1.0, %v1159
      %v1161 = vrcp.pop %v789
      %v1162 = vmul.f32 %v789, %v1161
      %v1163 = vsub.f32 1.0, %v1162
      %v1164 = vmul.f32 %v1161, %v1163
      %v1165 = vadd.f32 %v1161, %v1164
      %vm1166 = vweird.f32 %v789
      %vm1167 = vweird.f32 %v1161
      %vm1168 = vmor %vm1166, %vm1167
      %v1169 = vsel %vm1168, %v1161, %v1165
      %v1170 = vand.u32 2147483647, %v789
      %vm1171 = vcmp.eq.f32.partialorder %v1170, 8.507059e+37
      %v1172 = vand.u32 %v789, 2147483648
      %v1173 = vor.u32 1.1754944e-38, %v1172
      %v1174 = vsel %vm1171, %v1173, %v1169
      %v1175 = vmul.f32 1.0, %v1174
      %v1176 = vrcp.pop %v790
      %v1177 = vmul.f32 %v790, %v1176
      %v1178 = vsub.f32 1.0, %v1177
      %v1179 = vmul.f32 %v1176, %v1178
      %v1180 = vadd.f32 %v1176, %v1179
      %vm1181 = vweird.f32 %v790
      %vm1182 = vweird.f32 %v1176
      %vm1183 = vmor %vm1181, %vm1182
      %v1184 = vsel %vm1183, %v1176, %v1180
      %v1185 = vand.u32 2147483647, %v790
      %vm1186 = vcmp.eq.f32.partialorder %v1185, 8.507059e+37
      %v1187 = vand.u32 %v790, 2147483648
      %v1188 = vor.u32 1.1754944e-38, %v1187
      %v1189 = vsel %vm1186, %v1188, %v1184
      %v1190 = vmul.f32 1.0, %v1189
      %v1191 = vrcp.pop %v791
      %v1192 = vmul.f32 %v791, %v1191
      %v1193 = vsub.f32 1.0, %v1192
      %v1194 = vmul.f32 %v1191, %v1193
      %v1195 = vadd.f32 %v1191, %v1194
      %vm1196 = vweird.f32 %v791
      %vm1197 = vweird.f32 %v1191
      %vm1198 = vmor %vm1196, %vm1197
      %v1199 = vsel %vm1198, %v1191, %v1195
      %v1200 = vand.u32 2147483647, %v791
      %vm1201 = vcmp.eq.f32.partialorder %v1200, 8.507059e+37
      %v1202 = vand.u32 %v791, 2147483648
      %v1203 = vor.u32 1.1754944e-38, %v1202
      %v1204 = vsel %vm1201, %v1203, %v1199
      %v1205 = vmul.f32 1.0, %v1204
      %v1206 = vrcp.pop %v792
      %v1207 = vmul.f32 %v792, %v1206
      %v1208 = vsub.f32 1.0, %v1207
      %v1209 = vmul.f32 %v1206, %v1208
      %v1210 = vadd.f32 %v1206, %v1209
      %vm1211 = vweird.f32 %v792
      %vm1212 = vweird.f32 %v1206
      %vm1213 = vmor %vm1211, %vm1212
      %v1214 = vsel %vm1213, %v1206, %v1210
      %v1215 = vand.u32 2147483647, %v792
      %vm1216 = vcmp.eq.f32.partialorder %v1215, 8.507059e+37
      %v1217 = vand.u32 %v792, 2147483648
      %v1218 = vor.u32 1.1754944e-38, %v1217
      %v1219 = vsel %vm1216, %v1218, %v1214
      %v1220 = vmul.f32 1.0, %v1219
      %v1221 = vrcp.pop %v793
      %v1222 = vmul.f32 %v793, %v1221
      %v1223 = vsub.f32 1.0, %v1222
      %v1224 = vmul.f32 %v1221, %v1223
      %v1225 = vadd.f32 %v1221, %v1224
      %vm1226 = vweird.f32 %v793
      %vm1227 = vweird.f32 %v1221
      %vm1228 = vmor %vm1226, %vm1227
      %v1229 = vsel %vm1228, %v1221, %v1225
      %v1230 = vand.u32 2147483647, %v793
      %vm1231 = vcmp.eq.f32.partialorder %v1230, 8.507059e+37
      %v1232 = vand.u32 %v793, 2147483648
      %v1233 = vor.u32 1.1754944e-38, %v1232
      %v1234 = vsel %vm1231, %v1233, %v1229
      %v1235 = vmul.f32 1.0, %v1234
      %v1236 = vrcp.pop %v794
      %v1237 = vmul.f32 %v794, %v1236
      %v1238 = vsub.f32 1.0, %v1237
      %v1239 = vmul.f32 %v1236, %v1238
      %v1240 = vadd.f32 %v1236, %v1239
      %vm1241 = vweird.f32 %v794
      %vm1242 = vweird.f32 %v1236
      %vm1243 = vmor %vm1241, %vm1242
      %v1244 = vsel %vm1243, %v1236, %v1240
      %v1245 = vand.u32 2147483647, %v794
      %vm1246 = vcmp.eq.f32.partialorder %v1245, 8.507059e+37
      %v1247 = vand.u32 %v794, 2147483648
      %v1248 = vor.u32 1.1754944e-38, %v1247
      %v1249 = vsel %vm1246, %v1248, %v1244
      %v1250 = vmul.f32 1.0, %v1249
      %v1251 = vrcp.pop %v795
      %v1252 = vmul.f32 %v795, %v1251
      %v1253 = vsub.f32 1.0, %v1252
      %v1254 = vmul.f32 %v1251, %v1253
      %v1255 = vadd.f32 %v1251, %v1254
      %vm1256 = vweird.f32 %v795
      %vm1257 = vweird.f32 %v1251
      %vm1258 = vmor %vm1256, %vm1257
      %v1259 = vsel %vm1258, %v1251, %v1255
      %v1260 = vand.u32 2147483647, %v795
      %vm1261 = vcmp.eq.f32.partialorder %v1260, 8.507059e+37
      %v1262 = vand.u32 %v795, 2147483648
      %v1263 = vor.u32 1.1754944e-38, %v1262
      %v1264 = vsel %vm1261, %v1263, %v1259
      %v1265 = vmul.f32 1.0, %v1264
      %v1266 = vrcp.pop %v796
      %v1267 = vmul.f32 %v796, %v1266
      %v1268 = vsub.f32 1.0, %v1267
      %v1269 = vmul.f32 %v1266, %v1268
      %v1270 = vadd.f32 %v1266, %v1269
      %vm1271 = vweird.f32 %v796
      %vm1272 = vweird.f32 %v1266
      %vm1273 = vmor %vm1271, %vm1272
      %v1274 = vsel %vm1273, %v1266, %v1270
      %v1275 = vand.u32 2147483647, %v796
      %vm1276 = vcmp.eq.f32.partialorder %v1275, 8.507059e+37
      %v1277 = vand.u32 %v796, 2147483648
      %v1278 = vor.u32 1.1754944e-38, %v1277
      %v1279 = vsel %vm1276, %v1278, %v1274
      %v1280 = vmul.f32 1.0, %v1279
      %v1281 = vrcp.pop %v797
      %v1282 = vmul.f32 %v797, %v1281
      %v1283 = vsub.f32 1.0, %v1282
      %v1284 = vmul.f32 %v1281, %v1283
      %v1285 = vadd.f32 %v1281, %v1284
      %vm1286 = vweird.f32 %v797
      %vm1287 = vweird.f32 %v1281
      %vm1288 = vmor %vm1286, %vm1287
      %v1289 = vsel %vm1288, %v1281, %v1285
      %v1290 = vand.u32 2147483647, %v797
      %vm1291 = vcmp.eq.f32.partialorder %v1290, 8.507059e+37
      %v1292 = vand.u32 %v797, 2147483648
      %v1293 = vor.u32 1.1754944e-38, %v1292
      %v1294 = vsel %vm1291, %v1293, %v1289
      %v1295 = vmul.f32 1.0, %v1294
      %v1296 = vrcp.pop %v798
      %v1297 = vmul.f32 %v798, %v1296
      %v1298 = vsub.f32 1.0, %v1297
      %v1299 = vmul.f32 %v1296, %v1298
      %v1300 = vadd.f32 %v1296, %v1299
      %vm1301 = vweird.f32 %v798
      %vm1302 = vweird.f32 %v1296
      %vm1303 = vmor %vm1301, %vm1302
      %v1304 = vsel %vm1303, %v1296, %v1300
      %v1305 = vand.u32 2147483647, %v798
      %vm1306 = vcmp.eq.f32.partialorder %v1305, 8.507059e+37
      %v1307 = vand.u32 %v798, 2147483648
      %v1308 = vor.u32 1.1754944e-38, %v1307
      %v1309 = vsel %vm1306, %v1308, %v1304
      %v1310 = vmul.f32 1.0, %v1309
      %v1311 = vrcp.pop %v799
      %v1312 = vmul.f32 %v799, %v1311
      %v1313 = vsub.f32 1.0, %v1312
      %v1314 = vmul.f32 %v1311, %v1313
      %v1315 = vadd.f32 %v1311, %v1314
      %vm1316 = vweird.f32 %v799
      %vm1317 = vweird.f32 %v1311
      %vm1318 = vmor %vm1316, %vm1317
      %v1319 = vsel %vm1318, %v1311, %v1315
      %v1320 = vand.u32 2147483647, %v799
      %vm1321 = vcmp.eq.f32.partialorder %v1320, 8.507059e+37
      %v1322 = vand.u32 %v799, 2147483648
      %v1323 = vor.u32 1.1754944e-38, %v1322
      %v1324 = vsel %vm1321, %v1323, %v1319
      %v1325 = vmul.f32 1.0, %v1324
      %v1326 = vrcp.pop %v800
      %v1327 = vmul.f32 %v800, %v1326
      %v1328 = vsub.f32 1.0, %v1327
      %v1329 = vmul.f32 %v1326, %v1328
      %v1330 = vadd.f32 %v1326, %v1329
      %vm1331 = vweird.f32 %v800
      %vm1332 = vweird.f32 %v1326
      %vm1333 = vmor %vm1331, %vm1332
      %v1334 = vsel %vm1333, %v1326, %v1330
      %v1335 = vand.u32 2147483647, %v800
      %vm1336 = vcmp.eq.f32.partialorder %v1335, 8.507059e+37
      %v1337 = vand.u32 %v800, 2147483648
      %v1338 = vor.u32 1.1754944e-38, %v1337
      %v1339 = vsel %vm1336, %v1338, %v1334
      %v1340 = vmul.f32 1.0, %v1339
      %v1341 = vrcp.pop %v801
      %v1342 = vmul.f32 %v801, %v1341
      %v1343 = vsub.f32 1.0, %v1342
      %v1344 = vmul.f32 %v1341, %v1343
      %v1345 = vadd.f32 %v1341, %v1344
      %vm1346 = vweird.f32 %v801
      %vm1347 = vweird.f32 %v1341
      %vm1348 = vmor %vm1346, %vm1347
      %v1349 = vsel %vm1348, %v1341, %v1345
      %v1350 = vand.u32 2147483647, %v801
      %vm1351 = vcmp.eq.f32.partialorder %v1350, 8.507059e+37
      %v1352 = vand.u32 %v801, 2147483648
      %v1353 = vor.u32 1.1754944e-38, %v1352
      %v1354 = vsel %vm1351, %v1353, %v1349
      %v1355 = vmul.f32 1.0, %v1354
      %v1356 = vrcp.pop %v802
      %v1357 = vmul.f32 %v802, %v1356
      %v1358 = vsub.f32 1.0, %v1357
      %v1359 = vmul.f32 %v1356, %v1358
      %v1360 = vadd.f32 %v1356, %v1359
      %vm1361 = vweird.f32 %v802
      %vm1362 = vweird.f32 %v1356
      %vm1363 = vmor %vm1361, %vm1362
      %v1364 = vsel %vm1363, %v1356, %v1360
      %v1365 = vand.u32 2147483647, %v802
      %vm1366 = vcmp.eq.f32.partialorder %v1365, 8.507059e+37
      %v1367 = vand.u32 %v802, 2147483648
      %v1368 = vor.u32 1.1754944e-38, %v1367
      %v1369 = vsel %vm1366, %v1368, %v1364
      %v1370 = vmul.f32 1.0, %v1369
      %v1371 = vrcp.pop %v803
      %v1372 = vmul.f32 %v803, %v1371
      %v1373 = vsub.f32 1.0, %v1372
      %v1374 = vmul.f32 %v1371, %v1373
      %v1375 = vadd.f32 %v1371, %v1374
      %vm1376 = vweird.f32 %v803
      %vm1377 = vweird.f32 %v1371
      %vm1378 = vmor %vm1376, %vm1377
      %v1379 = vsel %vm1378, %v1371, %v1375
      %v1380 = vand.u32 2147483647, %v803
      %vm1381 = vcmp.eq.f32.partialorder %v1380, 8.507059e+37
      %v1382 = vand.u32 %v803, 2147483648
      %v1383 = vor.u32 1.1754944e-38, %v1382
      %v1384 = vsel %vm1381, %v1383, %v1379
      %v1385 = vmul.f32 1.0, %v1384
      %v1386 = vrcp.pop %v804
      %v1387 = vmul.f32 %v804, %v1386
      %v1388 = vsub.f32 1.0, %v1387
      %v1389 = vmul.f32 %v1386, %v1388
      %v1390 = vadd.f32 %v1386, %v1389
      %vm1391 = vweird.f32 %v804
      %vm1392 = vweird.f32 %v1386
      %vm1393 = vmor %vm1391, %vm1392
      %v1394 = vsel %vm1393, %v1386, %v1390
      %v1395 = vand.u32 2147483647, %v804
      %vm1396 = vcmp.eq.f32.partialorder %v1395, 8.507059e+37
      %v1397 = vand.u32 %v804, 2147483648
      %v1398 = vor.u32 1.1754944e-38, %v1397
      %v1399 = vsel %vm1396, %v1398, %v1394
      %v1400 = vmul.f32 1.0, %v1399
      %v1401 = vrcp.pop %v805
      %v1402 = vmul.f32 %v805, %v1401
      %v1403 = vsub.f32 1.0, %v1402
      %v1404 = vmul.f32 %v1401, %v1403
      %v1405 = vadd.f32 %v1401, %v1404
      %vm1406 = vweird.f32 %v805
      %vm1407 = vweird.f32 %v1401
      %vm1408 = vmor %vm1406, %vm1407
      %v1409 = vsel %vm1408, %v1401, %v1405
      %v1410 = vand.u32 2147483647, %v805
      %vm1411 = vcmp.eq.f32.partialorder %v1410, 8.507059e+37
      %v1412 = vand.u32 %v805, 2147483648
      %v1413 = vor.u32 1.1754944e-38, %v1412
      %v1414 = vsel %vm1411, %v1413, %v1409
      %v1415 = vmul.f32 1.0, %v1414
      %v1416 = vrcp.pop %v806
      %v1417 = vmul.f32 %v806, %v1416
      %v1418 = vsub.f32 1.0, %v1417
      %v1419 = vmul.f32 %v1416, %v1418
      %v1420 = vadd.f32 %v1416, %v1419
      %vm1421 = vweird.f32 %v806
      %vm1422 = vweird.f32 %v1416
      %vm1423 = vmor %vm1421, %vm1422
      %v1424 = vsel %vm1423, %v1416, %v1420
      %v1425 = vand.u32 2147483647, %v806
      %vm1426 = vcmp.eq.f32.partialorder %v1425, 8.507059e+37
      %v1427 = vand.u32 %v806, 2147483648
      %v1428 = vor.u32 1.1754944e-38, %v1427
      %v1429 = vsel %vm1426, %v1428, %v1424
      %v1430 = vmul.f32 1.0, %v1429
      %v1431 = vrcp.pop %v807
      %v1432 = vmul.f32 %v807, %v1431
      %v1433 = vsub.f32 1.0, %v1432
      %v1434 = vmul.f32 %v1431, %v1433
      %v1435 = vadd.f32 %v1431, %v1434
      %vm1436 = vweird.f32 %v807
      %vm1437 = vweird.f32 %v1431
      %vm1438 = vmor %vm1436, %vm1437
      %v1439 = vsel %vm1438, %v1431, %v1435
      %v1440 = vand.u32 2147483647, %v807
      %vm1441 = vcmp.eq.f32.partialorder %v1440, 8.507059e+37
      %v1442 = vand.u32 %v807, 2147483648
      %v1443 = vor.u32 1.1754944e-38, %v1442
      %v1444 = vsel %vm1441, %v1443, %v1439
      %v1445 = vmul.f32 1.0, %v1444
      %v1446 = vrcp.pop %v808
      %v1447 = vmul.f32 %v808, %v1446
      %v1448 = vsub.f32 1.0, %v1447
      %v1449 = vmul.f32 %v1446, %v1448
      %v1450 = vadd.f32 %v1446, %v1449
      %vm1451 = vweird.f32 %v808
      %vm1452 = vweird.f32 %v1446
      %vm1453 = vmor %vm1451, %vm1452
      %v1454 = vsel %vm1453, %v1446, %v1450
      %v1455 = vand.u32 2147483647, %v808
      %vm1456 = vcmp.eq.f32.partialorder %v1455, 8.507059e+37
      %v1457 = vand.u32 %v808, 2147483648
      %v1458 = vor.u32 1.1754944e-38, %v1457
      %v1459 = vsel %vm1456, %v1458, %v1454
      %v1460 = vmul.f32 1.0, %v1459
      %v1461 = vrcp.pop %v809
      %v1462 = vmul.f32 %v809, %v1461
      %v1463 = vsub.f32 1.0, %v1462
      %v1464 = vmul.f32 %v1461, %v1463
      %v1465 = vadd.f32 %v1461, %v1464
      %vm1466 = vweird.f32 %v809
      %vm1467 = vweird.f32 %v1461
      %vm1468 = vmor %vm1466, %vm1467
      %v1469 = vsel %vm1468, %v1461, %v1465
      %v1470 = vand.u32 2147483647, %v809
      %vm1471 = vcmp.eq.f32.partialorder %v1470, 8.507059e+37
      %v1472 = vand.u32 %v809, 2147483648
      %v1473 = vor.u32 1.1754944e-38, %v1472
      %v1474 = vsel %vm1471, %v1473, %v1469
      %v1475 = vmul.f32 1.0, %v1474
      %v1476 = vrcp.pop %v810
      %v1477 = vmul.f32 %v810, %v1476
      %v1478 = vsub.f32 1.0, %v1477
      %v1479 = vmul.f32 %v1476, %v1478
      %v1480 = vadd.f32 %v1476, %v1479
      %vm1481 = vweird.f32 %v810
      %vm1482 = vweird.f32 %v1476
      %vm1483 = vmor %vm1481, %vm1482
      %v1484 = vsel %vm1483, %v1476, %v1480
      %v1485 = vand.u32 2147483647, %v810
      %vm1486 = vcmp.eq.f32.partialorder %v1485, 8.507059e+37
      %v1487 = vand.u32 %v810, 2147483648
      %v1488 = vor.u32 1.1754944e-38, %v1487
      %v1489 = vsel %vm1486, %v1488, %v1484
      %v1490 = vmul.f32 1.0, %v1489
      %v1491 = vrcp.pop %v811
      %v1492 = vmul.f32 %v811, %v1491
      %v1493 = vsub.f32 1.0, %v1492
      %v1494 = vmul.f32 %v1491, %v1493
      %v1495 = vadd.f32 %v1491, %v1494
      %vm1496 = vweird.f32 %v811
      %vm1497 = vweird.f32 %v1491
      %vm1498 = vmor %vm1496, %vm1497
      %v1499 = vsel %vm1498, %v1491, %v1495
      %v1500 = vand.u32 2147483647, %v811
      %vm1501 = vcmp.eq.f32.partialorder %v1500, 8.507059e+37
      %v1502 = vand.u32 %v811, 2147483648
      %v1503 = vor.u32 1.1754944e-38, %v1502
      %v1504 = vsel %vm1501, %v1503, %v1499
      %v1505 = vmul.f32 1.0, %v1504
      %v1506 = vrcp.pop %v812
      %v1507 = vmul.f32 %v812, %v1506
      %v1508 = vsub.f32 1.0, %v1507
      %v1509 = vmul.f32 %v1506, %v1508
      %v1510 = vadd.f32 %v1506, %v1509
      %vm1511 = vweird.f32 %v812
      %vm1512 = vweird.f32 %v1506
      %vm1513 = vmor %vm1511, %vm1512
      %v1514 = vsel %vm1513, %v1506, %v1510
      %v1515 = vand.u32 2147483647, %v812
      %vm1516 = vcmp.eq.f32.partialorder %v1515, 8.507059e+37
      %v1517 = vand.u32 %v812, 2147483648
      %v1518 = vor.u32 1.1754944e-38, %v1517
      %v1519 = vsel %vm1516, %v1518, %v1514
      %v1520 = vmul.f32 1.0, %v1519
      %v1521 = vrcp.pop %v813
      %v1522 = vmul.f32 %v813, %v1521
      %v1523 = vsub.f32 1.0, %v1522
      %v1524 = vmul.f32 %v1521, %v1523
      %v1525 = vadd.f32 %v1521, %v1524
      %vm1526 = vweird.f32 %v813
      %vm1527 = vweird.f32 %v1521
      %vm1528 = vmor %vm1526, %vm1527
      %v1529 = vsel %vm1528, %v1521, %v1525
      %v1530 = vand.u32 2147483647, %v813
      %vm1531 = vcmp.eq.f32.partialorder %v1530, 8.507059e+37
      %v1532 = vand.u32 %v813, 2147483648
      %v1533 = vor.u32 1.1754944e-38, %v1532
      %v1534 = vsel %vm1531, %v1533, %v1529
      %v1535 = vmul.f32 1.0, %v1534
      %v1536 = vrcp.pop %v814
      %v1537 = vmul.f32 %v814, %v1536
      %v1538 = vsub.f32 1.0, %v1537
      %v1539 = vmul.f32 %v1536, %v1538
      %v1540 = vadd.f32 %v1536, %v1539
      %vm1541 = vweird.f32 %v814
      %vm1542 = vweird.f32 %v1536
      %vm1543 = vmor %vm1541, %vm1542
      %v1544 = vsel %vm1543, %v1536, %v1540
      %v1545 = vand.u32 2147483647, %v814
      %vm1546 = vcmp.eq.f32.partialorder %v1545, 8.507059e+37
      %v1547 = vand.u32 %v814, 2147483648
      %v1548 = vor.u32 1.1754944e-38, %v1547
      %v1549 = vsel %vm1546, %v1548, %v1544
      %v1550 = vmul.f32 1.0, %v1549
      %v1551 = vrcp.pop %v815
      %v1552 = vmul.f32 %v815, %v1551
      %v1553 = vsub.f32 1.0, %v1552
      %v1554 = vmul.f32 %v1551, %v1553
      %v1555 = vadd.f32 %v1551, %v1554
      %vm1556 = vweird.f32 %v815
      %vm1557 = vweird.f32 %v1551
      %vm1558 = vmor %vm1556, %vm1557
      %v1559 = vsel %vm1558, %v1551, %v1555
      %v1560 = vand.u32 2147483647, %v815
      %vm1561 = vcmp.eq.f32.partialorder %v1560, 8.507059e+37
      %v1562 = vand.u32 %v815, 2147483648
      %v1563 = vor.u32 1.1754944e-38, %v1562
      %v1564 = vsel %vm1561, %v1563, %v1559
      %v1565 = vmul.f32 1.0, %v1564
      %v1566 = vrcp.pop %v816
      %v1567 = vmul.f32 %v816, %v1566
      %v1568 = vsub.f32 1.0, %v1567
      %v1569 = vmul.f32 %v1566, %v1568
      %v1570 = vadd.f32 %v1566, %v1569
      %vm1571 = vweird.f32 %v816
      %vm1572 = vweird.f32 %v1566
      %vm1573 = vmor %vm1571, %vm1572
      %v1574 = vsel %vm1573, %v1566, %v1570
      %v1575 = vand.u32 2147483647, %v816
      %vm1576 = vcmp.eq.f32.partialorder %v1575, 8.507059e+37
      %v1577 = vand.u32 %v816, 2147483648
      %v1578 = vor.u32 1.1754944e-38, %v1577
      %v1579 = vsel %vm1576, %v1578, %v1574
      %v1580 = vmul.f32 1.0, %v1579
      %v1581 = vrcp.pop %v817
      %v1582 = vmul.f32 %v817, %v1581
      %v1583 = vsub.f32 1.0, %v1582
      %v1584 = vmul.f32 %v1581, %v1583
      %v1585 = vadd.f32 %v1581, %v1584
      %vm1586 = vweird.f32 %v817
      %vm1587 = vweird.f32 %v1581
      %vm1588 = vmor %vm1586, %vm1587
      %v1589 = vsel %vm1588, %v1581, %v1585
      %v1590 = vand.u32 2147483647, %v817
      %vm1591 = vcmp.eq.f32.partialorder %v1590, 8.507059e+37
      %v1592 = vand.u32 %v817, 2147483648
      %v1593 = vor.u32 1.1754944e-38, %v1592
      %v1594 = vsel %vm1591, %v1593, %v1589
      %v1595 = vmul.f32 1.0, %v1594
      %v1596 = vrcp.pop %v818
      %v1597 = vmul.f32 %v818, %v1596
      %v1598 = vsub.f32 1.0, %v1597
      %v1599 = vmul.f32 %v1596, %v1598
      %v1600 = vadd.f32 %v1596, %v1599
      %vm1601 = vweird.f32 %v818
      %vm1602 = vweird.f32 %v1596
      %vm1603 = vmor %vm1601, %vm1602
      %v1604 = vsel %vm1603, %v1596, %v1600
      %v1605 = vand.u32 2147483647, %v818
      %vm1606 = vcmp.eq.f32.partialorder %v1605, 8.507059e+37
      %v1607 = vand.u32 %v818, 2147483648
      %v1608 = vor.u32 1.1754944e-38, %v1607
      %v1609 = vsel %vm1606, %v1608, %v1604
      %v1610 = vmul.f32 1.0, %v1609
      %v1611 = vrcp.pop %v819
      %v1612 = vmul.f32 %v819, %v1611
      %v1613 = vsub.f32 1.0, %v1612
      %v1614 = vmul.f32 %v1611, %v1613
      %v1615 = vadd.f32 %v1611, %v1614
      %vm1616 = vweird.f32 %v819
      %vm1617 = vweird.f32 %v1611
      %vm1618 = vmor %vm1616, %vm1617
      %v1619 = vsel %vm1618, %v1611, %v1615
      %v1620 = vand.u32 2147483647, %v819
      %vm1621 = vcmp.eq.f32.partialorder %v1620, 8.507059e+37
      %v1622 = vand.u32 %v819, 2147483648
      %v1623 = vor.u32 1.1754944e-38, %v1622
      %v1624 = vsel %vm1621, %v1623, %v1619
      %v1625 = vmul.f32 1.0, %v1624
      %v1626 = vrcp.pop %v820
      %v1627 = vmul.f32 %v820, %v1626
      %v1628 = vsub.f32 1.0, %v1627
      %v1629 = vmul.f32 %v1626, %v1628
      %v1630 = vadd.f32 %v1626, %v1629
      %vm1631 = vweird.f32 %v820
      %vm1632 = vweird.f32 %v1626
      %vm1633 = vmor %vm1631, %vm1632
      %v1634 = vsel %vm1633, %v1626, %v1630
      %v1635 = vand.u32 2147483647, %v820
      %vm1636 = vcmp.eq.f32.partialorder %v1635, 8.507059e+37
      %v1637 = vand.u32 %v820, 2147483648
      %v1638 = vor.u32 1.1754944e-38, %v1637
      %v1639 = vsel %vm1636, %v1638, %v1634
      %v1640 = vmul.f32 1.0, %v1639
      %v1641 = vrcp.pop %v821
      %v1642 = vmul.f32 %v821, %v1641
      %v1643 = vsub.f32 1.0, %v1642
      %v1644 = vmul.f32 %v1641, %v1643
      %v1645 = vadd.f32 %v1641, %v1644
      %vm1646 = vweird.f32 %v821
      %vm1647 = vweird.f32 %v1641
      %vm1648 = vmor %vm1646, %vm1647
      %v1649 = vsel %vm1648, %v1641, %v1645
      %v1650 = vand.u32 2147483647, %v821
      %vm1651 = vcmp.eq.f32.partialorder %v1650, 8.507059e+37
      %v1652 = vand.u32 %v821, 2147483648
      %v1653 = vor.u32 1.1754944e-38, %v1652
      %v1654 = vsel %vm1651, %v1653, %v1649
      %v1655 = vmul.f32 1.0, %v1654
      %v1656 = vrcp.pop %v822
      %v1657 = vmul.f32 %v822, %v1656
      %v1658 = vsub.f32 1.0, %v1657
      %v1659 = vmul.f32 %v1656, %v1658
      %v1660 = vadd.f32 %v1656, %v1659
      %vm1661 = vweird.f32 %v822
      %vm1662 = vweird.f32 %v1656
      %vm1663 = vmor %vm1661, %vm1662
      %v1664 = vsel %vm1663, %v1656, %v1660
      %v1665 = vand.u32 2147483647, %v822
      %vm1666 = vcmp.eq.f32.partialorder %v1665, 8.507059e+37
      %v1667 = vand.u32 %v822, 2147483648
      %v1668 = vor.u32 1.1754944e-38, %v1667
      %v1669 = vsel %vm1666, %v1668, %v1664
      %v1670 = vmul.f32 1.0, %v1669
      %v1671 = vrcp.pop %v823
      %v1672 = vmul.f32 %v823, %v1671
      %v1673 = vsub.f32 1.0, %v1672
      %v1674 = vmul.f32 %v1671, %v1673
      %v1675 = vadd.f32 %v1671, %v1674
      %vm1676 = vweird.f32 %v823
      %vm1677 = vweird.f32 %v1671
      %vm1678 = vmor %vm1676, %vm1677
      %v1679 = vsel %vm1678, %v1671, %v1675
      %v1680 = vand.u32 2147483647, %v823
      %vm1681 = vcmp.eq.f32.partialorder %v1680, 8.507059e+37
      %v1682 = vand.u32 %v823, 2147483648
      %v1683 = vor.u32 1.1754944e-38, %v1682
      %v1684 = vsel %vm1681, %v1683, %v1679
      %v1685 = vmul.f32 1.0, %v1684
      %v1686 = vrcp.pop %v824
      %v1687 = vmul.f32 %v824, %v1686
      %v1688 = vsub.f32 1.0, %v1687
      %v1689 = vmul.f32 %v1686, %v1688
      %v1690 = vadd.f32 %v1686, %v1689
      %vm1691 = vweird.f32 %v824
      %vm1692 = vweird.f32 %v1686
      %vm1693 = vmor %vm1691, %vm1692
      %v1694 = vsel %vm1693, %v1686, %v1690
      %v1695 = vand.u32 2147483647, %v824
      %vm1696 = vcmp.eq.f32.partialorder %v1695, 8.507059e+37
      %v1697 = vand.u32 %v824, 2147483648
      %v1698 = vor.u32 1.1754944e-38, %v1697
      %v1699 = vsel %vm1696, %v1698, %v1694
      %v1700 = vmul.f32 1.0, %v1699
      %v1701 = vrcp.pop %v825
      %v1702 = vmul.f32 %v825, %v1701
      %v1703 = vsub.f32 1.0, %v1702
      %v1704 = vmul.f32 %v1701, %v1703
      %v1705 = vadd.f32 %v1701, %v1704
      %vm1706 = vweird.f32 %v825
      %vm1707 = vweird.f32 %v1701
      %vm1708 = vmor %vm1706, %vm1707
      %v1709 = vsel %vm1708, %v1701, %v1705
      %v1710 = vand.u32 2147483647, %v825
      %vm1711 = vcmp.eq.f32.partialorder %v1710, 8.507059e+37
      %v1712 = vand.u32 %v825, 2147483648
      %v1713 = vor.u32 1.1754944e-38, %v1712
      %v1714 = vsel %vm1711, %v1713, %v1709
      %v1715 = vmul.f32 1.0, %v1714
      %v1716 = vrcp.pop %v826
      %v1717 = vmul.f32 %v826, %v1716
      %v1718 = vsub.f32 1.0, %v1717
      %v1719 = vmul.f32 %v1716, %v1718
      %v1720 = vadd.f32 %v1716, %v1719
      %vm1721 = vweird.f32 %v826
      %vm1722 = vweird.f32 %v1716
      %vm1723 = vmor %vm1721, %vm1722
      %v1724 = vsel %vm1723, %v1716, %v1720
      %v1725 = vand.u32 2147483647, %v826
      %vm1726 = vcmp.eq.f32.partialorder %v1725, 8.507059e+37
      %v1727 = vand.u32 %v826, 2147483648
      %v1728 = vor.u32 1.1754944e-38, %v1727
      %v1729 = vsel %vm1726, %v1728, %v1724
      %v1730 = vmul.f32 1.0, %v1729
      %v1731 = vrcp.pop %v827
      %v1732 = vmul.f32 %v827, %v1731
      %v1733 = vsub.f32 1.0, %v1732
      %v1734 = vmul.f32 %v1731, %v1733
      %v1735 = vadd.f32 %v1731, %v1734
      %vm1736 = vweird.f32 %v827
      %vm1737 = vweird.f32 %v1731
      %vm1738 = vmor %vm1736, %vm1737
      %v1739 = vsel %vm1738, %v1731, %v1735
      %v1740 = vand.u32 2147483647, %v827
      %vm1741 = vcmp.eq.f32.partialorder %v1740, 8.507059e+37
      %v1742 = vand.u32 %v827, 2147483648
      %v1743 = vor.u32 1.1754944e-38, %v1742
      %v1744 = vsel %vm1741, %v1743, %v1739
      %v1745 = vmul.f32 1.0, %v1744
      %v1746 = vrcp.pop %v828
      %v1747 = vmul.f32 %v828, %v1746
      %v1748 = vsub.f32 1.0, %v1747
      %v1749 = vmul.f32 %v1746, %v1748
      %v1750 = vadd.f32 %v1746, %v1749
      %vm1751 = vweird.f32 %v828
      %vm1752 = vweird.f32 %v1746
      %vm1753 = vmor %vm1751, %vm1752
      %v1754 = vsel %vm1753, %v1746, %v1750
      %v1755 = vand.u32 2147483647, %v828
      %vm1756 = vcmp.eq.f32.partialorder %v1755, 8.507059e+37
      %v1757 = vand.u32 %v828, 2147483648
      %v1758 = vor.u32 1.1754944e-38, %v1757
      %v1759 = vsel %vm1756, %v1758, %v1754
      %v1760 = vmul.f32 1.0, %v1759
      %v1761 = vrcp.pop %v829
      %v1762 = vmul.f32 %v829, %v1761
      %v1763 = vsub.f32 1.0, %v1762
      %v1764 = vmul.f32 %v1761, %v1763
      %v1765 = vadd.f32 %v1761, %v1764
      %vm1766 = vweird.f32 %v829
      %vm1767 = vweird.f32 %v1761
      %vm1768 = vmor %vm1766, %vm1767
      %v1769 = vsel %vm1768, %v1761, %v1765
      %v1770 = vand.u32 2147483647, %v829
      %vm1771 = vcmp.eq.f32.partialorder %v1770, 8.507059e+37
      %v1772 = vand.u32 %v829, 2147483648
      %v1773 = vor.u32 1.1754944e-38, %v1772
      %v1774 = vsel %vm1771, %v1773, %v1769
      %v1775 = vmul.f32 1.0, %v1774
      %v1776 = vrcp.pop %v830
      %v1777 = vmul.f32 %v830, %v1776
      %v1778 = vsub.f32 1.0, %v1777
      %v1779 = vmul.f32 %v1776, %v1778
      %v1780 = vadd.f32 %v1776, %v1779
      %vm1781 = vweird.f32 %v830
      %vm1782 = vweird.f32 %v1776
      %vm1783 = vmor %vm1781, %vm1782
      %v1784 = vsel %vm1783, %v1776, %v1780
      %v1785 = vand.u32 2147483647, %v830
      %vm1786 = vcmp.eq.f32.partialorder %v1785, 8.507059e+37
      %v1787 = vand.u32 %v830, 2147483648
      %v1788 = vor.u32 1.1754944e-38, %v1787
      %v1789 = vsel %vm1786, %v1788, %v1784
      %v1790 = vmul.f32 1.0, %v1789
      %v1791 = vld [vmem:[%s3] sm:$0xff]
      %v1792 = vld [vmem:[%s3 + $0x8] sm:$0xff]
      %v1793 = vld [vmem:[%s3 + $0x10] sm:$0xff]
      %v1794 = vld [vmem:[%s3 + $0x18] sm:$0xff]
      %v1795 = vld [vmem:[%s3 + $0x20] sm:$0xff]
      %v1796 = vld [vmem:[%s3 + $0x28] sm:$0xff]
      %v1797 = vld [vmem:[%s3 + $0x30] sm:$0xff]
      %v1798 = vld [vmem:[%s3 + $0x38] sm:$0xff]
      %v1799 = vld [vmem:[%s3 + $0x40] sm:$0xff]
      %v1800 = vld [vmem:[%s3 + $0x48] sm:$0xff]
      %v1801 = vld [vmem:[%s3 + $0x50] sm:$0xff]
      %v1802 = vld [vmem:[%s3 + $0x58] sm:$0xff]
      %v1803 = vld [vmem:[%s3 + $0x60] sm:$0xff]
      %v1804 = vld [vmem:[%s3 + $0x68] sm:$0xff]
      %v1805 = vld [vmem:[%s3 + $0x70] sm:$0xff]
      %v1806 = vld [vmem:[%s3 + $0x78] sm:$0xff]
      %v1807 = vld [vmem:[%s4] sm:$0x1]
      %v1809 = vperm.slane %v1807, 0
      %1811 = vmatpush.msra.mxu0 %v1806
      %1812 = vmatpush.msra.mxu0 %v1805
      %1813 = vmatpush.msra.mxu0 %v1804
      %1814 = vmatpush.msra.mxu0 %v1803
      %1815 = vmatpush.msra.mxu0 %v1802
      %1816 = vmatpush.msra.mxu0 %v1801
      %1817 = vmatpush.msra.mxu0 %v1800
      %1818 = vmatpush.msra.mxu0 %v1799
      %1819 = vmatpush.msra.mxu0 %v1798
      %1820 = vmatpush.msra.mxu0 %v1797
      %1821 = vmatpush.msra.mxu0 %v1796
      %1822 = vmatpush.msra.mxu0 %v1795
      %1823 = vmatpush.msra.mxu0 %v1794
      %1824 = vmatpush.msra.mxu0 %v1793
      %1825 = vmatpush.msra.mxu0 %v1792
      %1826 = vmatpush.msra.mxu0 %v1791
      %1827 = vmatmul.f32.gmra.mxu0 %v845
      %v1828 = vpop.f32.mrf.mxu0
      %v1829 = vadd.f32 %v1809, %v1828
      %1830 = vmatmul.f32.gmra.mxu0 %v860
      %v1831 = vpop.f32.mrf.mxu0
      %v1832 = vadd.f32 %v1809, %v1831
      %1833 = vmatmul.f32.gmra.mxu0 %v875
      %v1834 = vpop.f32.mrf.mxu0
      %v1835 = vadd.f32 %v1809, %v1834
      %1836 = vmatmul.f32.gmra.mxu0 %v890
      %v1837 = vpop.f32.mrf.mxu0
      %v1838 = vadd.f32 %v1809, %v1837
      %1839 = vmatmul.f32.gmra.mxu0 %v905
      %v1840 = vpop.f32.mrf.mxu0
      %v1841 = vadd.f32 %v1809, %v1840
      %1842 = vmatmul.f32.gmra.mxu0 %v920
      %v1843 = vpop.f32.mrf.mxu0
      %v1844 = vadd.f32 %v1809, %v1843
      %1845 = vmatmul.f32.gmra.mxu0 %v935
      %v1846 = vpop.f32.mrf.mxu0
      %v1847 = vadd.f32 %v1809, %v1846
      %1848 = vmatmul.f32.gmra.mxu0 %v950
      %v1849 = vpop.f32.mrf.mxu0
      %v1850 = vadd.f32 %v1809, %v1849
      %1851 = vmatmul.f32.gmra.mxu0 %v965
      %v1852 = vpop.f32.mrf.mxu0
      %v1853 = vadd.f32 %v1809, %v1852
      %1854 = vmatmul.f32.gmra.mxu0 %v980
      %v1855 = vpop.f32.mrf.mxu0
      %v1856 = vadd.f32 %v1809, %v1855
      %1857 = vmatmul.f32.gmra.mxu0 %v995
      %v1858 = vpop.f32.mrf.mxu0
      %v1859 = vadd.f32 %v1809, %v1858
      %1860 = vmatmul.f32.gmra.mxu0 %v1010
      %v1861 = vpop.f32.mrf.mxu0
      %v1862 = vadd.f32 %v1809, %v1861
      %1863 = vmatmul.f32.gmra.mxu0 %v1025
      %v1864 = vpop.f32.mrf.mxu0
      %v1865 = vadd.f32 %v1809, %v1864
      %1866 = vmatmul.f32.gmra.mxu0 %v1040
      %v1867 = vpop.f32.mrf.mxu0
      %v1868 = vadd.f32 %v1809, %v1867
      %1869 = vmatmul.f32.gmra.mxu0 %v1055
      %v1870 = vpop.f32.mrf.mxu0
      %v1871 = vadd.f32 %v1809, %v1870
      %1872 = vmatmul.f32.gmra.mxu0 %v1070
      %v1873 = vpop.f32.mrf.mxu0
      %v1874 = vadd.f32 %v1809, %v1873
      %1875 = vmatmul.f32.gmra.mxu0 %v1085
      %v1876 = vpop.f32.mrf.mxu0
      %v1877 = vadd.f32 %v1809, %v1876
      %1878 = vmatmul.f32.gmra.mxu0 %v1100
      %v1879 = vpop.f32.mrf.mxu0
      %v1880 = vadd.f32 %v1809, %v1879
      %1881 = vmatmul.f32.gmra.mxu0 %v1115
      %v1882 = vpop.f32.mrf.mxu0
      %v1883 = vadd.f32 %v1809, %v1882
      %1884 = vmatmul.f32.gmra.mxu0 %v1130
      %v1885 = vpop.f32.mrf.mxu0
      %v1886 = vadd.f32 %v1809, %v1885
      %1887 = vmatmul.f32.gmra.mxu0 %v1145
      %v1888 = vpop.f32.mrf.mxu0
      %v1889 = vadd.f32 %v1809, %v1888
      %1890 = vmatmul.f32.gmra.mxu0 %v1160
      %v1891 = vpop.f32.mrf.mxu0
      %v1892 = vadd.f32 %v1809, %v1891
      %1893 = vmatmul.f32.gmra.mxu0 %v1175
      %v1894 = vpop.f32.mrf.mxu0
      %v1895 = vadd.f32 %v1809, %v1894
      %1896 = vmatmul.f32.gmra.mxu0 %v1190
      %v1897 = vpop.f32.mrf.mxu0
      %v1898 = vadd.f32 %v1809, %v1897
      %1899 = vmatmul.f32.gmra.mxu0 %v1205
      %v1900 = vpop.f32.mrf.mxu0
      %v1901 = vadd.f32 %v1809, %v1900
      %1902 = vmatmul.f32.gmra.mxu0 %v1220
      %v1903 = vpop.f32.mrf.mxu0
      %v1904 = vadd.f32 %v1809, %v1903
      %1905 = vmatmul.f32.gmra.mxu0 %v1235
      %v1906 = vpop.f32.mrf.mxu0
      %v1907 = vadd.f32 %v1809, %v1906
      %1908 = vmatmul.f32.gmra.mxu0 %v1250
      %v1909 = vpop.f32.mrf.mxu0
      %v1910 = vadd.f32 %v1809, %v1909
      %1911 = vmatmul.f32.gmra.mxu0 %v1265
      %v1912 = vpop.f32.mrf.mxu0
      %v1913 = vadd.f32 %v1809, %v1912
      %1914 = vmatmul.f32.gmra.mxu0 %v1280
      %v1915 = vpop.f32.mrf.mxu0
      %v1916 = vadd.f32 %v1809, %v1915
      %1917 = vmatmul.f32.gmra.mxu0 %v1295
      %v1918 = vpop.f32.mrf.mxu0
      %v1919 = vadd.f32 %v1809, %v1918
      %1920 = vmatmul.f32.gmra.mxu0 %v1310
      %v1921 = vpop.f32.mrf.mxu0
      %v1922 = vadd.f32 %v1809, %v1921
      %1923 = vmatmul.f32.gmra.mxu0 %v1325
      %v1924 = vpop.f32.mrf.mxu0
      %v1925 = vadd.f32 %v1809, %v1924
      %1926 = vmatmul.f32.gmra.mxu0 %v1340
      %v1927 = vpop.f32.mrf.mxu0
      %v1928 = vadd.f32 %v1809, %v1927
      %1929 = vmatmul.f32.gmra.mxu0 %v1355
      %v1930 = vpop.f32.mrf.mxu0
      %v1931 = vadd.f32 %v1809, %v1930
      %1932 = vmatmul.f32.gmra.mxu0 %v1370
      %v1933 = vpop.f32.mrf.mxu0
      %v1934 = vadd.f32 %v1809, %v1933
      %1935 = vmatmul.f32.gmra.mxu0 %v1385
      %v1936 = vpop.f32.mrf.mxu0
      %v1937 = vadd.f32 %v1809, %v1936
      %1938 = vmatmul.f32.gmra.mxu0 %v1400
      %v1939 = vpop.f32.mrf.mxu0
      %v1940 = vadd.f32 %v1809, %v1939
      %1941 = vmatmul.f32.gmra.mxu0 %v1415
      %v1942 = vpop.f32.mrf.mxu0
      %v1943 = vadd.f32 %v1809, %v1942
      %1944 = vmatmul.f32.gmra.mxu0 %v1430
      %v1945 = vpop.f32.mrf.mxu0
      %v1946 = vadd.f32 %v1809, %v1945
      %1947 = vmatmul.f32.gmra.mxu0 %v1445
      %v1948 = vpop.f32.mrf.mxu0
      %v1949 = vadd.f32 %v1809, %v1948
      %1950 = vmatmul.f32.gmra.mxu0 %v1460
      %v1951 = vpop.f32.mrf.mxu0
      %v1952 = vadd.f32 %v1809, %v1951
      %1953 = vmatmul.f32.gmra.mxu0 %v1475
      %v1954 = vpop.f32.mrf.mxu0
      %v1955 = vadd.f32 %v1809, %v1954
      %1956 = vmatmul.f32.gmra.mxu0 %v1490
      %v1957 = vpop.f32.mrf.mxu0
      %v1958 = vadd.f32 %v1809, %v1957
      %1959 = vmatmul.f32.gmra.mxu0 %v1505
      %v1960 = vpop.f32.mrf.mxu0
      %v1961 = vadd.f32 %v1809, %v1960
      %1962 = vmatmul.f32.gmra.mxu0 %v1520
      %v1963 = vpop.f32.mrf.mxu0
      %v1964 = vadd.f32 %v1809, %v1963
      %1965 = vmatmul.f32.gmra.mxu0 %v1535
      %v1966 = vpop.f32.mrf.mxu0
      %v1967 = vadd.f32 %v1809, %v1966
      %1968 = vmatmul.f32.gmra.mxu0 %v1550
      %v1969 = vpop.f32.mrf.mxu0
      %v1970 = vadd.f32 %v1809, %v1969
      %1971 = vmatmul.f32.gmra.mxu0 %v1565
      %v1972 = vpop.f32.mrf.mxu0
      %v1973 = vadd.f32 %v1809, %v1972
      %1974 = vmatmul.f32.gmra.mxu0 %v1580
      %v1975 = vpop.f32.mrf.mxu0
      %v1976 = vadd.f32 %v1809, %v1975
      %1977 = vmatmul.f32.gmra.mxu0 %v1595
      %v1978 = vpop.f32.mrf.mxu0
      %v1979 = vadd.f32 %v1809, %v1978
      %1980 = vmatmul.f32.gmra.mxu0 %v1610
      %v1981 = vpop.f32.mrf.mxu0
      %v1982 = vadd.f32 %v1809, %v1981
      %1983 = vmatmul.f32.gmra.mxu0 %v1625
      %v1984 = vpop.f32.mrf.mxu0
      %v1985 = vadd.f32 %v1809, %v1984
      %1986 = vmatmul.f32.gmra.mxu0 %v1640
      %v1987 = vpop.f32.mrf.mxu0
      %v1988 = vadd.f32 %v1809, %v1987
      %1989 = vmatmul.f32.gmra.mxu0 %v1655
      %v1990 = vpop.f32.mrf.mxu0
      %v1991 = vadd.f32 %v1809, %v1990
      %1992 = vmatmul.f32.gmra.mxu0 %v1670
      %v1993 = vpop.f32.mrf.mxu0
      %v1994 = vadd.f32 %v1809, %v1993
      %1995 = vmatmul.f32.gmra.mxu0 %v1685
      %v1996 = vpop.f32.mrf.mxu0
      %v1997 = vadd.f32 %v1809, %v1996
      %1998 = vmatmul.f32.gmra.mxu0 %v1700
      %v1999 = vpop.f32.mrf.mxu0
      %v2000 = vadd.f32 %v1809, %v1999
      %2001 = vmatmul.f32.gmra.mxu0 %v1715
      %v2002 = vpop.f32.mrf.mxu0
      %v2003 = vadd.f32 %v1809, %v2002
      %2004 = vmatmul.f32.gmra.mxu0 %v1730
      %v2005 = vpop.f32.mrf.mxu0
      %v2006 = vadd.f32 %v1809, %v2005
      %2007 = vmatmul.f32.gmra.mxu0 %v1745
      %v2008 = vpop.f32.mrf.mxu0
      %v2009 = vadd.f32 %v1809, %v2008
      %2010 = vmatmul.f32.gmra.mxu0 %v1760
      %v2011 = vpop.f32.mrf.mxu0
      %v2012 = vadd.f32 %v1809, %v2011
      %2013 = vmatmul.f32.gmra.mxu0 %v1775
      %v2014 = vpop.f32.mrf.mxu0
      %v2015 = vadd.f32 %v1809, %v2014
      %2016 = vmatmul.f32.gmra.mxu0 %v1790
      %v2017 = vpop.f32.mrf.mxu0
      %v2018 = vadd.f32 %v1809, %v2017
      %2019 = vdwg.mxu0
      %v2020 = vxor.u32 %v1829, 2147483648
      %v2021 = vxor.u32 %v1832, 2147483648
      %v2022 = vxor.u32 %v1835, 2147483648
      %v2023 = vxor.u32 %v1838, 2147483648
      %v2024 = vxor.u32 %v1841, 2147483648
      %v2025 = vxor.u32 %v1844, 2147483648
      %v2026 = vxor.u32 %v1847, 2147483648
      %v2027 = vxor.u32 %v1850, 2147483648
      %v2028 = vxor.u32 %v1853, 2147483648
      %v2029 = vxor.u32 %v1856, 2147483648
      %v2030 = vxor.u32 %v1859, 2147483648
      %v2031 = vxor.u32 %v1862, 2147483648
      %v2032 = vxor.u32 %v1865, 2147483648
      %v2033 = vxor.u32 %v1868, 2147483648
      %v2034 = vxor.u32 %v1871, 2147483648
      %v2035 = vxor.u32 %v1874, 2147483648
      %v2036 = vxor.u32 %v1877, 2147483648
      %v2037 = vxor.u32 %v1880, 2147483648
      %v2038 = vxor.u32 %v1883, 2147483648
      %v2039 = vxor.u32 %v1886, 2147483648
      %v2040 = vxor.u32 %v1889, 2147483648
      %v2041 = vxor.u32 %v1892, 2147483648
      %v2042 = vxor.u32 %v1895, 2147483648
      %v2043 = vxor.u32 %v1898, 2147483648
      %v2044 = vxor.u32 %v1901, 2147483648
      %v2045 = vxor.u32 %v1904, 2147483648
      %v2046 = vxor.u32 %v1907, 2147483648
      %v2047 = vxor.u32 %v1910, 2147483648
      %v2048 = vxor.u32 %v1913, 2147483648
      %v2049 = vxor.u32 %v1916, 2147483648
      %v2050 = vxor.u32 %v1919, 2147483648
      %v2051 = vxor.u32 %v1922, 2147483648
      %v2052 = vxor.u32 %v1925, 2147483648
      %v2053 = vxor.u32 %v1928, 2147483648
      %v2054 = vxor.u32 %v1931, 2147483648
      %v2055 = vxor.u32 %v1934, 2147483648
      %v2056 = vxor.u32 %v1937, 2147483648
      %v2057 = vxor.u32 %v1940, 2147483648
      %v2058 = vxor.u32 %v1943, 2147483648
      %v2059 = vxor.u32 %v1946, 2147483648
      %v2060 = vxor.u32 %v1949, 2147483648
      %v2061 = vxor.u32 %v1952, 2147483648
      %v2062 = vxor.u32 %v1955, 2147483648
      %v2063 = vxor.u32 %v1958, 2147483648
      %v2064 = vxor.u32 %v1961, 2147483648
      %v2065 = vxor.u32 %v1964, 2147483648
      %v2066 = vxor.u32 %v1967, 2147483648
      %v2067 = vxor.u32 %v1970, 2147483648
      %v2068 = vxor.u32 %v1973, 2147483648
      %v2069 = vxor.u32 %v1976, 2147483648
      %v2070 = vxor.u32 %v1979, 2147483648
      %v2071 = vxor.u32 %v1982, 2147483648
      %v2072 = vxor.u32 %v1985, 2147483648
      %v2073 = vxor.u32 %v1988, 2147483648
      %v2074 = vxor.u32 %v1991, 2147483648
      %v2075 = vxor.u32 %v1994, 2147483648
      %v2076 = vxor.u32 %v1997, 2147483648
      %v2077 = vxor.u32 %v2000, 2147483648
      %v2078 = vxor.u32 %v2003, 2147483648
      %v2079 = vxor.u32 %v2006, 2147483648
      %v2080 = vxor.u32 %v2009, 2147483648
      %v2081 = vxor.u32 %v2012, 2147483648
      %v2082 = vxor.u32 %v2015, 2147483648
      %v2083 = vxor.u32 %v2018, 2147483648
      %v2084 = vmul.f32 %v2020, 1.442695
      %v2085 = vpow.pop %v2084
      %v2086 = vmul.f32 %v2021, 1.442695
      %v2087 = vpow.pop %v2086
      %v2088 = vmul.f32 %v2022, 1.442695
      %v2089 = vpow.pop %v2088
      %v2090 = vmul.f32 %v2023, 1.442695
      %v2091 = vpow.pop %v2090
      %v2092 = vmul.f32 %v2024, 1.442695
      %v2093 = vpow.pop %v2092
      %v2094 = vmul.f32 %v2025, 1.442695
      %v2095 = vpow.pop %v2094
      %v2096 = vmul.f32 %v2026, 1.442695
      %v2097 = vpow.pop %v2096
      %v2098 = vmul.f32 %v2027, 1.442695
      %v2099 = vpow.pop %v2098
      %v2100 = vmul.f32 %v2028, 1.442695
      %v2101 = vpow.pop %v2100
      %v2102 = vmul.f32 %v2029, 1.442695
      %v2103 = vpow.pop %v2102
      %v2104 = vmul.f32 %v2030, 1.442695
      %v2105 = vpow.pop %v2104
      %v2106 = vmul.f32 %v2031, 1.442695
      %v2107 = vpow.pop %v2106
      %v2108 = vmul.f32 %v2032, 1.442695
      %v2109 = vpow.pop %v2108
      %v2110 = vmul.f32 %v2033, 1.442695
      %v2111 = vpow.pop %v2110
      %v2112 = vmul.f32 %v2034, 1.442695
      %v2113 = vpow.pop %v2112
      %v2114 = vmul.f32 %v2035, 1.442695
      %v2115 = vpow.pop %v2114
      %v2116 = vmul.f32 %v2036, 1.442695
      %v2117 = vpow.pop %v2116
      %v2118 = vmul.f32 %v2037, 1.442695
      %v2119 = vpow.pop %v2118
      %v2120 = vmul.f32 %v2038, 1.442695
      %v2121 = vpow.pop %v2120
      %v2122 = vmul.f32 %v2039, 1.442695
      %v2123 = vpow.pop %v2122
      %v2124 = vmul.f32 %v2040, 1.442695
      %v2125 = vpow.pop %v2124
      %v2126 = vmul.f32 %v2041, 1.442695
      %v2127 = vpow.pop %v2126
      %v2128 = vmul.f32 %v2042, 1.442695
      %v2129 = vpow.pop %v2128
      %v2130 = vmul.f32 %v2043, 1.442695
      %v2131 = vpow.pop %v2130
      %v2132 = vmul.f32 %v2044, 1.442695
      %v2133 = vpow.pop %v2132
      %v2134 = vmul.f32 %v2045, 1.442695
      %v2135 = vpow.pop %v2134
      %v2136 = vmul.f32 %v2046, 1.442695
      %v2137 = vpow.pop %v2136
      %v2138 = vmul.f32 %v2047, 1.442695
      %v2139 = vpow.pop %v2138
      %v2140 = vmul.f32 %v2048, 1.442695
      %v2141 = vpow.pop %v2140
      %v2142 = vmul.f32 %v2049, 1.442695
      %v2143 = vpow.pop %v2142
      %v2144 = vmul.f32 %v2050, 1.442695
      %v2145 = vpow.pop %v2144
      %v2146 = vmul.f32 %v2051, 1.442695
      %v2147 = vpow.pop %v2146
      %v2148 = vmul.f32 %v2052, 1.442695
      %v2149 = vpow.pop %v2148
      %v2150 = vmul.f32 %v2053, 1.442695
      %v2151 = vpow.pop %v2150
      %v2152 = vmul.f32 %v2054, 1.442695
      %v2153 = vpow.pop %v2152
      %v2154 = vmul.f32 %v2055, 1.442695
      %v2155 = vpow.pop %v2154
      %v2156 = vmul.f32 %v2056, 1.442695
      %v2157 = vpow.pop %v2156
      %v2158 = vmul.f32 %v2057, 1.442695
      %v2159 = vpow.pop %v2158
      %v2160 = vmul.f32 %v2058, 1.442695
      %v2161 = vpow.pop %v2160
      %v2162 = vmul.f32 %v2059, 1.442695
      %v2163 = vpow.pop %v2162
      %v2164 = vmul.f32 %v2060, 1.442695
      %v2165 = vpow.pop %v2164
      %v2166 = vmul.f32 %v2061, 1.442695
      %v2167 = vpow.pop %v2166
      %v2168 = vmul.f32 %v2062, 1.442695
      %v2169 = vpow.pop %v2168
      %v2170 = vmul.f32 %v2063, 1.442695
      %v2171 = vpow.pop %v2170
      %v2172 = vmul.f32 %v2064, 1.442695
      %v2173 = vpow.pop %v2172
      %v2174 = vmul.f32 %v2065, 1.442695
      %v2175 = vpow.pop %v2174
      %v2176 = vmul.f32 %v2066, 1.442695
      %v2177 = vpow.pop %v2176
      %v2178 = vmul.f32 %v2067, 1.442695
      %v2179 = vpow.pop %v2178
      %v2180 = vmul.f32 %v2068, 1.442695
      %v2181 = vpow.pop %v2180
      %v2182 = vmul.f32 %v2069, 1.442695
      %v2183 = vpow.pop %v2182
      %v2184 = vmul.f32 %v2070, 1.442695
      %v2185 = vpow.pop %v2184
      %v2186 = vmul.f32 %v2071, 1.442695
      %v2187 = vpow.pop %v2186
      %v2188 = vmul.f32 %v2072, 1.442695
      %v2189 = vpow.pop %v2188
      %v2190 = vmul.f32 %v2073, 1.442695
      %v2191 = vpow.pop %v2190
      %v2192 = vmul.f32 %v2074, 1.442695
      %v2193 = vpow.pop %v2192
      %v2194 = vmul.f32 %v2075, 1.442695
      %v2195 = vpow.pop %v2194
      %v2196 = vmul.f32 %v2076, 1.442695
      %v2197 = vpow.pop %v2196
      %v2198 = vmul.f32 %v2077, 1.442695
      %v2199 = vpow.pop %v2198
      %v2200 = vmul.f32 %v2078, 1.442695
      %v2201 = vpow.pop %v2200
      %v2202 = vmul.f32 %v2079, 1.442695
      %v2203 = vpow.pop %v2202
      %v2204 = vmul.f32 %v2080, 1.442695
      %v2205 = vpow.pop %v2204
      %v2206 = vmul.f32 %v2081, 1.442695
      %v2207 = vpow.pop %v2206
      %v2208 = vmul.f32 %v2082, 1.442695
      %v2209 = vpow.pop %v2208
      %v2210 = vmul.f32 %v2083, 1.442695
      %v2211 = vpow.pop %v2210
      %v2212 = vadd.f32 %v2085, 1.0
      %v2213 = vadd.f32 %v2087, 1.0
      %v2214 = vadd.f32 %v2089, 1.0
      %v2215 = vadd.f32 %v2091, 1.0
      %v2216 = vadd.f32 %v2093, 1.0
      %v2217 = vadd.f32 %v2095, 1.0
      %v2218 = vadd.f32 %v2097, 1.0
      %v2219 = vadd.f32 %v2099, 1.0
      %v2220 = vadd.f32 %v2101, 1.0
      %v2221 = vadd.f32 %v2103, 1.0
      %v2222 = vadd.f32 %v2105, 1.0
      %v2223 = vadd.f32 %v2107, 1.0
      %v2224 = vadd.f32 %v2109, 1.0
      %v2225 = vadd.f32 %v2111, 1.0
      %v2226 = vadd.f32 %v2113, 1.0
      %v2227 = vadd.f32 %v2115, 1.0
      %v2228 = vadd.f32 %v2117, 1.0
      %v2229 = vadd.f32 %v2119, 1.0
      %v2230 = vadd.f32 %v2121, 1.0
      %v2231 = vadd.f32 %v2123, 1.0
      %v2232 = vadd.f32 %v2125, 1.0
      %v2233 = vadd.f32 %v2127, 1.0
      %v2234 = vadd.f32 %v2129, 1.0
      %v2235 = vadd.f32 %v2131, 1.0
      %v2236 = vadd.f32 %v2133, 1.0
      %v2237 = vadd.f32 %v2135, 1.0
      %v2238 = vadd.f32 %v2137, 1.0
      %v2239 = vadd.f32 %v2139, 1.0
      %v2240 = vadd.f32 %v2141, 1.0
      %v2241 = vadd.f32 %v2143, 1.0
      %v2242 = vadd.f32 %v2145, 1.0
      %v2243 = vadd.f32 %v2147, 1.0
      %v2244 = vadd.f32 %v2149, 1.0
      %v2245 = vadd.f32 %v2151, 1.0
      %v2246 = vadd.f32 %v2153, 1.0
      %v2247 = vadd.f32 %v2155, 1.0
      %v2248 = vadd.f32 %v2157, 1.0
      %v2249 = vadd.f32 %v2159, 1.0
      %v2250 = vadd.f32 %v2161, 1.0
      %v2251 = vadd.f32 %v2163, 1.0
      %v2252 = vadd.f32 %v2165, 1.0
      %v2253 = vadd.f32 %v2167, 1.0
      %v2254 = vadd.f32 %v2169, 1.0
      %v2255 = vadd.f32 %v2171, 1.0
      %v2256 = vadd.f32 %v2173, 1.0
      %v2257 = vadd.f32 %v2175, 1.0
      %v2258 = vadd.f32 %v2177, 1.0
      %v2259 = vadd.f32 %v2179, 1.0
      %v2260 = vadd.f32 %v2181, 1.0
      %v2261 = vadd.f32 %v2183, 1.0
      %v2262 = vadd.f32 %v2185, 1.0
      %v2263 = vadd.f32 %v2187, 1.0
      %v2264 = vadd.f32 %v2189, 1.0
      %v2265 = vadd.f32 %v2191, 1.0
      %v2266 = vadd.f32 %v2193, 1.0
      %v2267 = vadd.f32 %v2195, 1.0
      %v2268 = vadd.f32 %v2197, 1.0
      %v2269 = vadd.f32 %v2199, 1.0
      %v2270 = vadd.f32 %v2201, 1.0
      %v2271 = vadd.f32 %v2203, 1.0
      %v2272 = vadd.f32 %v2205, 1.0
      %v2273 = vadd.f32 %v2207, 1.0
      %v2274 = vadd.f32 %v2209, 1.0
      %v2275 = vadd.f32 %v2211, 1.0
      %v2276 = vrcp.pop %v2212
      %v2277 = vmul.f32 %v2212, %v2276
      %v2278 = vsub.f32 1.0, %v2277
      %v2279 = vmul.f32 %v2276, %v2278
      %v2280 = vadd.f32 %v2276, %v2279
      %vm2281 = vweird.f32 %v2212
      %vm2282 = vweird.f32 %v2276
      %vm2283 = vmor %vm2281, %vm2282
      %v2284 = vsel %vm2283, %v2276, %v2280
      %v2285 = vand.u32 2147483647, %v2212
      %vm2286 = vcmp.eq.f32.partialorder %v2285, 8.507059e+37
      %v2287 = vand.u32 %v2212, 2147483648
      %v2288 = vor.u32 1.1754944e-38, %v2287
      %v2289 = vsel %vm2286, %v2288, %v2284
      %v2290 = vmul.f32 1.0, %v2289
      %v2291 = vrcp.pop %v2213
      %v2292 = vmul.f32 %v2213, %v2291
      %v2293 = vsub.f32 1.0, %v2292
      %v2294 = vmul.f32 %v2291, %v2293
      %v2295 = vadd.f32 %v2291, %v2294
      %vm2296 = vweird.f32 %v2213
      %vm2297 = vweird.f32 %v2291
      %vm2298 = vmor %vm2296, %vm2297
      %v2299 = vsel %vm2298, %v2291, %v2295
      %v2300 = vand.u32 2147483647, %v2213
      %vm2301 = vcmp.eq.f32.partialorder %v2300, 8.507059e+37
      %v2302 = vand.u32 %v2213, 2147483648
      %v2303 = vor.u32 1.1754944e-38, %v2302
      %v2304 = vsel %vm2301, %v2303, %v2299
      %v2305 = vmul.f32 1.0, %v2304
      %v2306 = vrcp.pop %v2214
      %v2307 = vmul.f32 %v2214, %v2306
      %v2308 = vsub.f32 1.0, %v2307
      %v2309 = vmul.f32 %v2306, %v2308
      %v2310 = vadd.f32 %v2306, %v2309
      %vm2311 = vweird.f32 %v2214
      %vm2312 = vweird.f32 %v2306
      %vm2313 = vmor %vm2311, %vm2312
      %v2314 = vsel %vm2313, %v2306, %v2310
      %v2315 = vand.u32 2147483647, %v2214
      %vm2316 = vcmp.eq.f32.partialorder %v2315, 8.507059e+37
      %v2317 = vand.u32 %v2214, 2147483648
      %v2318 = vor.u32 1.1754944e-38, %v2317
      %v2319 = vsel %vm2316, %v2318, %v2314
      %v2320 = vmul.f32 1.0, %v2319
      %v2321 = vrcp.pop %v2215
      %v2322 = vmul.f32 %v2215, %v2321
      %v2323 = vsub.f32 1.0, %v2322
      %v2324 = vmul.f32 %v2321, %v2323
      %v2325 = vadd.f32 %v2321, %v2324
      %vm2326 = vweird.f32 %v2215
      %vm2327 = vweird.f32 %v2321
      %vm2328 = vmor %vm2326, %vm2327
      %v2329 = vsel %vm2328, %v2321, %v2325
      %v2330 = vand.u32 2147483647, %v2215
      %vm2331 = vcmp.eq.f32.partialorder %v2330, 8.507059e+37
      %v2332 = vand.u32 %v2215, 2147483648
      %v2333 = vor.u32 1.1754944e-38, %v2332
      %v2334 = vsel %vm2331, %v2333, %v2329
      %v2335 = vmul.f32 1.0, %v2334
      %v2336 = vrcp.pop %v2216
      %v2337 = vmul.f32 %v2216, %v2336
      %v2338 = vsub.f32 1.0, %v2337
      %v2339 = vmul.f32 %v2336, %v2338
      %v2340 = vadd.f32 %v2336, %v2339
      %vm2341 = vweird.f32 %v2216
      %vm2342 = vweird.f32 %v2336
      %vm2343 = vmor %vm2341, %vm2342
      %v2344 = vsel %vm2343, %v2336, %v2340
      %v2345 = vand.u32 2147483647, %v2216
      %vm2346 = vcmp.eq.f32.partialorder %v2345, 8.507059e+37
      %v2347 = vand.u32 %v2216, 2147483648
      %v2348 = vor.u32 1.1754944e-38, %v2347
      %v2349 = vsel %vm2346, %v2348, %v2344
      %v2350 = vmul.f32 1.0, %v2349
      %v2351 = vrcp.pop %v2217
      %v2352 = vmul.f32 %v2217, %v2351
      %v2353 = vsub.f32 1.0, %v2352
      %v2354 = vmul.f32 %v2351, %v2353
      %v2355 = vadd.f32 %v2351, %v2354
      %vm2356 = vweird.f32 %v2217
      %vm2357 = vweird.f32 %v2351
      %vm2358 = vmor %vm2356, %vm2357
      %v2359 = vsel %vm2358, %v2351, %v2355
      %v2360 = vand.u32 2147483647, %v2217
      %vm2361 = vcmp.eq.f32.partialorder %v2360, 8.507059e+37
      %v2362 = vand.u32 %v2217, 2147483648
      %v2363 = vor.u32 1.1754944e-38, %v2362
      %v2364 = vsel %vm2361, %v2363, %v2359
      %v2365 = vmul.f32 1.0, %v2364
      %v2366 = vrcp.pop %v2218
      %v2367 = vmul.f32 %v2218, %v2366
      %v2368 = vsub.f32 1.0, %v2367
      %v2369 = vmul.f32 %v2366, %v2368
      %v2370 = vadd.f32 %v2366, %v2369
      %vm2371 = vweird.f32 %v2218
      %vm2372 = vweird.f32 %v2366
      %vm2373 = vmor %vm2371, %vm2372
      %v2374 = vsel %vm2373, %v2366, %v2370
      %v2375 = vand.u32 2147483647, %v2218
      %vm2376 = vcmp.eq.f32.partialorder %v2375, 8.507059e+37
      %v2377 = vand.u32 %v2218, 2147483648
      %v2378 = vor.u32 1.1754944e-38, %v2377
      %v2379 = vsel %vm2376, %v2378, %v2374
      %v2380 = vmul.f32 1.0, %v2379
      %v2381 = vrcp.pop %v2219
      %v2382 = vmul.f32 %v2219, %v2381
      %v2383 = vsub.f32 1.0, %v2382
      %v2384 = vmul.f32 %v2381, %v2383
      %v2385 = vadd.f32 %v2381, %v2384
      %vm2386 = vweird.f32 %v2219
      %vm2387 = vweird.f32 %v2381
      %vm2388 = vmor %vm2386, %vm2387
      %v2389 = vsel %vm2388, %v2381, %v2385
      %v2390 = vand.u32 2147483647, %v2219
      %vm2391 = vcmp.eq.f32.partialorder %v2390, 8.507059e+37
      %v2392 = vand.u32 %v2219, 2147483648
      %v2393 = vor.u32 1.1754944e-38, %v2392
      %v2394 = vsel %vm2391, %v2393, %v2389
      %v2395 = vmul.f32 1.0, %v2394
      %v2396 = vrcp.pop %v2220
      %v2397 = vmul.f32 %v2220, %v2396
      %v2398 = vsub.f32 1.0, %v2397
      %v2399 = vmul.f32 %v2396, %v2398
      %v2400 = vadd.f32 %v2396, %v2399
      %vm2401 = vweird.f32 %v2220
      %vm2402 = vweird.f32 %v2396
      %vm2403 = vmor %vm2401, %vm2402
      %v2404 = vsel %vm2403, %v2396, %v2400
      %v2405 = vand.u32 2147483647, %v2220
      %vm2406 = vcmp.eq.f32.partialorder %v2405, 8.507059e+37
      %v2407 = vand.u32 %v2220, 2147483648
      %v2408 = vor.u32 1.1754944e-38, %v2407
      %v2409 = vsel %vm2406, %v2408, %v2404
      %v2410 = vmul.f32 1.0, %v2409
      %v2411 = vrcp.pop %v2221
      %v2412 = vmul.f32 %v2221, %v2411
      %v2413 = vsub.f32 1.0, %v2412
      %v2414 = vmul.f32 %v2411, %v2413
      %v2415 = vadd.f32 %v2411, %v2414
      %vm2416 = vweird.f32 %v2221
      %vm2417 = vweird.f32 %v2411
      %vm2418 = vmor %vm2416, %vm2417
      %v2419 = vsel %vm2418, %v2411, %v2415
      %v2420 = vand.u32 2147483647, %v2221
      %vm2421 = vcmp.eq.f32.partialorder %v2420, 8.507059e+37
      %v2422 = vand.u32 %v2221, 2147483648
      %v2423 = vor.u32 1.1754944e-38, %v2422
      %v2424 = vsel %vm2421, %v2423, %v2419
      %v2425 = vmul.f32 1.0, %v2424
      %v2426 = vrcp.pop %v2222
      %v2427 = vmul.f32 %v2222, %v2426
      %v2428 = vsub.f32 1.0, %v2427
      %v2429 = vmul.f32 %v2426, %v2428
      %v2430 = vadd.f32 %v2426, %v2429
      %vm2431 = vweird.f32 %v2222
      %vm2432 = vweird.f32 %v2426
      %vm2433 = vmor %vm2431, %vm2432
      %v2434 = vsel %vm2433, %v2426, %v2430
      %v2435 = vand.u32 2147483647, %v2222
      %vm2436 = vcmp.eq.f32.partialorder %v2435, 8.507059e+37
      %v2437 = vand.u32 %v2222, 2147483648
      %v2438 = vor.u32 1.1754944e-38, %v2437
      %v2439 = vsel %vm2436, %v2438, %v2434
      %v2440 = vmul.f32 1.0, %v2439
      %v2441 = vrcp.pop %v2223
      %v2442 = vmul.f32 %v2223, %v2441
      %v2443 = vsub.f32 1.0, %v2442
      %v2444 = vmul.f32 %v2441, %v2443
      %v2445 = vadd.f32 %v2441, %v2444
      %vm2446 = vweird.f32 %v2223
      %vm2447 = vweird.f32 %v2441
      %vm2448 = vmor %vm2446, %vm2447
      %v2449 = vsel %vm2448, %v2441, %v2445
      %v2450 = vand.u32 2147483647, %v2223
      %vm2451 = vcmp.eq.f32.partialorder %v2450, 8.507059e+37
      %v2452 = vand.u32 %v2223, 2147483648
      %v2453 = vor.u32 1.1754944e-38, %v2452
      %v2454 = vsel %vm2451, %v2453, %v2449
      %v2455 = vmul.f32 1.0, %v2454
      %v2456 = vrcp.pop %v2224
      %v2457 = vmul.f32 %v2224, %v2456
      %v2458 = vsub.f32 1.0, %v2457
      %v2459 = vmul.f32 %v2456, %v2458
      %v2460 = vadd.f32 %v2456, %v2459
      %vm2461 = vweird.f32 %v2224
      %vm2462 = vweird.f32 %v2456
      %vm2463 = vmor %vm2461, %vm2462
      %v2464 = vsel %vm2463, %v2456, %v2460
      %v2465 = vand.u32 2147483647, %v2224
      %vm2466 = vcmp.eq.f32.partialorder %v2465, 8.507059e+37
      %v2467 = vand.u32 %v2224, 2147483648
      %v2468 = vor.u32 1.1754944e-38, %v2467
      %v2469 = vsel %vm2466, %v2468, %v2464
      %v2470 = vmul.f32 1.0, %v2469
      %v2471 = vrcp.pop %v2225
      %v2472 = vmul.f32 %v2225, %v2471
      %v2473 = vsub.f32 1.0, %v2472
      %v2474 = vmul.f32 %v2471, %v2473
      %v2475 = vadd.f32 %v2471, %v2474
      %vm2476 = vweird.f32 %v2225
      %vm2477 = vweird.f32 %v2471
      %vm2478 = vmor %vm2476, %vm2477
      %v2479 = vsel %vm2478, %v2471, %v2475
      %v2480 = vand.u32 2147483647, %v2225
      %vm2481 = vcmp.eq.f32.partialorder %v2480, 8.507059e+37
      %v2482 = vand.u32 %v2225, 2147483648
      %v2483 = vor.u32 1.1754944e-38, %v2482
      %v2484 = vsel %vm2481, %v2483, %v2479
      %v2485 = vmul.f32 1.0, %v2484
      %v2486 = vrcp.pop %v2226
      %v2487 = vmul.f32 %v2226, %v2486
      %v2488 = vsub.f32 1.0, %v2487
      %v2489 = vmul.f32 %v2486, %v2488
      %v2490 = vadd.f32 %v2486, %v2489
      %vm2491 = vweird.f32 %v2226
      %vm2492 = vweird.f32 %v2486
      %vm2493 = vmor %vm2491, %vm2492
      %v2494 = vsel %vm2493, %v2486, %v2490
      %v2495 = vand.u32 2147483647, %v2226
      %vm2496 = vcmp.eq.f32.partialorder %v2495, 8.507059e+37
      %v2497 = vand.u32 %v2226, 2147483648
      %v2498 = vor.u32 1.1754944e-38, %v2497
      %v2499 = vsel %vm2496, %v2498, %v2494
      %v2500 = vmul.f32 1.0, %v2499
      %v2501 = vrcp.pop %v2227
      %v2502 = vmul.f32 %v2227, %v2501
      %v2503 = vsub.f32 1.0, %v2502
      %v2504 = vmul.f32 %v2501, %v2503
      %v2505 = vadd.f32 %v2501, %v2504
      %vm2506 = vweird.f32 %v2227
      %vm2507 = vweird.f32 %v2501
      %vm2508 = vmor %vm2506, %vm2507
      %v2509 = vsel %vm2508, %v2501, %v2505
      %v2510 = vand.u32 2147483647, %v2227
      %vm2511 = vcmp.eq.f32.partialorder %v2510, 8.507059e+37
      %v2512 = vand.u32 %v2227, 2147483648
      %v2513 = vor.u32 1.1754944e-38, %v2512
      %v2514 = vsel %vm2511, %v2513, %v2509
      %v2515 = vmul.f32 1.0, %v2514
      %v2516 = vrcp.pop %v2228
      %v2517 = vmul.f32 %v2228, %v2516
      %v2518 = vsub.f32 1.0, %v2517
      %v2519 = vmul.f32 %v2516, %v2518
      %v2520 = vadd.f32 %v2516, %v2519
      %vm2521 = vweird.f32 %v2228
      %vm2522 = vweird.f32 %v2516
      %vm2523 = vmor %vm2521, %vm2522
      %v2524 = vsel %vm2523, %v2516, %v2520
      %v2525 = vand.u32 2147483647, %v2228
      %vm2526 = vcmp.eq.f32.partialorder %v2525, 8.507059e+37
      %v2527 = vand.u32 %v2228, 2147483648
      %v2528 = vor.u32 1.1754944e-38, %v2527
      %v2529 = vsel %vm2526, %v2528, %v2524
      %v2530 = vmul.f32 1.0, %v2529
      %v2531 = vrcp.pop %v2229
      %v2532 = vmul.f32 %v2229, %v2531
      %v2533 = vsub.f32 1.0, %v2532
      %v2534 = vmul.f32 %v2531, %v2533
      %v2535 = vadd.f32 %v2531, %v2534
      %vm2536 = vweird.f32 %v2229
      %vm2537 = vweird.f32 %v2531
      %vm2538 = vmor %vm2536, %vm2537
      %v2539 = vsel %vm2538, %v2531, %v2535
      %v2540 = vand.u32 2147483647, %v2229
      %vm2541 = vcmp.eq.f32.partialorder %v2540, 8.507059e+37
      %v2542 = vand.u32 %v2229, 2147483648
      %v2543 = vor.u32 1.1754944e-38, %v2542
      %v2544 = vsel %vm2541, %v2543, %v2539
      %v2545 = vmul.f32 1.0, %v2544
      %v2546 = vrcp.pop %v2230
      %v2547 = vmul.f32 %v2230, %v2546
      %v2548 = vsub.f32 1.0, %v2547
      %v2549 = vmul.f32 %v2546, %v2548
      %v2550 = vadd.f32 %v2546, %v2549
      %vm2551 = vweird.f32 %v2230
      %vm2552 = vweird.f32 %v2546
      %vm2553 = vmor %vm2551, %vm2552
      %v2554 = vsel %vm2553, %v2546, %v2550
      %v2555 = vand.u32 2147483647, %v2230
      %vm2556 = vcmp.eq.f32.partialorder %v2555, 8.507059e+37
      %v2557 = vand.u32 %v2230, 2147483648
      %v2558 = vor.u32 1.1754944e-38, %v2557
      %v2559 = vsel %vm2556, %v2558, %v2554
      %v2560 = vmul.f32 1.0, %v2559
      %v2561 = vrcp.pop %v2231
      %v2562 = vmul.f32 %v2231, %v2561
      %v2563 = vsub.f32 1.0, %v2562
      %v2564 = vmul.f32 %v2561, %v2563
      %v2565 = vadd.f32 %v2561, %v2564
      %vm2566 = vweird.f32 %v2231
      %vm2567 = vweird.f32 %v2561
      %vm2568 = vmor %vm2566, %vm2567
      %v2569 = vsel %vm2568, %v2561, %v2565
      %v2570 = vand.u32 2147483647, %v2231
      %vm2571 = vcmp.eq.f32.partialorder %v2570, 8.507059e+37
      %v2572 = vand.u32 %v2231, 2147483648
      %v2573 = vor.u32 1.1754944e-38, %v2572
      %v2574 = vsel %vm2571, %v2573, %v2569
      %v2575 = vmul.f32 1.0, %v2574
      %v2576 = vrcp.pop %v2232
      %v2577 = vmul.f32 %v2232, %v2576
      %v2578 = vsub.f32 1.0, %v2577
      %v2579 = vmul.f32 %v2576, %v2578
      %v2580 = vadd.f32 %v2576, %v2579
      %vm2581 = vweird.f32 %v2232
      %vm2582 = vweird.f32 %v2576
      %vm2583 = vmor %vm2581, %vm2582
      %v2584 = vsel %vm2583, %v2576, %v2580
      %v2585 = vand.u32 2147483647, %v2232
      %vm2586 = vcmp.eq.f32.partialorder %v2585, 8.507059e+37
      %v2587 = vand.u32 %v2232, 2147483648
      %v2588 = vor.u32 1.1754944e-38, %v2587
      %v2589 = vsel %vm2586, %v2588, %v2584
      %v2590 = vmul.f32 1.0, %v2589
      %v2591 = vrcp.pop %v2233
      %v2592 = vmul.f32 %v2233, %v2591
      %v2593 = vsub.f32 1.0, %v2592
      %v2594 = vmul.f32 %v2591, %v2593
      %v2595 = vadd.f32 %v2591, %v2594
      %vm2596 = vweird.f32 %v2233
      %vm2597 = vweird.f32 %v2591
      %vm2598 = vmor %vm2596, %vm2597
      %v2599 = vsel %vm2598, %v2591, %v2595
      %v2600 = vand.u32 2147483647, %v2233
      %vm2601 = vcmp.eq.f32.partialorder %v2600, 8.507059e+37
      %v2602 = vand.u32 %v2233, 2147483648
      %v2603 = vor.u32 1.1754944e-38, %v2602
      %v2604 = vsel %vm2601, %v2603, %v2599
      %v2605 = vmul.f32 1.0, %v2604
      %v2606 = vrcp.pop %v2234
      %v2607 = vmul.f32 %v2234, %v2606
      %v2608 = vsub.f32 1.0, %v2607
      %v2609 = vmul.f32 %v2606, %v2608
      %v2610 = vadd.f32 %v2606, %v2609
      %vm2611 = vweird.f32 %v2234
      %vm2612 = vweird.f32 %v2606
      %vm2613 = vmor %vm2611, %vm2612
      %v2614 = vsel %vm2613, %v2606, %v2610
      %v2615 = vand.u32 2147483647, %v2234
      %vm2616 = vcmp.eq.f32.partialorder %v2615, 8.507059e+37
      %v2617 = vand.u32 %v2234, 2147483648
      %v2618 = vor.u32 1.1754944e-38, %v2617
      %v2619 = vsel %vm2616, %v2618, %v2614
      %v2620 = vmul.f32 1.0, %v2619
      %v2621 = vrcp.pop %v2235
      %v2622 = vmul.f32 %v2235, %v2621
      %v2623 = vsub.f32 1.0, %v2622
      %v2624 = vmul.f32 %v2621, %v2623
      %v2625 = vadd.f32 %v2621, %v2624
      %vm2626 = vweird.f32 %v2235
      %vm2627 = vweird.f32 %v2621
      %vm2628 = vmor %vm2626, %vm2627
      %v2629 = vsel %vm2628, %v2621, %v2625
      %v2630 = vand.u32 2147483647, %v2235
      %vm2631 = vcmp.eq.f32.partialorder %v2630, 8.507059e+37
      %v2632 = vand.u32 %v2235, 2147483648
      %v2633 = vor.u32 1.1754944e-38, %v2632
      %v2634 = vsel %vm2631, %v2633, %v2629
      %v2635 = vmul.f32 1.0, %v2634
      %v2636 = vrcp.pop %v2236
      %v2637 = vmul.f32 %v2236, %v2636
      %v2638 = vsub.f32 1.0, %v2637
      %v2639 = vmul.f32 %v2636, %v2638
      %v2640 = vadd.f32 %v2636, %v2639
      %vm2641 = vweird.f32 %v2236
      %vm2642 = vweird.f32 %v2636
      %vm2643 = vmor %vm2641, %vm2642
      %v2644 = vsel %vm2643, %v2636, %v2640
      %v2645 = vand.u32 2147483647, %v2236
      %vm2646 = vcmp.eq.f32.partialorder %v2645, 8.507059e+37
      %v2647 = vand.u32 %v2236, 2147483648
      %v2648 = vor.u32 1.1754944e-38, %v2647
      %v2649 = vsel %vm2646, %v2648, %v2644
      %v2650 = vmul.f32 1.0, %v2649
      %v2651 = vrcp.pop %v2237
      %v2652 = vmul.f32 %v2237, %v2651
      %v2653 = vsub.f32 1.0, %v2652
      %v2654 = vmul.f32 %v2651, %v2653
      %v2655 = vadd.f32 %v2651, %v2654
      %vm2656 = vweird.f32 %v2237
      %vm2657 = vweird.f32 %v2651
      %vm2658 = vmor %vm2656, %vm2657
      %v2659 = vsel %vm2658, %v2651, %v2655
      %v2660 = vand.u32 2147483647, %v2237
      %vm2661 = vcmp.eq.f32.partialorder %v2660, 8.507059e+37
      %v2662 = vand.u32 %v2237, 2147483648
      %v2663 = vor.u32 1.1754944e-38, %v2662
      %v2664 = vsel %vm2661, %v2663, %v2659
      %v2665 = vmul.f32 1.0, %v2664
      %v2666 = vrcp.pop %v2238
      %v2667 = vmul.f32 %v2238, %v2666
      %v2668 = vsub.f32 1.0, %v2667
      %v2669 = vmul.f32 %v2666, %v2668
      %v2670 = vadd.f32 %v2666, %v2669
      %vm2671 = vweird.f32 %v2238
      %vm2672 = vweird.f32 %v2666
      %vm2673 = vmor %vm2671, %vm2672
      %v2674 = vsel %vm2673, %v2666, %v2670
      %v2675 = vand.u32 2147483647, %v2238
      %vm2676 = vcmp.eq.f32.partialorder %v2675, 8.507059e+37
      %v2677 = vand.u32 %v2238, 2147483648
      %v2678 = vor.u32 1.1754944e-38, %v2677
      %v2679 = vsel %vm2676, %v2678, %v2674
      %v2680 = vmul.f32 1.0, %v2679
      %v2681 = vrcp.pop %v2239
      %v2682 = vmul.f32 %v2239, %v2681
      %v2683 = vsub.f32 1.0, %v2682
      %v2684 = vmul.f32 %v2681, %v2683
      %v2685 = vadd.f32 %v2681, %v2684
      %vm2686 = vweird.f32 %v2239
      %vm2687 = vweird.f32 %v2681
      %vm2688 = vmor %vm2686, %vm2687
      %v2689 = vsel %vm2688, %v2681, %v2685
      %v2690 = vand.u32 2147483647, %v2239
      %vm2691 = vcmp.eq.f32.partialorder %v2690, 8.507059e+37
      %v2692 = vand.u32 %v2239, 2147483648
      %v2693 = vor.u32 1.1754944e-38, %v2692
      %v2694 = vsel %vm2691, %v2693, %v2689
      %v2695 = vmul.f32 1.0, %v2694
      %v2696 = vrcp.pop %v2240
      %v2697 = vmul.f32 %v2240, %v2696
      %v2698 = vsub.f32 1.0, %v2697
      %v2699 = vmul.f32 %v2696, %v2698
      %v2700 = vadd.f32 %v2696, %v2699
      %vm2701 = vweird.f32 %v2240
      %vm2702 = vweird.f32 %v2696
      %vm2703 = vmor %vm2701, %vm2702
      %v2704 = vsel %vm2703, %v2696, %v2700
      %v2705 = vand.u32 2147483647, %v2240
      %vm2706 = vcmp.eq.f32.partialorder %v2705, 8.507059e+37
      %v2707 = vand.u32 %v2240, 2147483648
      %v2708 = vor.u32 1.1754944e-38, %v2707
      %v2709 = vsel %vm2706, %v2708, %v2704
      %v2710 = vmul.f32 1.0, %v2709
      %v2711 = vrcp.pop %v2241
      %v2712 = vmul.f32 %v2241, %v2711
      %v2713 = vsub.f32 1.0, %v2712
      %v2714 = vmul.f32 %v2711, %v2713
      %v2715 = vadd.f32 %v2711, %v2714
      %vm2716 = vweird.f32 %v2241
      %vm2717 = vweird.f32 %v2711
      %vm2718 = vmor %vm2716, %vm2717
      %v2719 = vsel %vm2718, %v2711, %v2715
      %v2720 = vand.u32 2147483647, %v2241
      %vm2721 = vcmp.eq.f32.partialorder %v2720, 8.507059e+37
      %v2722 = vand.u32 %v2241, 2147483648
      %v2723 = vor.u32 1.1754944e-38, %v2722
      %v2724 = vsel %vm2721, %v2723, %v2719
      %v2725 = vmul.f32 1.0, %v2724
      %v2726 = vrcp.pop %v2242
      %v2727 = vmul.f32 %v2242, %v2726
      %v2728 = vsub.f32 1.0, %v2727
      %v2729 = vmul.f32 %v2726, %v2728
      %v2730 = vadd.f32 %v2726, %v2729
      %vm2731 = vweird.f32 %v2242
      %vm2732 = vweird.f32 %v2726
      %vm2733 = vmor %vm2731, %vm2732
      %v2734 = vsel %vm2733, %v2726, %v2730
      %v2735 = vand.u32 2147483647, %v2242
      %vm2736 = vcmp.eq.f32.partialorder %v2735, 8.507059e+37
      %v2737 = vand.u32 %v2242, 2147483648
      %v2738 = vor.u32 1.1754944e-38, %v2737
      %v2739 = vsel %vm2736, %v2738, %v2734
      %v2740 = vmul.f32 1.0, %v2739
      %v2741 = vrcp.pop %v2243
      %v2742 = vmul.f32 %v2243, %v2741
      %v2743 = vsub.f32 1.0, %v2742
      %v2744 = vmul.f32 %v2741, %v2743
      %v2745 = vadd.f32 %v2741, %v2744
      %vm2746 = vweird.f32 %v2243
      %vm2747 = vweird.f32 %v2741
      %vm2748 = vmor %vm2746, %vm2747
      %v2749 = vsel %vm2748, %v2741, %v2745
      %v2750 = vand.u32 2147483647, %v2243
      %vm2751 = vcmp.eq.f32.partialorder %v2750, 8.507059e+37
      %v2752 = vand.u32 %v2243, 2147483648
      %v2753 = vor.u32 1.1754944e-38, %v2752
      %v2754 = vsel %vm2751, %v2753, %v2749
      %v2755 = vmul.f32 1.0, %v2754
      %v2756 = vrcp.pop %v2244
      %v2757 = vmul.f32 %v2244, %v2756
      %v2758 = vsub.f32 1.0, %v2757
      %v2759 = vmul.f32 %v2756, %v2758
      %v2760 = vadd.f32 %v2756, %v2759
      %vm2761 = vweird.f32 %v2244
      %vm2762 = vweird.f32 %v2756
      %vm2763 = vmor %vm2761, %vm2762
      %v2764 = vsel %vm2763, %v2756, %v2760
      %v2765 = vand.u32 2147483647, %v2244
      %vm2766 = vcmp.eq.f32.partialorder %v2765, 8.507059e+37
      %v2767 = vand.u32 %v2244, 2147483648
      %v2768 = vor.u32 1.1754944e-38, %v2767
      %v2769 = vsel %vm2766, %v2768, %v2764
      %v2770 = vmul.f32 1.0, %v2769
      %v2771 = vrcp.pop %v2245
      %v2772 = vmul.f32 %v2245, %v2771
      %v2773 = vsub.f32 1.0, %v2772
      %v2774 = vmul.f32 %v2771, %v2773
      %v2775 = vadd.f32 %v2771, %v2774
      %vm2776 = vweird.f32 %v2245
      %vm2777 = vweird.f32 %v2771
      %vm2778 = vmor %vm2776, %vm2777
      %v2779 = vsel %vm2778, %v2771, %v2775
      %v2780 = vand.u32 2147483647, %v2245
      %vm2781 = vcmp.eq.f32.partialorder %v2780, 8.507059e+37
      %v2782 = vand.u32 %v2245, 2147483648
      %v2783 = vor.u32 1.1754944e-38, %v2782
      %v2784 = vsel %vm2781, %v2783, %v2779
      %v2785 = vmul.f32 1.0, %v2784
      %v2786 = vrcp.pop %v2246
      %v2787 = vmul.f32 %v2246, %v2786
      %v2788 = vsub.f32 1.0, %v2787
      %v2789 = vmul.f32 %v2786, %v2788
      %v2790 = vadd.f32 %v2786, %v2789
      %vm2791 = vweird.f32 %v2246
      %vm2792 = vweird.f32 %v2786
      %vm2793 = vmor %vm2791, %vm2792
      %v2794 = vsel %vm2793, %v2786, %v2790
      %v2795 = vand.u32 2147483647, %v2246
      %vm2796 = vcmp.eq.f32.partialorder %v2795, 8.507059e+37
      %v2797 = vand.u32 %v2246, 2147483648
      %v2798 = vor.u32 1.1754944e-38, %v2797
      %v2799 = vsel %vm2796, %v2798, %v2794
      %v2800 = vmul.f32 1.0, %v2799
      %v2801 = vrcp.pop %v2247
      %v2802 = vmul.f32 %v2247, %v2801
      %v2803 = vsub.f32 1.0, %v2802
      %v2804 = vmul.f32 %v2801, %v2803
      %v2805 = vadd.f32 %v2801, %v2804
      %vm2806 = vweird.f32 %v2247
      %vm2807 = vweird.f32 %v2801
      %vm2808 = vmor %vm2806, %vm2807
      %v2809 = vsel %vm2808, %v2801, %v2805
      %v2810 = vand.u32 2147483647, %v2247
      %vm2811 = vcmp.eq.f32.partialorder %v2810, 8.507059e+37
      %v2812 = vand.u32 %v2247, 2147483648
      %v2813 = vor.u32 1.1754944e-38, %v2812
      %v2814 = vsel %vm2811, %v2813, %v2809
      %v2815 = vmul.f32 1.0, %v2814
      %v2816 = vrcp.pop %v2248
      %v2817 = vmul.f32 %v2248, %v2816
      %v2818 = vsub.f32 1.0, %v2817
      %v2819 = vmul.f32 %v2816, %v2818
      %v2820 = vadd.f32 %v2816, %v2819
      %vm2821 = vweird.f32 %v2248
      %vm2822 = vweird.f32 %v2816
      %vm2823 = vmor %vm2821, %vm2822
      %v2824 = vsel %vm2823, %v2816, %v2820
      %v2825 = vand.u32 2147483647, %v2248
      %vm2826 = vcmp.eq.f32.partialorder %v2825, 8.507059e+37
      %v2827 = vand.u32 %v2248, 2147483648
      %v2828 = vor.u32 1.1754944e-38, %v2827
      %v2829 = vsel %vm2826, %v2828, %v2824
      %v2830 = vmul.f32 1.0, %v2829
      %v2831 = vrcp.pop %v2249
      %v2832 = vmul.f32 %v2249, %v2831
      %v2833 = vsub.f32 1.0, %v2832
      %v2834 = vmul.f32 %v2831, %v2833
      %v2835 = vadd.f32 %v2831, %v2834
      %vm2836 = vweird.f32 %v2249
      %vm2837 = vweird.f32 %v2831
      %vm2838 = vmor %vm2836, %vm2837
      %v2839 = vsel %vm2838, %v2831, %v2835
      %v2840 = vand.u32 2147483647, %v2249
      %vm2841 = vcmp.eq.f32.partialorder %v2840, 8.507059e+37
      %v2842 = vand.u32 %v2249, 2147483648
      %v2843 = vor.u32 1.1754944e-38, %v2842
      %v2844 = vsel %vm2841, %v2843, %v2839
      %v2845 = vmul.f32 1.0, %v2844
      %v2846 = vrcp.pop %v2250
      %v2847 = vmul.f32 %v2250, %v2846
      %v2848 = vsub.f32 1.0, %v2847
      %v2849 = vmul.f32 %v2846, %v2848
      %v2850 = vadd.f32 %v2846, %v2849
      %vm2851 = vweird.f32 %v2250
      %vm2852 = vweird.f32 %v2846
      %vm2853 = vmor %vm2851, %vm2852
      %v2854 = vsel %vm2853, %v2846, %v2850
      %v2855 = vand.u32 2147483647, %v2250
      %vm2856 = vcmp.eq.f32.partialorder %v2855, 8.507059e+37
      %v2857 = vand.u32 %v2250, 2147483648
      %v2858 = vor.u32 1.1754944e-38, %v2857
      %v2859 = vsel %vm2856, %v2858, %v2854
      %v2860 = vmul.f32 1.0, %v2859
      %v2861 = vrcp.pop %v2251
      %v2862 = vmul.f32 %v2251, %v2861
      %v2863 = vsub.f32 1.0, %v2862
      %v2864 = vmul.f32 %v2861, %v2863
      %v2865 = vadd.f32 %v2861, %v2864
      %vm2866 = vweird.f32 %v2251
      %vm2867 = vweird.f32 %v2861
      %vm2868 = vmor %vm2866, %vm2867
      %v2869 = vsel %vm2868, %v2861, %v2865
      %v2870 = vand.u32 2147483647, %v2251
      %vm2871 = vcmp.eq.f32.partialorder %v2870, 8.507059e+37
      %v2872 = vand.u32 %v2251, 2147483648
      %v2873 = vor.u32 1.1754944e-38, %v2872
      %v2874 = vsel %vm2871, %v2873, %v2869
      %v2875 = vmul.f32 1.0, %v2874
      %v2876 = vrcp.pop %v2252
      %v2877 = vmul.f32 %v2252, %v2876
      %v2878 = vsub.f32 1.0, %v2877
      %v2879 = vmul.f32 %v2876, %v2878
      %v2880 = vadd.f32 %v2876, %v2879
      %vm2881 = vweird.f32 %v2252
      %vm2882 = vweird.f32 %v2876
      %vm2883 = vmor %vm2881, %vm2882
      %v2884 = vsel %vm2883, %v2876, %v2880
      %v2885 = vand.u32 2147483647, %v2252
      %vm2886 = vcmp.eq.f32.partialorder %v2885, 8.507059e+37
      %v2887 = vand.u32 %v2252, 2147483648
      %v2888 = vor.u32 1.1754944e-38, %v2887
      %v2889 = vsel %vm2886, %v2888, %v2884
      %v2890 = vmul.f32 1.0, %v2889
      %v2891 = vrcp.pop %v2253
      %v2892 = vmul.f32 %v2253, %v2891
      %v2893 = vsub.f32 1.0, %v2892
      %v2894 = vmul.f32 %v2891, %v2893
      %v2895 = vadd.f32 %v2891, %v2894
      %vm2896 = vweird.f32 %v2253
      %vm2897 = vweird.f32 %v2891
      %vm2898 = vmor %vm2896, %vm2897
      %v2899 = vsel %vm2898, %v2891, %v2895
      %v2900 = vand.u32 2147483647, %v2253
      %vm2901 = vcmp.eq.f32.partialorder %v2900, 8.507059e+37
      %v2902 = vand.u32 %v2253, 2147483648
      %v2903 = vor.u32 1.1754944e-38, %v2902
      %v2904 = vsel %vm2901, %v2903, %v2899
      %v2905 = vmul.f32 1.0, %v2904
      %v2906 = vrcp.pop %v2254
      %v2907 = vmul.f32 %v2254, %v2906
      %v2908 = vsub.f32 1.0, %v2907
      %v2909 = vmul.f32 %v2906, %v2908
      %v2910 = vadd.f32 %v2906, %v2909
      %vm2911 = vweird.f32 %v2254
      %vm2912 = vweird.f32 %v2906
      %vm2913 = vmor %vm2911, %vm2912
      %v2914 = vsel %vm2913, %v2906, %v2910
      %v2915 = vand.u32 2147483647, %v2254
      %vm2916 = vcmp.eq.f32.partialorder %v2915, 8.507059e+37
      %v2917 = vand.u32 %v2254, 2147483648
      %v2918 = vor.u32 1.1754944e-38, %v2917
      %v2919 = vsel %vm2916, %v2918, %v2914
      %v2920 = vmul.f32 1.0, %v2919
      %v2921 = vrcp.pop %v2255
      %v2922 = vmul.f32 %v2255, %v2921
      %v2923 = vsub.f32 1.0, %v2922
      %v2924 = vmul.f32 %v2921, %v2923
      %v2925 = vadd.f32 %v2921, %v2924
      %vm2926 = vweird.f32 %v2255
      %vm2927 = vweird.f32 %v2921
      %vm2928 = vmor %vm2926, %vm2927
      %v2929 = vsel %vm2928, %v2921, %v2925
      %v2930 = vand.u32 2147483647, %v2255
      %vm2931 = vcmp.eq.f32.partialorder %v2930, 8.507059e+37
      %v2932 = vand.u32 %v2255, 2147483648
      %v2933 = vor.u32 1.1754944e-38, %v2932
      %v2934 = vsel %vm2931, %v2933, %v2929
      %v2935 = vmul.f32 1.0, %v2934
      %v2936 = vrcp.pop %v2256
      %v2937 = vmul.f32 %v2256, %v2936
      %v2938 = vsub.f32 1.0, %v2937
      %v2939 = vmul.f32 %v2936, %v2938
      %v2940 = vadd.f32 %v2936, %v2939
      %vm2941 = vweird.f32 %v2256
      %vm2942 = vweird.f32 %v2936
      %vm2943 = vmor %vm2941, %vm2942
      %v2944 = vsel %vm2943, %v2936, %v2940
      %v2945 = vand.u32 2147483647, %v2256
      %vm2946 = vcmp.eq.f32.partialorder %v2945, 8.507059e+37
      %v2947 = vand.u32 %v2256, 2147483648
      %v2948 = vor.u32 1.1754944e-38, %v2947
      %v2949 = vsel %vm2946, %v2948, %v2944
      %v2950 = vmul.f32 1.0, %v2949
      %v2951 = vrcp.pop %v2257
      %v2952 = vmul.f32 %v2257, %v2951
      %v2953 = vsub.f32 1.0, %v2952
      %v2954 = vmul.f32 %v2951, %v2953
      %v2955 = vadd.f32 %v2951, %v2954
      %vm2956 = vweird.f32 %v2257
      %vm2957 = vweird.f32 %v2951
      %vm2958 = vmor %vm2956, %vm2957
      %v2959 = vsel %vm2958, %v2951, %v2955
      %v2960 = vand.u32 2147483647, %v2257
      %vm2961 = vcmp.eq.f32.partialorder %v2960, 8.507059e+37
      %v2962 = vand.u32 %v2257, 2147483648
      %v2963 = vor.u32 1.1754944e-38, %v2962
      %v2964 = vsel %vm2961, %v2963, %v2959
      %v2965 = vmul.f32 1.0, %v2964
      %v2966 = vrcp.pop %v2258
      %v2967 = vmul.f32 %v2258, %v2966
      %v2968 = vsub.f32 1.0, %v2967
      %v2969 = vmul.f32 %v2966, %v2968
      %v2970 = vadd.f32 %v2966, %v2969
      %vm2971 = vweird.f32 %v2258
      %vm2972 = vweird.f32 %v2966
      %vm2973 = vmor %vm2971, %vm2972
      %v2974 = vsel %vm2973, %v2966, %v2970
      %v2975 = vand.u32 2147483647, %v2258
      %vm2976 = vcmp.eq.f32.partialorder %v2975, 8.507059e+37
      %v2977 = vand.u32 %v2258, 2147483648
      %v2978 = vor.u32 1.1754944e-38, %v2977
      %v2979 = vsel %vm2976, %v2978, %v2974
      %v2980 = vmul.f32 1.0, %v2979
      %v2981 = vrcp.pop %v2259
      %v2982 = vmul.f32 %v2259, %v2981
      %v2983 = vsub.f32 1.0, %v2982
      %v2984 = vmul.f32 %v2981, %v2983
      %v2985 = vadd.f32 %v2981, %v2984
      %vm2986 = vweird.f32 %v2259
      %vm2987 = vweird.f32 %v2981
      %vm2988 = vmor %vm2986, %vm2987
      %v2989 = vsel %vm2988, %v2981, %v2985
      %v2990 = vand.u32 2147483647, %v2259
      %vm2991 = vcmp.eq.f32.partialorder %v2990, 8.507059e+37
      %v2992 = vand.u32 %v2259, 2147483648
      %v2993 = vor.u32 1.1754944e-38, %v2992
      %v2994 = vsel %vm2991, %v2993, %v2989
      %v2995 = vmul.f32 1.0, %v2994
      %v2996 = vrcp.pop %v2260
      %v2997 = vmul.f32 %v2260, %v2996
      %v2998 = vsub.f32 1.0, %v2997
      %v2999 = vmul.f32 %v2996, %v2998
      %v3000 = vadd.f32 %v2996, %v2999
      %vm3001 = vweird.f32 %v2260
      %vm3002 = vweird.f32 %v2996
      %vm3003 = vmor %vm3001, %vm3002
      %v3004 = vsel %vm3003, %v2996, %v3000
      %v3005 = vand.u32 2147483647, %v2260
      %vm3006 = vcmp.eq.f32.partialorder %v3005, 8.507059e+37
      %v3007 = vand.u32 %v2260, 2147483648
      %v3008 = vor.u32 1.1754944e-38, %v3007
      %v3009 = vsel %vm3006, %v3008, %v3004
      %v3010 = vmul.f32 1.0, %v3009
      %v3011 = vrcp.pop %v2261
      %v3012 = vmul.f32 %v2261, %v3011
      %v3013 = vsub.f32 1.0, %v3012
      %v3014 = vmul.f32 %v3011, %v3013
      %v3015 = vadd.f32 %v3011, %v3014
      %vm3016 = vweird.f32 %v2261
      %vm3017 = vweird.f32 %v3011
      %vm3018 = vmor %vm3016, %vm3017
      %v3019 = vsel %vm3018, %v3011, %v3015
      %v3020 = vand.u32 2147483647, %v2261
      %vm3021 = vcmp.eq.f32.partialorder %v3020, 8.507059e+37
      %v3022 = vand.u32 %v2261, 2147483648
      %v3023 = vor.u32 1.1754944e-38, %v3022
      %v3024 = vsel %vm3021, %v3023, %v3019
      %v3025 = vmul.f32 1.0, %v3024
      %v3026 = vrcp.pop %v2262
      %v3027 = vmul.f32 %v2262, %v3026
      %v3028 = vsub.f32 1.0, %v3027
      %v3029 = vmul.f32 %v3026, %v3028
      %v3030 = vadd.f32 %v3026, %v3029
      %vm3031 = vweird.f32 %v2262
      %vm3032 = vweird.f32 %v3026
      %vm3033 = vmor %vm3031, %vm3032
      %v3034 = vsel %vm3033, %v3026, %v3030
      %v3035 = vand.u32 2147483647, %v2262
      %vm3036 = vcmp.eq.f32.partialorder %v3035, 8.507059e+37
      %v3037 = vand.u32 %v2262, 2147483648
      %v3038 = vor.u32 1.1754944e-38, %v3037
      %v3039 = vsel %vm3036, %v3038, %v3034
      %v3040 = vmul.f32 1.0, %v3039
      %v3041 = vrcp.pop %v2263
      %v3042 = vmul.f32 %v2263, %v3041
      %v3043 = vsub.f32 1.0, %v3042
      %v3044 = vmul.f32 %v3041, %v3043
      %v3045 = vadd.f32 %v3041, %v3044
      %vm3046 = vweird.f32 %v2263
      %vm3047 = vweird.f32 %v3041
      %vm3048 = vmor %vm3046, %vm3047
      %v3049 = vsel %vm3048, %v3041, %v3045
      %v3050 = vand.u32 2147483647, %v2263
      %vm3051 = vcmp.eq.f32.partialorder %v3050, 8.507059e+37
      %v3052 = vand.u32 %v2263, 2147483648
      %v3053 = vor.u32 1.1754944e-38, %v3052
      %v3054 = vsel %vm3051, %v3053, %v3049
      %v3055 = vmul.f32 1.0, %v3054
      %v3056 = vrcp.pop %v2264
      %v3057 = vmul.f32 %v2264, %v3056
      %v3058 = vsub.f32 1.0, %v3057
      %v3059 = vmul.f32 %v3056, %v3058
      %v3060 = vadd.f32 %v3056, %v3059
      %vm3061 = vweird.f32 %v2264
      %vm3062 = vweird.f32 %v3056
      %vm3063 = vmor %vm3061, %vm3062
      %v3064 = vsel %vm3063, %v3056, %v3060
      %v3065 = vand.u32 2147483647, %v2264
      %vm3066 = vcmp.eq.f32.partialorder %v3065, 8.507059e+37
      %v3067 = vand.u32 %v2264, 2147483648
      %v3068 = vor.u32 1.1754944e-38, %v3067
      %v3069 = vsel %vm3066, %v3068, %v3064
      %v3070 = vmul.f32 1.0, %v3069
      %v3071 = vrcp.pop %v2265
      %v3072 = vmul.f32 %v2265, %v3071
      %v3073 = vsub.f32 1.0, %v3072
      %v3074 = vmul.f32 %v3071, %v3073
      %v3075 = vadd.f32 %v3071, %v3074
      %vm3076 = vweird.f32 %v2265
      %vm3077 = vweird.f32 %v3071
      %vm3078 = vmor %vm3076, %vm3077
      %v3079 = vsel %vm3078, %v3071, %v3075
      %v3080 = vand.u32 2147483647, %v2265
      %vm3081 = vcmp.eq.f32.partialorder %v3080, 8.507059e+37
      %v3082 = vand.u32 %v2265, 2147483648
      %v3083 = vor.u32 1.1754944e-38, %v3082
      %v3084 = vsel %vm3081, %v3083, %v3079
      %v3085 = vmul.f32 1.0, %v3084
      %v3086 = vrcp.pop %v2266
      %v3087 = vmul.f32 %v2266, %v3086
      %v3088 = vsub.f32 1.0, %v3087
      %v3089 = vmul.f32 %v3086, %v3088
      %v3090 = vadd.f32 %v3086, %v3089
      %vm3091 = vweird.f32 %v2266
      %vm3092 = vweird.f32 %v3086
      %vm3093 = vmor %vm3091, %vm3092
      %v3094 = vsel %vm3093, %v3086, %v3090
      %v3095 = vand.u32 2147483647, %v2266
      %vm3096 = vcmp.eq.f32.partialorder %v3095, 8.507059e+37
      %v3097 = vand.u32 %v2266, 2147483648
      %v3098 = vor.u32 1.1754944e-38, %v3097
      %v3099 = vsel %vm3096, %v3098, %v3094
      %v3100 = vmul.f32 1.0, %v3099
      %v3101 = vrcp.pop %v2267
      %v3102 = vmul.f32 %v2267, %v3101
      %v3103 = vsub.f32 1.0, %v3102
      %v3104 = vmul.f32 %v3101, %v3103
      %v3105 = vadd.f32 %v3101, %v3104
      %vm3106 = vweird.f32 %v2267
      %vm3107 = vweird.f32 %v3101
      %vm3108 = vmor %vm3106, %vm3107
      %v3109 = vsel %vm3108, %v3101, %v3105
      %v3110 = vand.u32 2147483647, %v2267
      %vm3111 = vcmp.eq.f32.partialorder %v3110, 8.507059e+37
      %v3112 = vand.u32 %v2267, 2147483648
      %v3113 = vor.u32 1.1754944e-38, %v3112
      %v3114 = vsel %vm3111, %v3113, %v3109
      %v3115 = vmul.f32 1.0, %v3114
      %v3116 = vrcp.pop %v2268
      %v3117 = vmul.f32 %v2268, %v3116
      %v3118 = vsub.f32 1.0, %v3117
      %v3119 = vmul.f32 %v3116, %v3118
      %v3120 = vadd.f32 %v3116, %v3119
      %vm3121 = vweird.f32 %v2268
      %vm3122 = vweird.f32 %v3116
      %vm3123 = vmor %vm3121, %vm3122
      %v3124 = vsel %vm3123, %v3116, %v3120
      %v3125 = vand.u32 2147483647, %v2268
      %vm3126 = vcmp.eq.f32.partialorder %v3125, 8.507059e+37
      %v3127 = vand.u32 %v2268, 2147483648
      %v3128 = vor.u32 1.1754944e-38, %v3127
      %v3129 = vsel %vm3126, %v3128, %v3124
      %v3130 = vmul.f32 1.0, %v3129
      %v3131 = vrcp.pop %v2269
      %v3132 = vmul.f32 %v2269, %v3131
      %v3133 = vsub.f32 1.0, %v3132
      %v3134 = vmul.f32 %v3131, %v3133
      %v3135 = vadd.f32 %v3131, %v3134
      %vm3136 = vweird.f32 %v2269
      %vm3137 = vweird.f32 %v3131
      %vm3138 = vmor %vm3136, %vm3137
      %v3139 = vsel %vm3138, %v3131, %v3135
      %v3140 = vand.u32 2147483647, %v2269
      %vm3141 = vcmp.eq.f32.partialorder %v3140, 8.507059e+37
      %v3142 = vand.u32 %v2269, 2147483648
      %v3143 = vor.u32 1.1754944e-38, %v3142
      %v3144 = vsel %vm3141, %v3143, %v3139
      %v3145 = vmul.f32 1.0, %v3144
      %v3146 = vrcp.pop %v2270
      %v3147 = vmul.f32 %v2270, %v3146
      %v3148 = vsub.f32 1.0, %v3147
      %v3149 = vmul.f32 %v3146, %v3148
      %v3150 = vadd.f32 %v3146, %v3149
      %vm3151 = vweird.f32 %v2270
      %vm3152 = vweird.f32 %v3146
      %vm3153 = vmor %vm3151, %vm3152
      %v3154 = vsel %vm3153, %v3146, %v3150
      %v3155 = vand.u32 2147483647, %v2270
      %vm3156 = vcmp.eq.f32.partialorder %v3155, 8.507059e+37
      %v3157 = vand.u32 %v2270, 2147483648
      %v3158 = vor.u32 1.1754944e-38, %v3157
      %v3159 = vsel %vm3156, %v3158, %v3154
      %v3160 = vmul.f32 1.0, %v3159
      %v3161 = vrcp.pop %v2271
      %v3162 = vmul.f32 %v2271, %v3161
      %v3163 = vsub.f32 1.0, %v3162
      %v3164 = vmul.f32 %v3161, %v3163
      %v3165 = vadd.f32 %v3161, %v3164
      %vm3166 = vweird.f32 %v2271
      %vm3167 = vweird.f32 %v3161
      %vm3168 = vmor %vm3166, %vm3167
      %v3169 = vsel %vm3168, %v3161, %v3165
      %v3170 = vand.u32 2147483647, %v2271
      %vm3171 = vcmp.eq.f32.partialorder %v3170, 8.507059e+37
      %v3172 = vand.u32 %v2271, 2147483648
      %v3173 = vor.u32 1.1754944e-38, %v3172
      %v3174 = vsel %vm3171, %v3173, %v3169
      %v3175 = vmul.f32 1.0, %v3174
      %v3176 = vrcp.pop %v2272
      %v3177 = vmul.f32 %v2272, %v3176
      %v3178 = vsub.f32 1.0, %v3177
      %v3179 = vmul.f32 %v3176, %v3178
      %v3180 = vadd.f32 %v3176, %v3179
      %vm3181 = vweird.f32 %v2272
      %vm3182 = vweird.f32 %v3176
      %vm3183 = vmor %vm3181, %vm3182
      %v3184 = vsel %vm3183, %v3176, %v3180
      %v3185 = vand.u32 2147483647, %v2272
      %vm3186 = vcmp.eq.f32.partialorder %v3185, 8.507059e+37
      %v3187 = vand.u32 %v2272, 2147483648
      %v3188 = vor.u32 1.1754944e-38, %v3187
      %v3189 = vsel %vm3186, %v3188, %v3184
      %v3190 = vmul.f32 1.0, %v3189
      %v3191 = vrcp.pop %v2273
      %v3192 = vmul.f32 %v2273, %v3191
      %v3193 = vsub.f32 1.0, %v3192
      %v3194 = vmul.f32 %v3191, %v3193
      %v3195 = vadd.f32 %v3191, %v3194
      %vm3196 = vweird.f32 %v2273
      %vm3197 = vweird.f32 %v3191
      %vm3198 = vmor %vm3196, %vm3197
      %v3199 = vsel %vm3198, %v3191, %v3195
      %v3200 = vand.u32 2147483647, %v2273
      %vm3201 = vcmp.eq.f32.partialorder %v3200, 8.507059e+37
      %v3202 = vand.u32 %v2273, 2147483648
      %v3203 = vor.u32 1.1754944e-38, %v3202
      %v3204 = vsel %vm3201, %v3203, %v3199
      %v3205 = vmul.f32 1.0, %v3204
      %v3206 = vrcp.pop %v2274
      %v3207 = vmul.f32 %v2274, %v3206
      %v3208 = vsub.f32 1.0, %v3207
      %v3209 = vmul.f32 %v3206, %v3208
      %v3210 = vadd.f32 %v3206, %v3209
      %vm3211 = vweird.f32 %v2274
      %vm3212 = vweird.f32 %v3206
      %vm3213 = vmor %vm3211, %vm3212
      %v3214 = vsel %vm3213, %v3206, %v3210
      %v3215 = vand.u32 2147483647, %v2274
      %vm3216 = vcmp.eq.f32.partialorder %v3215, 8.507059e+37
      %v3217 = vand.u32 %v2274, 2147483648
      %v3218 = vor.u32 1.1754944e-38, %v3217
      %v3219 = vsel %vm3216, %v3218, %v3214
      %v3220 = vmul.f32 1.0, %v3219
      %v3221 = vrcp.pop %v2275
      %v3222 = vmul.f32 %v2275, %v3221
      %v3223 = vsub.f32 1.0, %v3222
      %v3224 = vmul.f32 %v3221, %v3223
      %v3225 = vadd.f32 %v3221, %v3224
      %vm3226 = vweird.f32 %v2275
      %vm3227 = vweird.f32 %v3221
      %vm3228 = vmor %vm3226, %vm3227
      %v3229 = vsel %vm3228, %v3221, %v3225
      %v3230 = vand.u32 2147483647, %v2275
      %vm3231 = vcmp.eq.f32.partialorder %v3230, 8.507059e+37
      %v3232 = vand.u32 %v2275, 2147483648
      %v3233 = vor.u32 1.1754944e-38, %v3232
      %v3234 = vsel %vm3231, %v3233, %v3229
      %v3235 = vmul.f32 1.0, %v3234
      %v3236 = vld [vmem:[%s5] sm:$0xff]
      %v3237 = vld [vmem:[%s5 + $0x8] sm:$0xff]
      %v3238 = vld [vmem:[%s5 + $0x10] sm:$0xff]
      %v3239 = vld [vmem:[%s5 + $0x18] sm:$0xff]
      %v3240 = vld [vmem:[%s5 + $0x20] sm:$0xff]
      %v3241 = vld [vmem:[%s5 + $0x28] sm:$0xff]
      %v3242 = vld [vmem:[%s5 + $0x30] sm:$0xff]
      %v3243 = vld [vmem:[%s5 + $0x38] sm:$0xff]
      %v3244 = vld [vmem:[%s5 + $0x40] sm:$0xff]
      %v3245 = vld [vmem:[%s5 + $0x48] sm:$0xff]
      %v3246 = vld [vmem:[%s5 + $0x50] sm:$0xff]
      %v3247 = vld [vmem:[%s5 + $0x58] sm:$0xff]
      %v3248 = vld [vmem:[%s5 + $0x60] sm:$0xff]
      %v3249 = vld [vmem:[%s5 + $0x68] sm:$0xff]
      %v3250 = vld [vmem:[%s5 + $0x70] sm:$0xff]
      %v3251 = vld [vmem:[%s5 + $0x78] sm:$0xff]
      %v3252 = vld [vmem:[%s6] sm:$0x1]
      %v3254 = vperm.slane %v3252, 0
      %3256 = vmatpush.msra.mxu0 %v3251
      %3257 = vmatpush.msra.mxu0 %v3250
      %3258 = vmatpush.msra.mxu0 %v3249
      %3259 = vmatpush.msra.mxu0 %v3248
      %3260 = vmatpush.msra.mxu0 %v3247
      %3261 = vmatpush.msra.mxu0 %v3246
      %3262 = vmatpush.msra.mxu0 %v3245
      %3263 = vmatpush.msra.mxu0 %v3244
      %3264 = vmatpush.msra.mxu0 %v3243
      %3265 = vmatpush.msra.mxu0 %v3242
      %3266 = vmatpush.msra.mxu0 %v3241
      %3267 = vmatpush.msra.mxu0 %v3240
      %3268 = vmatpush.msra.mxu0 %v3239
      %3269 = vmatpush.msra.mxu0 %v3238
      %3270 = vmatpush.msra.mxu0 %v3237
      %3271 = vmatpush.msra.mxu0 %v3236
      %3272 = vmatmul.f32.gmra.mxu0 %v2290
      %v3273 = vpop.f32.mrf.mxu0
      %v3274 = vadd.f32 %v3254, %v3273
      %3275 = vmatmul.f32.gmra.mxu0 %v2305
      %v3276 = vpop.f32.mrf.mxu0
      %v3277 = vadd.f32 %v3254, %v3276
      %3278 = vmatmul.f32.gmra.mxu0 %v2320
      %v3279 = vpop.f32.mrf.mxu0
      %v3280 = vadd.f32 %v3254, %v3279
      %3281 = vmatmul.f32.gmra.mxu0 %v2335
      %v3282 = vpop.f32.mrf.mxu0
      %v3283 = vadd.f32 %v3254, %v3282
      %3284 = vmatmul.f32.gmra.mxu0 %v2350
      %v3285 = vpop.f32.mrf.mxu0
      %v3286 = vadd.f32 %v3254, %v3285
      %3287 = vmatmul.f32.gmra.mxu0 %v2365
      %v3288 = vpop.f32.mrf.mxu0
      %v3289 = vadd.f32 %v3254, %v3288
      %3290 = vmatmul.f32.gmra.mxu0 %v2380
      %v3291 = vpop.f32.mrf.mxu0
      %v3292 = vadd.f32 %v3254, %v3291
      %3293 = vmatmul.f32.gmra.mxu0 %v2395
      %v3294 = vpop.f32.mrf.mxu0
      %v3295 = vadd.f32 %v3254, %v3294
      %3296 = vmatmul.f32.gmra.mxu0 %v2410
      %v3297 = vpop.f32.mrf.mxu0
      %v3298 = vadd.f32 %v3254, %v3297
      %3299 = vmatmul.f32.gmra.mxu0 %v2425
      %v3300 = vpop.f32.mrf.mxu0
      %v3301 = vadd.f32 %v3254, %v3300
      %3302 = vmatmul.f32.gmra.mxu0 %v2440
      %v3303 = vpop.f32.mrf.mxu0
      %v3304 = vadd.f32 %v3254, %v3303
      %3305 = vmatmul.f32.gmra.mxu0 %v2455
      %v3306 = vpop.f32.mrf.mxu0
      %v3307 = vadd.f32 %v3254, %v3306
      %3308 = vmatmul.f32.gmra.mxu0 %v2470
      %v3309 = vpop.f32.mrf.mxu0
      %v3310 = vadd.f32 %v3254, %v3309
      %3311 = vmatmul.f32.gmra.mxu0 %v2485
      %v3312 = vpop.f32.mrf.mxu0
      %v3313 = vadd.f32 %v3254, %v3312
      %3314 = vmatmul.f32.gmra.mxu0 %v2500
      %v3315 = vpop.f32.mrf.mxu0
      %v3316 = vadd.f32 %v3254, %v3315
      %3317 = vmatmul.f32.gmra.mxu0 %v2515
      %v3318 = vpop.f32.mrf.mxu0
      %v3319 = vadd.f32 %v3254, %v3318
      %3320 = vmatmul.f32.gmra.mxu0 %v2530
      %v3321 = vpop.f32.mrf.mxu0
      %v3322 = vadd.f32 %v3254, %v3321
      %3323 = vmatmul.f32.gmra.mxu0 %v2545
      %v3324 = vpop.f32.mrf.mxu0
      %v3325 = vadd.f32 %v3254, %v3324
      %3326 = vmatmul.f32.gmra.mxu0 %v2560
      %v3327 = vpop.f32.mrf.mxu0
      %v3328 = vadd.f32 %v3254, %v3327
      %3329 = vmatmul.f32.gmra.mxu0 %v2575
      %v3330 = vpop.f32.mrf.mxu0
      %v3331 = vadd.f32 %v3254, %v3330
      %3332 = vmatmul.f32.gmra.mxu0 %v2590
      %v3333 = vpop.f32.mrf.mxu0
      %v3334 = vadd.f32 %v3254, %v3333
      %3335 = vmatmul.f32.gmra.mxu0 %v2605
      %v3336 = vpop.f32.mrf.mxu0
      %v3337 = vadd.f32 %v3254, %v3336
      %3338 = vmatmul.f32.gmra.mxu0 %v2620
      %v3339 = vpop.f32.mrf.mxu0
      %v3340 = vadd.f32 %v3254, %v3339
      %3341 = vmatmul.f32.gmra.mxu0 %v2635
      %v3342 = vpop.f32.mrf.mxu0
      %v3343 = vadd.f32 %v3254, %v3342
      %3344 = vmatmul.f32.gmra.mxu0 %v2650
      %v3345 = vpop.f32.mrf.mxu0
      %v3346 = vadd.f32 %v3254, %v3345
      %3347 = vmatmul.f32.gmra.mxu0 %v2665
      %v3348 = vpop.f32.mrf.mxu0
      %v3349 = vadd.f32 %v3254, %v3348
      %3350 = vmatmul.f32.gmra.mxu0 %v2680
      %v3351 = vpop.f32.mrf.mxu0
      %v3352 = vadd.f32 %v3254, %v3351
      %3353 = vmatmul.f32.gmra.mxu0 %v2695
      %v3354 = vpop.f32.mrf.mxu0
      %v3355 = vadd.f32 %v3254, %v3354
      %3356 = vmatmul.f32.gmra.mxu0 %v2710
      %v3357 = vpop.f32.mrf.mxu0
      %v3358 = vadd.f32 %v3254, %v3357
      %3359 = vmatmul.f32.gmra.mxu0 %v2725
      %v3360 = vpop.f32.mrf.mxu0
      %v3361 = vadd.f32 %v3254, %v3360
      %3362 = vmatmul.f32.gmra.mxu0 %v2740
      %v3363 = vpop.f32.mrf.mxu0
      %v3364 = vadd.f32 %v3254, %v3363
      %3365 = vmatmul.f32.gmra.mxu0 %v2755
      %v3366 = vpop.f32.mrf.mxu0
      %v3367 = vadd.f32 %v3254, %v3366
      %3368 = vmatmul.f32.gmra.mxu0 %v2770
      %v3369 = vpop.f32.mrf.mxu0
      %v3370 = vadd.f32 %v3254, %v3369
      %3371 = vmatmul.f32.gmra.mxu0 %v2785
      %v3372 = vpop.f32.mrf.mxu0
      %v3373 = vadd.f32 %v3254, %v3372
      %3374 = vmatmul.f32.gmra.mxu0 %v2800
      %v3375 = vpop.f32.mrf.mxu0
      %v3376 = vadd.f32 %v3254, %v3375
      %3377 = vmatmul.f32.gmra.mxu0 %v2815
      %v3378 = vpop.f32.mrf.mxu0
      %v3379 = vadd.f32 %v3254, %v3378
      %3380 = vmatmul.f32.gmra.mxu0 %v2830
      %v3381 = vpop.f32.mrf.mxu0
      %v3382 = vadd.f32 %v3254, %v3381
      %3383 = vmatmul.f32.gmra.mxu0 %v2845
      %v3384 = vpop.f32.mrf.mxu0
      %v3385 = vadd.f32 %v3254, %v3384
      %3386 = vmatmul.f32.gmra.mxu0 %v2860
      %v3387 = vpop.f32.mrf.mxu0
      %v3388 = vadd.f32 %v3254, %v3387
      %3389 = vmatmul.f32.gmra.mxu0 %v2875
      %v3390 = vpop.f32.mrf.mxu0
      %v3391 = vadd.f32 %v3254, %v3390
      %3392 = vmatmul.f32.gmra.mxu0 %v2890
      %v3393 = vpop.f32.mrf.mxu0
      %v3394 = vadd.f32 %v3254, %v3393
      %3395 = vmatmul.f32.gmra.mxu0 %v2905
      %v3396 = vpop.f32.mrf.mxu0
      %v3397 = vadd.f32 %v3254, %v3396
      %3398 = vmatmul.f32.gmra.mxu0 %v2920
      %v3399 = vpop.f32.mrf.mxu0
      %v3400 = vadd.f32 %v3254, %v3399
      %3401 = vmatmul.f32.gmra.mxu0 %v2935
      %v3402 = vpop.f32.mrf.mxu0
      %v3403 = vadd.f32 %v3254, %v3402
      %3404 = vmatmul.f32.gmra.mxu0 %v2950
      %v3405 = vpop.f32.mrf.mxu0
      %v3406 = vadd.f32 %v3254, %v3405
      %3407 = vmatmul.f32.gmra.mxu0 %v2965
      %v3408 = vpop.f32.mrf.mxu0
      %v3409 = vadd.f32 %v3254, %v3408
      %3410 = vmatmul.f32.gmra.mxu0 %v2980
      %v3411 = vpop.f32.mrf.mxu0
      %v3412 = vadd.f32 %v3254, %v3411
      %3413 = vmatmul.f32.gmra.mxu0 %v2995
      %v3414 = vpop.f32.mrf.mxu0
      %v3415 = vadd.f32 %v3254, %v3414
      %3416 = vmatmul.f32.gmra.mxu0 %v3010
      %v3417 = vpop.f32.mrf.mxu0
      %v3418 = vadd.f32 %v3254, %v3417
      %3419 = vmatmul.f32.gmra.mxu0 %v3025
      %v3420 = vpop.f32.mrf.mxu0
      %v3421 = vadd.f32 %v3254, %v3420
      %3422 = vmatmul.f32.gmra.mxu0 %v3040
      %v3423 = vpop.f32.mrf.mxu0
      %v3424 = vadd.f32 %v3254, %v3423
      %3425 = vmatmul.f32.gmra.mxu0 %v3055
      %v3426 = vpop.f32.mrf.mxu0
      %v3427 = vadd.f32 %v3254, %v3426
      %3428 = vmatmul.f32.gmra.mxu0 %v3070
      %v3429 = vpop.f32.mrf.mxu0
      %v3430 = vadd.f32 %v3254, %v3429
      %3431 = vmatmul.f32.gmra.mxu0 %v3085
      %v3432 = vpop.f32.mrf.mxu0
      %v3433 = vadd.f32 %v3254, %v3432
      %3434 = vmatmul.f32.gmra.mxu0 %v3100
      %v3435 = vpop.f32.mrf.mxu0
      %v3436 = vadd.f32 %v3254, %v3435
      %3437 = vmatmul.f32.gmra.mxu0 %v3115
      %v3438 = vpop.f32.mrf.mxu0
      %v3439 = vadd.f32 %v3254, %v3438
      %3440 = vmatmul.f32.gmra.mxu0 %v3130
      %v3441 = vpop.f32.mrf.mxu0
      %v3442 = vadd.f32 %v3254, %v3441
      %3443 = vmatmul.f32.gmra.mxu0 %v3145
      %v3444 = vpop.f32.mrf.mxu0
      %v3445 = vadd.f32 %v3254, %v3444
      %3446 = vmatmul.f32.gmra.mxu0 %v3160
      %v3447 = vpop.f32.mrf.mxu0
      %v3448 = vadd.f32 %v3254, %v3447
      %3449 = vmatmul.f32.gmra.mxu0 %v3175
      %v3450 = vpop.f32.mrf.mxu0
      %v3451 = vadd.f32 %v3254, %v3450
      %3452 = vmatmul.f32.gmra.mxu0 %v3190
      %v3453 = vpop.f32.mrf.mxu0
      %v3454 = vadd.f32 %v3254, %v3453
      %3455 = vmatmul.f32.gmra.mxu0 %v3205
      %v3456 = vpop.f32.mrf.mxu0
      %v3457 = vadd.f32 %v3254, %v3456
      %3458 = vmatmul.f32.gmra.mxu0 %v3220
      %v3459 = vpop.f32.mrf.mxu0
      %v3460 = vadd.f32 %v3254, %v3459
      %3461 = vmatmul.f32.gmra.mxu0 %v3235
      %v3462 = vpop.f32.mrf.mxu0
      %v3463 = vadd.f32 %v3254, %v3462
      %3464 = vdwg.mxu0
      %v3465 = vmax.f32 %v3274, 0.0
      %v3466 = vmax.f32 %v3277, 0.0
      %v3467 = vmax.f32 %v3280, 0.0
      %v3468 = vmax.f32 %v3283, 0.0
      %v3469 = vmax.f32 %v3286, 0.0
      %v3470 = vmax.f32 %v3289, 0.0
      %v3471 = vmax.f32 %v3292, 0.0
      %v3472 = vmax.f32 %v3295, 0.0
      %v3473 = vmax.f32 %v3298, 0.0
      %v3474 = vmax.f32 %v3301, 0.0
      %v3475 = vmax.f32 %v3304, 0.0
      %v3476 = vmax.f32 %v3307, 0.0
      %v3477 = vmax.f32 %v3310, 0.0
      %v3478 = vmax.f32 %v3313, 0.0
      %v3479 = vmax.f32 %v3316, 0.0
      %v3480 = vmax.f32 %v3319, 0.0
      %v3481 = vmax.f32 %v3322, 0.0
      %v3482 = vmax.f32 %v3325, 0.0
      %v3483 = vmax.f32 %v3328, 0.0
      %v3484 = vmax.f32 %v3331, 0.0
      %v3485 = vmax.f32 %v3334, 0.0
      %v3486 = vmax.f32 %v3337, 0.0
      %v3487 = vmax.f32 %v3340, 0.0
      %v3488 = vmax.f32 %v3343, 0.0
      %v3489 = vmax.f32 %v3346, 0.0
      %v3490 = vmax.f32 %v3349, 0.0
      %v3491 = vmax.f32 %v3352, 0.0
      %v3492 = vmax.f32 %v3355, 0.0
      %v3493 = vmax.f32 %v3358, 0.0
      %v3494 = vmax.f32 %v3361, 0.0
      %v3495 = vmax.f32 %v3364, 0.0
      %v3496 = vmax.f32 %v3367, 0.0
      %v3497 = vmax.f32 %v3370, 0.0
      %v3498 = vmax.f32 %v3373, 0.0
      %v3499 = vmax.f32 %v3376, 0.0
      %v3500 = vmax.f32 %v3379, 0.0
      %v3501 = vmax.f32 %v3382, 0.0
      %v3502 = vmax.f32 %v3385, 0.0
      %v3503 = vmax.f32 %v3388, 0.0
      %v3504 = vmax.f32 %v3391, 0.0
      %v3505 = vmax.f32 %v3394, 0.0
      %v3506 = vmax.f32 %v3397, 0.0
      %v3507 = vmax.f32 %v3400, 0.0
      %v3508 = vmax.f32 %v3403, 0.0
      %v3509 = vmax.f32 %v3406, 0.0
      %v3510 = vmax.f32 %v3409, 0.0
      %v3511 = vmax.f32 %v3412, 0.0
      %v3512 = vmax.f32 %v3415, 0.0
      %v3513 = vmax.f32 %v3418, 0.0
      %v3514 = vmax.f32 %v3421, 0.0
      %v3515 = vmax.f32 %v3424, 0.0
      %v3516 = vmax.f32 %v3427, 0.0
      %v3517 = vmax.f32 %v3430, 0.0
      %v3518 = vmax.f32 %v3433, 0.0
      %v3519 = vmax.f32 %v3436, 0.0
      %v3520 = vmax.f32 %v3439, 0.0
      %v3521 = vmax.f32 %v3442, 0.0
      %v3522 = vmax.f32 %v3445, 0.0
      %v3523 = vmax.f32 %v3448, 0.0
      %v3524 = vmax.f32 %v3451, 0.0
      %v3525 = vmax.f32 %v3454, 0.0
      %v3526 = vmax.f32 %v3457, 0.0
      %v3527 = vmax.f32 %v3460, 0.0
      %v3528 = vmax.f32 %v3463, 0.0
      %3529 = vst [vmem:[%s280] sm:$0xff] %v3465
      %3530 = vst [vmem:[%s280 + $0x8] sm:$0xff] %v3466
      %3531 = vst [vmem:[%s280 + $0x10] sm:$0xff] %v3467
      %3532 = vst [vmem:[%s280 + $0x18] sm:$0xff] %v3468
      %3533 = vst [vmem:[%s280 + $0x20] sm:$0xff] %v3469
      %3534 = vst [vmem:[%s280 + $0x28] sm:$0xff] %v3470
      %3535 = vst [vmem:[%s280 + $0x30] sm:$0xff] %v3471
      %3536 = vst [vmem:[%s280 + $0x38] sm:$0xff] %v3472
      %3537 = vst [vmem:[%s280 + $0x40] sm:$0xff] %v3473
      %3538 = vst [vmem:[%s280 + $0x48] sm:$0xff] %v3474
      %3539 = vst [vmem:[%s280 + $0x50] sm:$0xff] %v3475
      %3540 = vst [vmem:[%s280 + $0x58] sm:$0xff] %v3476
      %3541 = vst [vmem:[%s280 + $0x60] sm:$0xff] %v3477
      %3542 = vst [vmem:[%s280 + $0x68] sm:$0xff] %v3478
      %3543 = vst [vmem:[%s280 + $0x70] sm:$0xff] %v3479
      %3544 = vst [vmem:[%s280 + $0x78] sm:$0xff] %v3480
      %3545 = vst [vmem:[%s280 + $0x80] sm:$0xff] %v3481
      %3546 = vst [vmem:[%s280 + $0x88] sm:$0xff] %v3482
      %3547 = vst [vmem:[%s280 + $0x90] sm:$0xff] %v3483
      %3548 = vst [vmem:[%s280 + $0x98] sm:$0xff] %v3484
      %3549 = vst [vmem:[%s280 + $0xa0] sm:$0xff] %v3485
      %3550 = vst [vmem:[%s280 + $0xa8] sm:$0xff] %v3486
      %3551 = vst [vmem:[%s280 + $0xb0] sm:$0xff] %v3487
      %3552 = vst [vmem:[%s280 + $0xb8] sm:$0xff] %v3488
      %3553 = vst [vmem:[%s280 + $0xc0] sm:$0xff] %v3489
      %3554 = vst [vmem:[%s280 + $0xc8] sm:$0xff] %v3490
      %3555 = vst [vmem:[%s280 + $0xd0] sm:$0xff] %v3491
      %3556 = vst [vmem:[%s280 + $0xd8] sm:$0xff] %v3492
      %3557 = vst [vmem:[%s280 + $0xe0] sm:$0xff] %v3493
      %3558 = vst [vmem:[%s280 + $0xe8] sm:$0xff] %v3494
      %3559 = vst [vmem:[%s280 + $0xf0] sm:$0xff] %v3495
      %3560 = vst [vmem:[%s280 + $0xf8] sm:$0xff] %v3496
      %3561 = vst [vmem:[%s280 + $0x100] sm:$0xff] %v3497
      %3562 = vst [vmem:[%s280 + $0x108] sm:$0xff] %v3498
      %3563 = vst [vmem:[%s280 + $0x110] sm:$0xff] %v3499
      %3564 = vst [vmem:[%s280 + $0x118] sm:$0xff] %v3500
      %3565 = vst [vmem:[%s280 + $0x120] sm:$0xff] %v3501
      %3566 = vst [vmem:[%s280 + $0x128] sm:$0xff] %v3502
      %3567 = vst [vmem:[%s280 + $0x130] sm:$0xff] %v3503
      %3568 = vst [vmem:[%s280 + $0x138] sm:$0xff] %v3504
      %3569 = vst [vmem:[%s280 + $0x140] sm:$0xff] %v3505
      %3570 = vst [vmem:[%s280 + $0x148] sm:$0xff] %v3506
      %3571 = vst [vmem:[%s280 + $0x150] sm:$0xff] %v3507
      %3572 = vst [vmem:[%s280 + $0x158] sm:$0xff] %v3508
      %3573 = vst [vmem:[%s280 + $0x160] sm:$0xff] %v3509
      %3574 = vst [vmem:[%s280 + $0x168] sm:$0xff] %v3510
      %3575 = vst [vmem:[%s280 + $0x170] sm:$0xff] %v3511
      %3576 = vst [vmem:[%s280 + $0x178] sm:$0xff] %v3512
      %3577 = vst [vmem:[%s280 + $0x180] sm:$0xff] %v3513
      %3578 = vst [vmem:[%s280 + $0x188] sm:$0xff] %v3514
      %3579 = vst [vmem:[%s280 + $0x190] sm:$0xff] %v3515
      %3580 = vst [vmem:[%s280 + $0x198] sm:$0xff] %v3516
      %3581 = vst [vmem:[%s280 + $0x1a0] sm:$0xff] %v3517
      %3582 = vst [vmem:[%s280 + $0x1a8] sm:$0xff] %v3518
      %3583 = vst [vmem:[%s280 + $0x1b0] sm:$0xff] %v3519
      %3584 = vst [vmem:[%s280 + $0x1b8] sm:$0xff] %v3520
      %3585 = vst [vmem:[%s280 + $0x1c0] sm:$0xff] %v3521
      %3586 = vst [vmem:[%s280 + $0x1c8] sm:$0xff] %v3522
      %3587 = vst [vmem:[%s280 + $0x1d0] sm:$0xff] %v3523
      %3588 = vst [vmem:[%s280 + $0x1d8] sm:$0xff] %v3524
      %3589 = vst [vmem:[%s280 + $0x1e0] sm:$0xff] %v3525
      %3590 = vst [vmem:[%s280 + $0x1e8] sm:$0xff] %v3526
      %3591 = vst [vmem:[%s280 + $0x1f0] sm:$0xff] %v3527
      %3592 = vst [vmem:[%s280 + $0x1f8] sm:$0xff] %v3528
      %s3593 = smul.u32 64, %s18
      %p3594 = scmp.lt.s32.totalorder %s3593, 127
      %s3595 = scalar_select %p3594, %s3593, 127
      %s3596 = smul.addr %s3595, 8
      %s3597 = scalar_lea.vmem %s7, %s3596
      // Predicated region
      $region49: #{fcnetwork_forward.1} parent=47 // pred_check
        %p3598 = pneg %p188
      $region50: #{fcnetwork_forward.1} parent=47 // pred_check_branch
        %3600 = sbr.rel (%p3598) target = $region52
      $region51: #{fcnetwork_forward.1} parent=47 // pred_region
        %s3601 = smul.u32 64, %s18
      $region52: #{fcnetwork_forward.1} parent=47 // pred_fallthru
        _
    $region48: #{fcnetwork_forward.1} parent=5 // pred_fallthru
      _
    %p3602 = scmp.le.s32.totalorder 2, %s13
    // Predicated region
    $region53: #{fcnetwork_forward.1} parent=5 // pred_check
      %p3603 = pneg %p3602
    $region54: #{fcnetwork_forward.1} parent=5 // pred_check_branch
      %3605 = sbr.rel (%p3603) target = $region56
    $region55: #{fcnetwork_forward.1} parent=5 // pred_region
      %s3606 = ssub.s32 %s13, 2
      // Predicated region
      $region57: #{fcnetwork_forward.1} parent=55 // pred_check
        %p3607 = pneg %p194
      $region58: #{fcnetwork_forward.1} parent=55 // pred_check_branch
        %3609 = sbr.rel (%p3607) target = $region60
      $region59: #{fcnetwork_forward.1} parent=55 // pred_region
        %s3610 = smul.u32 64, %s19
        %p3611 = scmp.lt.s32.totalorder %s3610, 127
        %s3612 = scalar_select %p3611, %s3610, 127
        %s3613 = smul.addr %s3612, 8
        %s3614 = scalar_lea.vmem %s7, %s3613
      $region60: #{fcnetwork_forward.1} parent=55 // pred_fallthru
        _
    $region56: #{fcnetwork_forward.1} parent=5 // pred_fallthru
      _
  $region6: #{fcnetwork_forward.1} parent=0 // loop_footer
    %s17 = sadd.s32 1, %s13
  $region7: #{fcnetwork_forward.1} parent=0 // loop_footer_branch
    %12 = sbr.rel target = $region3
  $region8: #{fcnetwork_forward.1} parent=0 // loop_exit
    _

</llo_original>
